<compile_context>
chip_gen: v5e
topology: v5e:2x2
jax: 0.10.0
libtpu: 0.0.40
codegen_flags: <defaults>
</compile_context>

<pallas_src>
import functools
from typing import NamedTuple

import numpy as np

import jax
import jax.numpy as jnp
from jax.experimental import pallas as pl
from jax.experimental.pallas import tpu as pltpu


# ----------------------------- static network geometry -----------------------------

class NetConfig(NamedTuple):
    signal_len: int
    k1: int
    c1_out: int
    lc1: int
    lp1: int
    k2: int
    c2_out: int
    lc2: int
    lp2: int
    d1_k: int
    d1_cout: int
    d1_out: int
    d2_k: int
    d2_out: int


def make_config(signal_len: int) -> NetConfig:
    """Replicates Conv1dLayerSizes / TransposeConv1dLayerSizes arithmetic."""
    k1, c1_out = 5, 20
    lc1 = signal_len - k1 + 1
    lp1 = lc1 // 2
    k2, c2_out = 5, 50
    lc2 = lp1 - k2 + 1
    lp2 = lc2 // 2

    d1_cout = 35
    d1_out = round(signal_len / 2)                 # same Python round() as the reference
    d1_k = d1_out - (lp2 - 1) * 2                  # out = (in - 1) * stride + kernel
    d2_out = signal_len
    d2_k = d2_out - (d1_out - 1) * 2

    assert lc1 > 0 and lc2 > 0 and d1_k >= 1 and d2_k >= 1, "signal_len too small"
    return NetConfig(signal_len, k1, c1_out, lc1, lp1, k2, c2_out, lc2, lp2,
                     d1_k, d1_cout, d1_out, d2_k, d2_out)


def init_params(key, cfg: NetConfig):
    ks = jax.random.split(key, 8)
    s = 0.1
    return {
        # Conv1d weights: (out_ch, in_ch, kernel) -- torch layout.
        "w1": s * jax.random.normal(ks[0], (cfg.c1_out, 1, cfg.k1), jnp.float32),
        "b1": s * jax.random.normal(ks[1], (cfg.c1_out,), jnp.float32),
        "w2": s * jax.random.normal(ks[2], (cfg.c2_out, cfg.c1_out, cfg.k2), jnp.float32),
        "b2": s * jax.random.normal(ks[3], (cfg.c2_out,), jnp.float32),
        # ConvTranspose1d weights: (in_ch, out_ch, kernel) -- torch layout.
        "dw1": s * jax.random.normal(ks[4], (cfg.c2_out, cfg.d1_cout, cfg.d1_k), jnp.float32),
        "db1": s * jax.random.normal(ks[5], (cfg.d1_cout,), jnp.float32),
        "dw2": s * jax.random.normal(ks[6], (cfg.d1_cout, 1, cfg.d2_k), jnp.float32),
        "db2": s * jax.random.normal(ks[7], (1,), jnp.float32),
    }


# ----------------------------- host-side weight -> banded-matrix packing -----------------------------

def _build_conv_pool_mats(w, b, lin):
    """Conv1d (torch weight (Cout, Cin, K)) + MaxPool1d(2), flattened.

    Activation lanes are flattened as q = position * C + channel.
    Returns (Me, Mo, bias_tile):
      Me[(l_in*Cin + c_in), (p*Cout + c_out)] = w[c_out, c_in, 2p      + k offset]
      Mo[...]                                 = w[c_out, c_in, 2p + 1  + k offset]
      so conv output at pooled-pair members (2p, 2p+1) = x_flat @ Me / x_flat @ Mo,
      and pool(relu(conv + b)) == relu(max(x@Me, x@Mo) + bias_tile).
    """
    w = np.asarray(jax.device_get(w)).astype(np.float32)
    b = np.asarray(jax.device_get(b)).astype(np.float32)
    cout, cin, k = w.shape
    lc = lin - k + 1
    lp = lc // 2
    wt = np.transpose(w, (1, 0, 2))                # (Cin, Cout, K)
    me = np.zeros((lin * cin, lp * cout), np.float32)
    mo = np.zeros((lin * cin, lp * cout), np.float32)
    for p in range(lp):
        for kk in range(k):
            le = 2 * p + kk                        # even member of the pooling pair
            me[le * cin:(le + 1) * cin, p * cout:(p + 1) * cout] += wt[:, :, kk]
            lo = 2 * p + 1 + kk                    # odd member
            mo[lo * cin:(lo + 1) * cin, p * cout:(p + 1) * cout] += wt[:, :, kk]
    bias_tile = np.tile(b, lp)[None, :]            # (1, lp*Cout): col p*Cout+c -> b[c]
    return jnp.asarray(me), jnp.asarray(mo), jnp.asarray(bias_tile)


def _build_deconv_mat(w, b, lin, stride=2):
    """ConvTranspose1d (torch weight (Cin, Cout, K)), flattened.

    M[(l*Cin + c), (t*Cout + c')] = w[c, c', t - stride*l]  for 0 <= t-stride*l < K,
    so out_flat = a_flat @ M + bias_tile, with output lane order t*Cout + c'
    (i.e. the natural interleaved output -- no separate interleave step needed).
    """
    w = np.asarray(jax.device_get(w)).astype(np.float32)
    b = np.asarray(jax.device_get(b)).astype(np.float32)
    cin, cout, k = w.shape
    lout = (lin - 1) * stride + k
    m = np.zeros((lin * cin, lout * cout), np.float32)
    for l in range(lin):
        for kk in range(k):
            t = stride * l + kk
            m[l * cin:(l + 1) * cin, t * cout:(t + 1) * cout] += w[:, :, kk]
    bias_tile = np.tile(b, lout)[None, :]          # (1, lout*Cout)
    return jnp.asarray(m), jnp.asarray(bias_tile)


def pack_params(params, cfg: NetConfig):
    m1e, m1o, b1t = _build_conv_pool_mats(params["w1"], params["b1"], cfg.signal_len)
    m2e, m2o, b2t = _build_conv_pool_mats(params["w2"], params["b2"], cfg.lp1)
    m3, b3t = _build_deconv_mat(params["dw1"], params["db1"], cfg.lp2, stride=2)
    m4, b4t = _build_deconv_mat(params["dw2"], params["db2"], cfg.d1_out, stride=2)
    return {"m1e": m1e, "m1o": m1o, "b1": b1t,
            "m2e": m2e, "m2o": m2o, "b2": b2t,
            "m3": m3, "b3": b3t,
            "m4": m4, "b4": b4t}


# ----------------------------- the fused kernel -----------------------------

def _fused_net_kernel(x_ref, m1e_ref, m1o_ref, b1_ref, m2e_ref, m2o_ref, b2_ref,
                      m3_ref, b3_ref, m4_ref, b4_ref, out_ref):
    f32 = jnp.float32
    x = x_ref[...]                                                   # (B, L) lane-dense

    # conv1 + relu + maxpool(2): relu(max(x@Me, x@Mo) + b)
    y1 = jnp.maximum(jnp.dot(x, m1e_ref[...], preferred_element_type=f32),
                     jnp.dot(x, m1o_ref[...], preferred_element_type=f32))
    a1 = jnp.maximum(y1 + b1_ref[...], 0.0)                         # (B, lp1*20)

    # conv2 + relu + maxpool(2)
    y2 = jnp.maximum(jnp.dot(a1, m2e_ref[...], preferred_element_type=f32),
                     jnp.dot(a1, m2o_ref[...], preferred_element_type=f32))
    a2 = jnp.maximum(y2 + b2_ref[...], 0.0)                         # (B, lp2*50)

    # deconv1 (stride 2) + relu
    a3 = jnp.maximum(jnp.dot(a2, m3_ref[...], preferred_element_type=f32) + b3_ref[...],
                     0.0)                                            # (B, d1_out*35)

    # deconv2 (stride 2), no relu; column order == natural output order -> lane-dense store
    out_ref[...] = jnp.dot(a3, m4_ref[...], preferred_element_type=f32) + b4_ref[...]


# ----------------------------- wrapper -----------------------------

def forward(packed, cfg: NetConfig, x, *, block_b: int = 8):
    """x: (N, 1, signal_len) -> (N, 1, signal_len), matching the PyTorch Network."""
    n, c_in, length = x.shape
    assert c_in == 1 and length == cfg.signal_len
    f32 = jnp.float32

    x2 = x.reshape(n, length).astype(f32)                            # lane-dense (N, L)
    n_pad = ((n + block_b - 1) // block_b) * block_b
    if n_pad != n:
        x2 = jnp.pad(x2, ((0, n_pad - n), (0, 0)))

    def whole(a):
        return pl.BlockSpec(a.shape, lambda i: (0, 0))               # resident, one DMA

    out = pl.pallas_call(
        _fused_net_kernel,
        out_shape=jax.ShapeDtypeStruct((n_pad, cfg.d2_out), f32),
        grid=(n_pad // block_b,),
        in_specs=[
            pl.BlockSpec((block_b, cfg.signal_len), lambda i: (i, 0)),
            whole(packed["m1e"]), whole(packed["m1o"]), whole(packed["b1"]),
            whole(packed["m2e"]), whole(packed["m2o"]), whole(packed["b2"]),
            whole(packed["m3"]), whole(packed["b3"]),
            whole(packed["m4"]), whole(packed["b4"]),
        ],
        out_specs=pl.BlockSpec((block_b, cfg.d2_out), lambda i: (i, 0)),
        compiler_params=pltpu.CompilerParams(
            dimension_semantics=("parallel",),
            vmem_limit_bytes=32 * 1024 * 1024,
        ),
    )(x2, packed["m1e"], packed["m1o"], packed["b1"],
      packed["m2e"], packed["m2o"], packed["b2"],
      packed["m3"], packed["b3"], packed["m4"], packed["b4"])

    return out[:n].reshape(n, 1, cfg.d2_out)


# ----------------------------- plain-JAX reference (for the self-check) -----------------------------

def _reference_forward(params, x):
    hp = jax.lax.Precision.HIGHEST

    def conv1d(a, w, b):                        # a (N,Cin,L), w (Cout,Cin,K)
        k = w.shape[2]
        lc = a.shape[2] - k + 1
        patches = jnp.stack([a[:, :, i:i + lc] for i in range(k)], axis=-1)
        return jnp.einsum("nclk,ock->nol", patches, w, precision=hp) + b[None, :, None]

    def maxpool2(a):
        lp = a.shape[2] // 2
        return jnp.maximum(a[:, :, 0:2 * lp:2], a[:, :, 1:2 * lp:2])

    def deconv1d(a, w, b, stride):              # a (N,Cin,L), w (Cin,Cout,K)
        n, cin, lin = a.shape
        _, cout, k = w.shape
        lout = (lin - 1) * stride + k
        out = jnp.zeros((n, cout, lout), jnp.float32)
        for kk in range(k):
            contrib = jnp.einsum("nci,co->noi", a, w[:, :, kk], precision=hp)
            out = out.at[:, :, kk:kk + (lin - 1) * stride + 1:stride].add(contrib)
        return out + b[None, :, None]

    y = maxpool2(jnp.maximum(conv1d(x, params["w1"], params["b1"]), 0.0))
    y = maxpool2(jnp.maximum(conv1d(y, params["w2"], params["b2"]), 0.0))
    y = jnp.maximum(deconv1d(y, params["dw1"], params["db1"], 2), 0.0)
    return deconv1d(y, params["dw2"], params["db2"], 2)


# ----------------------------- main -----------------------------

if __name__ == "__main__":
    signal_len = 64      # 64 -> conv/pool 30 -> conv/pool 13 -> deconv 32 -> deconv 64
    batch = 16
    block_b = 8          # grid = 2  -> both v7x TensorCores get a block

    key = jax.random.PRNGKey(0)
    k_x, k_p = jax.random.split(key)
    x = jax.random.normal(k_x, (batch, 1, signal_len), jnp.float32)

    cfg = make_config(signal_len)
    params = init_params(k_p, cfg)
    packed = pack_params(params, cfg)

    fwd = jax.jit(functools.partial(forward, packed, cfg, block_b=block_b))
    y = fwd(x)
    jax.block_until_ready(y)

    assert y.shape == (batch, 1, signal_len), y.shape
    assert y.dtype == jnp.float32

    # Numerical check against a plain-JAX implementation of the PyTorch forward.
    y_ref = _reference_forward(params, x)
    rel_err = float(jnp.max(jnp.abs(y - y_ref)) / (jnp.max(jnp.abs(y_ref)) + 1e-8))
    assert rel_err < 1e-4, f"kernel/reference mismatch, rel_err={rel_err}"
    print("KERNEL_OK")
</pallas_src>

<mosaic_0001>
module attributes {stable_mosaic.version = 11 : i64} {
  func.func @_fused_net_kernel(%arg0: i32, %arg1: memref<8x64xf32, #tpu.memory_space<vmem>>, %arg2: memref<64x600xf32, #tpu.memory_space<vmem>>, %arg3: memref<64x600xf32, #tpu.memory_space<vmem>>, %arg4: memref<1x600xf32, #tpu.memory_space<vmem>>, %arg5: memref<600x650xf32, #tpu.memory_space<vmem>>, %arg6: memref<600x650xf32, #tpu.memory_space<vmem>>, %arg7: memref<1x650xf32, #tpu.memory_space<vmem>>, %arg8: memref<650x1120xf32, #tpu.memory_space<vmem>>, %arg9: memref<1x1120xf32, #tpu.memory_space<vmem>>, %arg10: memref<1120x64xf32, #tpu.memory_space<vmem>>, %arg11: memref<1x64xf32, #tpu.memory_space<vmem>>, %arg12: memref<8x64xf32, #tpu.memory_space<vmem>>) attributes {dimension_semantics = [#tpu.dimension_semantics<parallel>], iteration_bounds = array<i64: 2>, scalar_prefetch = 0 : i64, scratch_operands = 0 : i64, tpu.core_type = #tpu.core_type<tc>, window_params = [{transform_indices = @transform_0, window_bounds = array<i64: 8, 64>}, {pipeline_mode = #tpu.pipeline_mode<synchronous>, transform_indices = @transform_1, window_bounds = array<i64: 64, 600>}, {pipeline_mode = #tpu.pipeline_mode<synchronous>, transform_indices = @transform_2, window_bounds = array<i64: 64, 600>}, {pipeline_mode = #tpu.pipeline_mode<synchronous>, transform_indices = @transform_3, window_bounds = array<i64: 1, 600>}, {pipeline_mode = #tpu.pipeline_mode<synchronous>, transform_indices = @transform_4, window_bounds = array<i64: 600, 650>}, {pipeline_mode = #tpu.pipeline_mode<synchronous>, transform_indices = @transform_5, window_bounds = array<i64: 600, 650>}, {pipeline_mode = #tpu.pipeline_mode<synchronous>, transform_indices = @transform_6, window_bounds = array<i64: 1, 650>}, {pipeline_mode = #tpu.pipeline_mode<synchronous>, transform_indices = @transform_7, window_bounds = array<i64: 650, 1120>}, {pipeline_mode = #tpu.pipeline_mode<synchronous>, transform_indices = @transform_8, window_bounds = array<i64: 1, 1120>}, {pipeline_mode = #tpu.pipeline_mode<synchronous>, transform_indices = @transform_9, window_bounds = array<i64: 1120, 64>}, {pipeline_mode = #tpu.pipeline_mode<synchronous>, transform_indices = @transform_10, window_bounds = array<i64: 1, 64>}, {transform_indices = @transform_11, window_bounds = array<i64: 8, 64>}]} {
    %c0 = arith.constant 0 : index
    %c0_0 = arith.constant 0 : index
    %0 = vector.load %arg1[%c0, %c0_0] : memref<8x64xf32, #tpu.memory_space<vmem>>, vector<8x64xf32>
    %c0_1 = arith.constant 0 : index
    %c0_2 = arith.constant 0 : index
    %1 = vector.load %arg2[%c0_1, %c0_2] : memref<64x600xf32, #tpu.memory_space<vmem>>, vector<64x600xf32>
    %cst = arith.constant dense<0.000000e+00> : vector<8x600xf32>
    %2 = tpu.matmul %0, %1, %cst {dimension_numbers = #tpu.dot_dimension_numbers<[1], [0], [0], [1], [0, 0, 1, 1], [], []>} : vector<8x64xf32>, vector<64x600xf32>, vector<8x600xf32> -> vector<8x600xf32>
    %c0_3 = arith.constant 0 : index
    %c0_4 = arith.constant 0 : index
    %3 = vector.load %arg3[%c0_3, %c0_4] : memref<64x600xf32, #tpu.memory_space<vmem>>, vector<64x600xf32>
    %cst_5 = arith.constant dense<0.000000e+00> : vector<8x600xf32>
    %4 = tpu.matmul %0, %3, %cst_5 {dimension_numbers = #tpu.dot_dimension_numbers<[1], [0], [0], [1], [0, 0, 1, 1], [], []>} : vector<8x64xf32>, vector<64x600xf32>, vector<8x600xf32> -> vector<8x600xf32>
    %5 = arith.maximumf %2, %4 : vector<8x600xf32>
    %c0_6 = arith.constant 0 : index
    %c0_7 = arith.constant 0 : index
    %6 = vector.load %arg4[%c0_6, %c0_7] : memref<1x600xf32, #tpu.memory_space<vmem>>, vector<1x600xf32>
    %7 = vector.broadcast %6 : vector<1x600xf32> to vector<8x600xf32>
    %8 = arith.addf %5, %7 : vector<8x600xf32>
    %cst_8 = arith.constant 0.000000e+00 : f32
    %9 = vector.broadcast %cst_8 : f32 to vector<8x600xf32>
    %10 = arith.maximumf %8, %9 : vector<8x600xf32>
    %c0_9 = arith.constant 0 : index
    %c0_10 = arith.constant 0 : index
    %11 = vector.load %arg5[%c0_9, %c0_10] : memref<600x650xf32, #tpu.memory_space<vmem>>, vector<600x650xf32>
    %cst_11 = arith.constant dense<0.000000e+00> : vector<8x650xf32>
    %12 = tpu.matmul %10, %11, %cst_11 {dimension_numbers = #tpu.dot_dimension_numbers<[1], [0], [0], [1], [0, 0, 1, 1], [], []>} : vector<8x600xf32>, vector<600x650xf32>, vector<8x650xf32> -> vector<8x650xf32>
    %c0_12 = arith.constant 0 : index
    %c0_13 = arith.constant 0 : index
    %13 = vector.load %arg6[%c0_12, %c0_13] : memref<600x650xf32, #tpu.memory_space<vmem>>, vector<600x650xf32>
    %cst_14 = arith.constant dense<0.000000e+00> : vector<8x650xf32>
    %14 = tpu.matmul %10, %13, %cst_14 {dimension_numbers = #tpu.dot_dimension_numbers<[1], [0], [0], [1], [0, 0, 1, 1], [], []>} : vector<8x600xf32>, vector<600x650xf32>, vector<8x650xf32> -> vector<8x650xf32>
    %15 = arith.maximumf %12, %14 : vector<8x650xf32>
    %c0_15 = arith.constant 0 : index
    %c0_16 = arith.constant 0 : index
    %16 = vector.load %arg7[%c0_15, %c0_16] : memref<1x650xf32, #tpu.memory_space<vmem>>, vector<1x650xf32>
    %17 = vector.broadcast %16 : vector<1x650xf32> to vector<8x650xf32>
    %18 = arith.addf %15, %17 : vector<8x650xf32>
    %cst_17 = arith.constant 0.000000e+00 : f32
    %19 = vector.broadcast %cst_17 : f32 to vector<8x650xf32>
    %20 = arith.maximumf %18, %19 : vector<8x650xf32>
    %c0_18 = arith.constant 0 : index
    %c0_19 = arith.constant 0 : index
    %21 = vector.load %arg8[%c0_18, %c0_19] : memref<650x1120xf32, #tpu.memory_space<vmem>>, vector<650x1120xf32>
    %cst_20 = arith.constant dense<0.000000e+00> : vector<8x1120xf32>
    %22 = tpu.matmul %20, %21, %cst_20 {dimension_numbers = #tpu.dot_dimension_numbers<[1], [0], [0], [1], [0, 0, 1, 1], [], []>} : vector<8x650xf32>, vector<650x1120xf32>, vector<8x1120xf32> -> vector<8x1120xf32>
    %c0_21 = arith.constant 0 : index
    %c0_22 = arith.constant 0 : index
    %23 = vector.load %arg9[%c0_21, %c0_22] : memref<1x1120xf32, #tpu.memory_space<vmem>>, vector<1x1120xf32>
    %24 = vector.broadcast %23 : vector<1x1120xf32> to vector<8x1120xf32>
    %25 = arith.addf %22, %24 : vector<8x1120xf32>
    %cst_23 = arith.constant 0.000000e+00 : f32
    %26 = vector.broadcast %cst_23 : f32 to vector<8x1120xf32>
    %27 = arith.maximumf %25, %26 : vector<8x1120xf32>
    %c0_24 = arith.constant 0 : index
    %c0_25 = arith.constant 0 : index
    %28 = vector.load %arg10[%c0_24, %c0_25] : memref<1120x64xf32, #tpu.memory_space<vmem>>, vector<1120x64xf32>
    %cst_26 = arith.constant dense<0.000000e+00> : vector<8x64xf32>
    %29 = tpu.matmul %27, %28, %cst_26 {dimension_numbers = #tpu.dot_dimension_numbers<[1], [0], [0], [1], [0, 0, 1, 1], [], []>} : vector<8x1120xf32>, vector<1120x64xf32>, vector<8x64xf32> -> vector<8x64xf32>
    %c0_27 = arith.constant 0 : index
    %c0_28 = arith.constant 0 : index
    %30 = vector.load %arg11[%c0_27, %c0_28] : memref<1x64xf32, #tpu.memory_space<vmem>>, vector<1x64xf32>
    %31 = vector.broadcast %30 : vector<1x64xf32> to vector<8x64xf32>
    %32 = arith.addf %29, %31 : vector<8x64xf32>
    %c0_29 = arith.constant 0 : index
    %c0_30 = arith.constant 0 : index
    %33 = vector.load %arg12[%c0_29, %c0_30] : memref<8x64xf32, #tpu.memory_space<vmem>>, vector<8x64xf32>
    tpu.vector_store %arg12[%c0_29, %c0_30], %32 {strides = array<i32>} : memref<8x64xf32, #tpu.memory_space<vmem>>, vector<8x64xf32>,
    return
  }
  func.func @transform_0(%arg0: i32) -> (i32, i32) {
    %c0_i32 = arith.constant 0 : i32
    %c0_i32_0 = arith.constant 0 : i32
    return %arg0, %c0_i32 : i32, i32
  }
  func.func @transform_1(%arg0: i32) -> (i32, i32) {
    %c0_i32 = arith.constant 0 : i32
    %c0_i32_0 = arith.constant 0 : i32
    %c0_i32_1 = arith.constant 0 : i32
    return %c0_i32, %c0_i32_0 : i32, i32
  }
  func.func @transform_2(%arg0: i32) -> (i32, i32) {
    %c0_i32 = arith.constant 0 : i32
    %c0_i32_0 = arith.constant 0 : i32
    %c0_i32_1 = arith.constant 0 : i32
    return %c0_i32, %c0_i32_0 : i32, i32
  }
  func.func @transform_3(%arg0: i32) -> (i32, i32) {
    %c0_i32 = arith.constant 0 : i32
    %c0_i32_0 = arith.constant 0 : i32
    %c0_i32_1 = arith.constant 0 : i32
    return %c0_i32, %c0_i32_0 : i32, i32
  }
  func.func @transform_4(%arg0: i32) -> (i32, i32) {
    %c0_i32 = arith.constant 0 : i32
    %c0_i32_0 = arith.constant 0 : i32
    %c0_i32_1 = arith.constant 0 : i32
    return %c0_i32, %c0_i32_0 : i32, i32
  }
  func.func @transform_5(%arg0: i32) -> (i32, i32) {
    %c0_i32 = arith.constant 0 : i32
    %c0_i32_0 = arith.constant 0 : i32
    %c0_i32_1 = arith.constant 0 : i32
    return %c0_i32, %c0_i32_0 : i32, i32
  }
  func.func @transform_6(%arg0: i32) -> (i32, i32) {
    %c0_i32 = arith.constant 0 : i32
    %c0_i32_0 = arith.constant 0 : i32
    %c0_i32_1 = arith.constant 0 : i32
    return %c0_i32, %c0_i32_0 : i32, i32
  }
  func.func @transform_7(%arg0: i32) -> (i32, i32) {
    %c0_i32 = arith.constant 0 : i32
    %c0_i32_0 = arith.constant 0 : i32
    %c0_i32_1 = arith.constant 0 : i32
    return %c0_i32, %c0_i32_0 : i32, i32
  }
  func.func @transform_8(%arg0: i32) -> (i32, i32) {
    %c0_i32 = arith.constant 0 : i32
    %c0_i32_0 = arith.constant 0 : i32
    %c0_i32_1 = arith.constant 0 : i32
    return %c0_i32, %c0_i32_0 : i32, i32
  }
  func.func @transform_9(%arg0: i32) -> (i32, i32) {
    %c0_i32 = arith.constant 0 : i32
    %c0_i32_0 = arith.constant 0 : i32
    %c0_i32_1 = arith.constant 0 : i32
    return %c0_i32, %c0_i32_0 : i32, i32
  }
  func.func @transform_10(%arg0: i32) -> (i32, i32) {
    %c0_i32 = arith.constant 0 : i32
    %c0_i32_0 = arith.constant 0 : i32
    %c0_i32_1 = arith.constant 0 : i32
    return %c0_i32, %c0_i32_0 : i32, i32
  }
  func.func @transform_11(%arg0: i32) -> (i32, i32) {
    %c0_i32 = arith.constant 0 : i32
    %c0_i32_0 = arith.constant 0 : i32
    return %arg0, %c0_i32 : i32, i32
  }
}

</mosaic_0001>

<llo_original>
// kernel: forward.1
$region0: #{forward.1}
  #allocation0 [shape = 'u32[]', space=smem, size = 0x4, offset = 0x4, fixed_abs, tag = 'smem constant byte address 0x4 - core index']
  #allocation1 [shape = 'u32[72,128]{1,0:T(1,128)}', space=vmem, size = 0x9000, scoped, tag = 'internal scratch']
  %s0 = inlined_call_operand.hbm [shape: f32[16,64], index: 0, kind: input, shape index: {}]
  %s1 = inlined_call_operand.hbm [shape: f32[64,600], index: 1, kind: input, shape index: {}]
  %s2 = inlined_call_operand.hbm [shape: f32[64,600], index: 2, kind: input, shape index: {}]
  %s3 = inlined_call_operand.hbm [shape: f32[1,600], index: 3, kind: input, shape index: {}]
  %s4 = inlined_call_operand.hbm [shape: f32[600,650], index: 4, kind: input, shape index: {}]
  %s5 = inlined_call_operand.hbm [shape: f32[600,650], index: 5, kind: input, shape index: {}]
  %s6 = inlined_call_operand.hbm [shape: f32[1,650], index: 6, kind: input, shape index: {}]
  %s7 = inlined_call_operand.hbm [shape: f32[650,1120], index: 7, kind: input, shape index: {}]
  %s8 = inlined_call_operand.hbm [shape: f32[1,1120], index: 8, kind: input, shape index: {}]
  %s9 = inlined_call_operand.hbm [shape: f32[1120,64], index: 9, kind: input, shape index: {}]
  %s10 = inlined_call_operand.vmem [shape: f32[1,64], index: 10, kind: input, shape index: {}]
  %s11 = inlined_call_operand.hbm [shape: f32[16,64], index: 11, kind: output, shape index: {}]
  %s12 = sld [smem:[#allocation0]]
  $region117: #{forward.1} parent=0
    _
  %s14 = ssub.s32 1, %s12
  %s15 = scalar_select 0, %s14, %s12
  $region1: #{forward.1} parent=0
    #allocation2 [shape = 'u8[8192]{0}', space=vmem, size = 0x2000, scoped, tag = 'input window, operand 0']
    #allocation3 [shape = 's32[2]{0}', space=sflag, size = 0x8, scoped, tag = 'scoped memory for forward.1']
    #allocation4 [shape = 's32[2]{0}', space=sflag, size = 0x8, scoped, tag = 'scoped memory for forward.1']
    #allocation5 [shape = 'u8[163840]{0}', space=vmem, size = 0x28000, scoped, tag = 'input window, operand 1, single buffered']
    #allocation6 [shape = 's32[1]{0}', space=sflag, size = 0x4, scoped, tag = 'scoped memory for forward.1']
    #allocation7 [shape = 'u8[163840]{0}', space=vmem, size = 0x28000, scoped, tag = 'input window, operand 2, single buffered']
    #allocation8 [shape = 'u8[2560]{0}', space=vmem, size = 0xc00, scoped, tag = 'input window, operand 3, single buffered']
    #allocation9 [shape = 's32[1]{0}', space=sflag, size = 0x4, scoped, tag = 'scoped memory for forward.1']
    #allocation10 [shape = 'u8[1843200]{0}', space=vmem, size = 0x1c2000, scoped, tag = 'input window, operand 4, single buffered']
    #allocation11 [shape = 'u8[1843200]{0}', space=vmem, size = 0x1c2000, scoped, tag = 'input window, operand 5, single buffered']
    #allocation12 [shape = 's32[1]{0}', space=sflag, size = 0x4, scoped, tag = 'scoped memory for forward.1']
    #allocation13 [shape = 'u8[3072]{0}', space=vmem, size = 0xc00, scoped, tag = 'input window, operand 6, single buffered']
    #allocation14 [shape = 'u8[3022848]{0}', space=vmem, size = 0x2e2000, scoped, tag = 'input window, operand 7, single buffered']
    #allocation15 [shape = 's32[1]{0}', space=sflag, size = 0x4, scoped, tag = 'scoped memory for forward.1']
    #allocation16 [shape = 'u8[4608]{0}', space=vmem, size = 0x1400, scoped, tag = 'input window, operand 8, single buffered']
    #allocation17 [shape = 'u8[573440]{0}', space=vmem, size = 0x8c000, scoped, tag = 'input window, operand 9, single buffered']
    #allocation18 [shape = 's32[1]{0}', space=sflag, size = 0x4, scoped, tag = 'scoped memory for forward.1']
    #allocation19 [shape = 'u8[8192]{0}', space=vmem, size = 0x2000, scoped, tag = 'output window, operand 0']
    %16 = vsyncpa [#allocation3], 0
    %s17 = scalar_lea.sflag [#allocation3], 1
    %18 = vsyncpa %s17, 0
    %19 = vsyncpa [#allocation6], 0
    %20 = vsyncpa [#allocation9], 0
    %21 = vsyncpa [#allocation12], 0
    %22 = vsyncpa [#allocation15], 0
    %23 = vsyncpa [#allocation18], 0
    %24 = vsyncpa [#allocation4], 0
    %s25 = scalar_lea.sflag [#allocation4], 1
    %26 = vsyncpa %s25, 0
    loop: start=0, step=1, limit=4
    $region2: #{forward.1} parent=1 // loop_pre_header
      _
    $region3: #{forward.1} parent=1 // loop_header
      %s28 = sphi 0, %s32
      %p29 = scmp.ge.s32.totalorder %s28, 4
      %s38 = sphi 0, %s40
      %s41 = sphi 0, %s38
      %s42 = sphi 0, %s41
      %s58 = sphi 0, %s42
      %s62 = sphi 0, %s62
      %s64 = sphi 0, %s62
      %s65 = sphi 0, %s64
      %s79 = sphi 0, %s65
      %s83 = sphi 0, %s83
      %s85 = sphi 0, %s83
      %s86 = sphi 0, %s85
      %s100 = sphi 0, %s86
      %s104 = sphi 0, %s104
      %s106 = sphi 0, %s104
      %s107 = sphi 0, %s106
      %s121 = sphi 0, %s107
      %s125 = sphi 0, %s125
      %s127 = sphi 0, %s125
      %s128 = sphi 0, %s127
      %s142 = sphi 0, %s128
      %s146 = sphi 0, %s146
      %s148 = sphi 0, %s146
      %s149 = sphi 0, %s148
      %s163 = sphi 0, %s149
      %s167 = sphi 0, %s167
      %s169 = sphi 0, %s167
      %s170 = sphi 0, %s169
      %s184 = sphi 0, %s170
      %s188 = sphi 0, %s188
      %s190 = sphi 0, %s188
      %s191 = sphi 0, %s190
      %s205 = sphi 0, %s191
      %s209 = sphi 0, %s209
      %s211 = sphi 0, %s209
      %s212 = sphi 0, %s211
      %s226 = sphi 0, %s212
      %s230 = sphi 0, %s230
      %s232 = sphi 0, %s230
      %s233 = sphi 0, %s232
      %s247 = sphi 0, %s233
      %s251 = sphi 0, %s251
      %s253 = sphi 0, %s251
      %s254 = sphi 0, %s253
      %s268 = sphi 0, %s254
      %s274 = sphi 0, %s276
      %s277 = sphi 0, %s274
      %s278 = sphi 0, %s277
      %s294 = sphi 0, %s278
    $region4: #{forward.1} parent=1 // loop_header_branch
      %31 = sbr.rel (%p29) target = $region8
    $region5: #{forward.1} parent=1 // loop_body
      %s33 = ssub.s32 %s28, 1
      %s34 = ssub.s32 %s28, 2
      %s35 = sadd.s32 %s28, 1
      %s36 = ssub.s32 %s28, %s35
      %p37 = scmp.eq.s32.totalorder %s36, 0
      %s39 = sadd.s32 %s38, 1
      %s40 = scalar_select %p37, %s38, %s39
      %p43 = pneg %p37
      %p44 = scmp.eq.s32.totalorder %s28, 1
      %p45 = por %p43, %p44
      %p46 = scmp.ne.s32.totalorder %s38, %s41
      %p47 = scmp.eq.s32.totalorder %s28, 0
      %p48 = por %p46, %p47
      %p49 = scmp.ne.s32.totalorder %s38, %s41
      %p50 = scmp.eq.s32.totalorder %s33, 1
      %p51 = por %p49, %p50
      %p52 = scmp.ne.s32.totalorder %s41, %s42
      %p53 = scmp.eq.s32.totalorder %s33, 0
      %p54 = por %p52, %p53
      %p55 = scmp.ne.s32.totalorder %s41, %s42
      %p56 = scmp.eq.s32.totalorder %s34, 1
      %p57 = por %p55, %p56
      %p59 = scmp.ne.s32.totalorder %s42, %s58
      %p60 = scmp.eq.s32.totalorder %s34, 0
      %p61 = por %p59, %p60
      %s63 = sadd.s32 %s62, 1
      %p66 = scmp.eq.s32.totalorder %s28, 1
      %p67 = scmp.ne.s32.totalorder %s62, %s64
      %p68 = scmp.eq.s32.totalorder %s28, 0
      %p69 = por %p67, %p68
      %p70 = scmp.ne.s32.totalorder %s62, %s64
      %p71 = scmp.eq.s32.totalorder %s33, 1
      %p72 = por %p70, %p71
      %p73 = scmp.ne.s32.totalorder %s64, %s65
      %p74 = scmp.eq.s32.totalorder %s33, 0
      %p75 = por %p73, %p74
      %p76 = scmp.ne.s32.totalorder %s64, %s65
      %p77 = scmp.eq.s32.totalorder %s34, 1
      %p78 = por %p76, %p77
      %p80 = scmp.ne.s32.totalorder %s65, %s79
      %p81 = scmp.eq.s32.totalorder %s34, 0
      %p82 = por %p80, %p81
      %s84 = sadd.s32 %s83, 1
      %p87 = scmp.eq.s32.totalorder %s28, 1
      %p88 = scmp.ne.s32.totalorder %s83, %s85
      %p89 = scmp.eq.s32.totalorder %s28, 0
      %p90 = por %p88, %p89
      %p91 = scmp.ne.s32.totalorder %s83, %s85
      %p92 = scmp.eq.s32.totalorder %s33, 1
      %p93 = por %p91, %p92
      %p94 = scmp.ne.s32.totalorder %s85, %s86
      %p95 = scmp.eq.s32.totalorder %s33, 0
      %p96 = por %p94, %p95
      %p97 = scmp.ne.s32.totalorder %s85, %s86
      %p98 = scmp.eq.s32.totalorder %s34, 1
      %p99 = por %p97, %p98
      %p101 = scmp.ne.s32.totalorder %s86, %s100
      %p102 = scmp.eq.s32.totalorder %s34, 0
      %p103 = por %p101, %p102
      %s105 = sadd.s32 %s104, 1
      %p108 = scmp.eq.s32.totalorder %s28, 1
      %p109 = scmp.ne.s32.totalorder %s104, %s106
      %p110 = scmp.eq.s32.totalorder %s28, 0
      %p111 = por %p109, %p110
      %p112 = scmp.ne.s32.totalorder %s104, %s106
      %p113 = scmp.eq.s32.totalorder %s33, 1
      %p114 = por %p112, %p113
      %p115 = scmp.ne.s32.totalorder %s106, %s107
      %p116 = scmp.eq.s32.totalorder %s33, 0
      %p117 = por %p115, %p116
      %p118 = scmp.ne.s32.totalorder %s106, %s107
      %p119 = scmp.eq.s32.totalorder %s34, 1
      %p120 = por %p118, %p119
      %p122 = scmp.ne.s32.totalorder %s107, %s121
      %p123 = scmp.eq.s32.totalorder %s34, 0
      %p124 = por %p122, %p123
      %s126 = sadd.s32 %s125, 1
      %p129 = scmp.eq.s32.totalorder %s28, 1
      %p130 = scmp.ne.s32.totalorder %s125, %s127
      %p131 = scmp.eq.s32.totalorder %s28, 0
      %p132 = por %p130, %p131
      %p133 = scmp.ne.s32.totalorder %s125, %s127
      %p134 = scmp.eq.s32.totalorder %s33, 1
      %p135 = por %p133, %p134
      %p136 = scmp.ne.s32.totalorder %s127, %s128
      %p137 = scmp.eq.s32.totalorder %s33, 0
      %p138 = por %p136, %p137
      %p139 = scmp.ne.s32.totalorder %s127, %s128
      %p140 = scmp.eq.s32.totalorder %s34, 1
      %p141 = por %p139, %p140
      %p143 = scmp.ne.s32.totalorder %s128, %s142
      %p144 = scmp.eq.s32.totalorder %s34, 0
      %p145 = por %p143, %p144
      %s147 = sadd.s32 %s146, 1
      %p150 = scmp.eq.s32.totalorder %s28, 1
      %p151 = scmp.ne.s32.totalorder %s146, %s148
      %p152 = scmp.eq.s32.totalorder %s28, 0
      %p153 = por %p151, %p152
      %p154 = scmp.ne.s32.totalorder %s146, %s148
      %p155 = scmp.eq.s32.totalorder %s33, 1
      %p156 = por %p154, %p155
      %p157 = scmp.ne.s32.totalorder %s148, %s149
      %p158 = scmp.eq.s32.totalorder %s33, 0
      %p159 = por %p157, %p158
      %p160 = scmp.ne.s32.totalorder %s148, %s149
      %p161 = scmp.eq.s32.totalorder %s34, 1
      %p162 = por %p160, %p161
      %p164 = scmp.ne.s32.totalorder %s149, %s163
      %p165 = scmp.eq.s32.totalorder %s34, 0
      %p166 = por %p164, %p165
      %s168 = sadd.s32 %s167, 1
      %p171 = scmp.eq.s32.totalorder %s28, 1
      %p172 = scmp.ne.s32.totalorder %s167, %s169
      %p173 = scmp.eq.s32.totalorder %s28, 0
      %p174 = por %p172, %p173
      %p175 = scmp.ne.s32.totalorder %s167, %s169
      %p176 = scmp.eq.s32.totalorder %s33, 1
      %p177 = por %p175, %p176
      %p178 = scmp.ne.s32.totalorder %s169, %s170
      %p179 = scmp.eq.s32.totalorder %s33, 0
      %p180 = por %p178, %p179
      %p181 = scmp.ne.s32.totalorder %s169, %s170
      %p182 = scmp.eq.s32.totalorder %s34, 1
      %p183 = por %p181, %p182
      %p185 = scmp.ne.s32.totalorder %s170, %s184
      %p186 = scmp.eq.s32.totalorder %s34, 0
      %p187 = por %p185, %p186
      %s189 = sadd.s32 %s188, 1
      %p192 = scmp.eq.s32.totalorder %s28, 1
      %p193 = scmp.ne.s32.totalorder %s188, %s190
      %p194 = scmp.eq.s32.totalorder %s28, 0
      %p195 = por %p193, %p194
      %p196 = scmp.ne.s32.totalorder %s188, %s190
      %p197 = scmp.eq.s32.totalorder %s33, 1
      %p198 = por %p196, %p197
      %p199 = scmp.ne.s32.totalorder %s190, %s191
      %p200 = scmp.eq.s32.totalorder %s33, 0
      %p201 = por %p199, %p200
      %p202 = scmp.ne.s32.totalorder %s190, %s191
      %p203 = scmp.eq.s32.totalorder %s34, 1
      %p204 = por %p202, %p203
      %p206 = scmp.ne.s32.totalorder %s191, %s205
      %p207 = scmp.eq.s32.totalorder %s34, 0
      %p208 = por %p206, %p207
      %s210 = sadd.s32 %s209, 1
      %p213 = scmp.eq.s32.totalorder %s28, 1
      %p214 = scmp.ne.s32.totalorder %s209, %s211
      %p215 = scmp.eq.s32.totalorder %s28, 0
      %p216 = por %p214, %p215
      %p217 = scmp.ne.s32.totalorder %s209, %s211
      %p218 = scmp.eq.s32.totalorder %s33, 1
      %p219 = por %p217, %p218
      %p220 = scmp.ne.s32.totalorder %s211, %s212
      %p221 = scmp.eq.s32.totalorder %s33, 0
      %p222 = por %p220, %p221
      %p223 = scmp.ne.s32.totalorder %s211, %s212
      %p224 = scmp.eq.s32.totalorder %s34, 1
      %p225 = por %p223, %p224
      %p227 = scmp.ne.s32.totalorder %s212, %s226
      %p228 = scmp.eq.s32.totalorder %s34, 0
      %p229 = por %p227, %p228
      %s231 = sadd.s32 %s230, 1
      %p234 = scmp.eq.s32.totalorder %s28, 1
      %p235 = scmp.ne.s32.totalorder %s230, %s232
      %p236 = scmp.eq.s32.totalorder %s28, 0
      %p237 = por %p235, %p236
      %p238 = scmp.ne.s32.totalorder %s230, %s232
      %p239 = scmp.eq.s32.totalorder %s33, 1
      %p240 = por %p238, %p239
      %p241 = scmp.ne.s32.totalorder %s232, %s233
      %p242 = scmp.eq.s32.totalorder %s33, 0
      %p243 = por %p241, %p242
      %p244 = scmp.ne.s32.totalorder %s232, %s233
      %p245 = scmp.eq.s32.totalorder %s34, 1
      %p246 = por %p244, %p245
      %p248 = scmp.ne.s32.totalorder %s233, %s247
      %p249 = scmp.eq.s32.totalorder %s34, 0
      %p250 = por %p248, %p249
      %s252 = sadd.s32 %s251, 1
      %p255 = scmp.eq.s32.totalorder %s28, 1
      %p256 = scmp.ne.s32.totalorder %s251, %s253
      %p257 = scmp.eq.s32.totalorder %s28, 0
      %p258 = por %p256, %p257
      %p259 = scmp.ne.s32.totalorder %s251, %s253
      %p260 = scmp.eq.s32.totalorder %s33, 1
      %p261 = por %p259, %p260
      %p262 = scmp.ne.s32.totalorder %s253, %s254
      %p263 = scmp.eq.s32.totalorder %s33, 0
      %p264 = por %p262, %p263
      %p265 = scmp.ne.s32.totalorder %s253, %s254
      %p266 = scmp.eq.s32.totalorder %s34, 1
      %p267 = por %p265, %p266
      %p269 = scmp.ne.s32.totalorder %s254, %s268
      %p270 = scmp.eq.s32.totalorder %s34, 0
      %p271 = por %p269, %p270
      %s272 = ssub.s32 %s28, %s35
      %p273 = scmp.eq.s32.totalorder %s272, 0
      %s275 = sadd.s32 %s274, 1
      %s276 = scalar_select %p273, %s274, %s275
      %p279 = pneg %p273
      %p280 = scmp.eq.s32.totalorder %s28, 1
      %p281 = por %p279, %p280
      %p282 = scmp.ne.s32.totalorder %s274, %s277
      %p283 = scmp.eq.s32.totalorder %s28, 0
      %p284 = por %p282, %p283
      %p285 = scmp.ne.s32.totalorder %s274, %s277
      %p286 = scmp.eq.s32.totalorder %s33, 1
      %p287 = por %p285, %p286
      %p288 = scmp.ne.s32.totalorder %s277, %s278
      %p289 = scmp.eq.s32.totalorder %s33, 0
      %p290 = por %p288, %p289
      %p291 = scmp.ne.s32.totalorder %s277, %s278
      %p292 = scmp.eq.s32.totalorder %s34, 1
      %p293 = por %p291, %p292
      %p295 = scmp.ne.s32.totalorder %s278, %s294
      %p296 = scmp.eq.s32.totalorder %s34, 0
      %p297 = por %p295, %p296
      %p298 = scmp.le.s32.totalorder 1, %s28
      %p299 = scmp.lt.s32.totalorder %s28, 3
      %p300 = pnand %p298, %p299
      %p301 = pneg %p300
      // Predicated region
      $region9: #{forward.1} parent=5 // pred_check
        _
      $region10: #{forward.1} parent=5 // pred_check_branch
        %303 = sbr.rel (%p300) target = $region12
      $region11: #{forward.1} parent=5 // pred_region
        %s304 = ssub.s32 %s28, 1
        // Predicated region
        $region13: #{forward.1} parent=11 // pred_check
          %p305 = pneg %p75
        $region14: #{forward.1} parent=11 // pred_check_branch
          %307 = sbr.rel (%p305) target = $region16
        $region15: #{forward.1} parent=11 // pred_region
          %309 = vsyncadd [#allocation6], 0
          %s310 = sshll.u32 %s1, 4
          %s311 = int_to_ptr.hbm [resolvable:$true] %s310
          %s312 = sshll.u32 [#allocation5], 4
          %s313 = int_to_ptr.vmem [resolvable:$true] %s312
          %318 = dma.hbm_to_vmem [thread:$0]  %s311, 5120, %s313, [#allocation6], 640, 640, 40
        $region16: #{forward.1} parent=11 // pred_fallthru
          _
        // Predicated region
        $region17: #{forward.1} parent=11 // pred_check
          %p319 = pneg %p96
        $region18: #{forward.1} parent=11 // pred_check_branch
          %321 = sbr.rel (%p319) target = $region20
        $region19: #{forward.1} parent=11 // pred_region
          %323 = vsyncadd [#allocation6], 0
          %s324 = sshll.u32 %s2, 4
          %s325 = int_to_ptr.hbm [resolvable:$true] %s324
          %s326 = sshll.u32 [#allocation7], 4
          %s327 = int_to_ptr.vmem [resolvable:$true] %s326
          %332 = dma.hbm_to_vmem [thread:$0]  %s325, 5120, %s327, [#allocation6], 640, 640, 40
        $region20: #{forward.1} parent=11 // pred_fallthru
          _
        // Predicated region
        $region21: #{forward.1} parent=11 // pred_check
          %p333 = pneg %p117
        $region22: #{forward.1} parent=11 // pred_check_branch
          %335 = sbr.rel (%p333) target = $region24
        $region23: #{forward.1} parent=11 // pred_region
          %337 = vsyncadd [#allocation9], 0
          %s339 = sshll.u32 %s3, 4
          %s340 = int_to_ptr.hbm [resolvable:$true] %s339
          %s341 = sshll.u32 [#allocation8], 4
          %s342 = int_to_ptr.vmem [resolvable:$true] %s341
          %344 = dma.hbm_to_vmem [thread:$0]  %s340, 80, %s342, [#allocation9]
        $region24: #{forward.1} parent=11 // pred_fallthru
          _
        // Predicated region
        $region25: #{forward.1} parent=11 // pred_check
          %p345 = pneg %p138
        $region26: #{forward.1} parent=11 // pred_check_branch
          %347 = sbr.rel (%p345) target = $region28
        $region27: #{forward.1} parent=11 // pred_region
          %349 = vsyncadd [#allocation9], 0
          %s350 = sshll.u32 %s4, 4
          %s351 = int_to_ptr.hbm [resolvable:$true] %s350
          %s352 = sshll.u32 [#allocation10], 4
          %s353 = int_to_ptr.vmem [resolvable:$true] %s352
          %358 = dma.hbm_to_vmem [thread:$0]  %s351, 57600, %s353, [#allocation9], 768, 768, 48
        $region28: #{forward.1} parent=11 // pred_fallthru
          _
        // Predicated region
        $region29: #{forward.1} parent=11 // pred_check
          %p359 = pneg %p159
        $region30: #{forward.1} parent=11 // pred_check_branch
          %361 = sbr.rel (%p359) target = $region32
        $region31: #{forward.1} parent=11 // pred_region
          %363 = vsyncadd [#allocation12], 0
          %s364 = sshll.u32 %s5, 4
          %s365 = int_to_ptr.hbm [resolvable:$true] %s364
          %s366 = sshll.u32 [#allocation11], 4
          %s367 = int_to_ptr.vmem [resolvable:$true] %s366
          %372 = dma.hbm_to_vmem [thread:$0]  %s365, 57600, %s367, [#allocation12], 768, 768, 48
        $region32: #{forward.1} parent=11 // pred_fallthru
          _
        // Predicated region
        $region33: #{forward.1} parent=11 // pred_check
          %p373 = pneg %p180
        $region34: #{forward.1} parent=11 // pred_check_branch
          %375 = sbr.rel (%p373) target = $region36
        $region35: #{forward.1} parent=11 // pred_region
          %377 = vsyncadd [#allocation12], 0
          %s379 = sshll.u32 %s6, 4
          %s380 = int_to_ptr.hbm [resolvable:$true] %s379
          %s381 = sshll.u32 [#allocation13], 4
          %s382 = int_to_ptr.vmem [resolvable:$true] %s381
          %384 = dma.hbm_to_vmem [thread:$0]  %s380, 96, %s382, [#allocation12]
        $region36: #{forward.1} parent=11 // pred_fallthru
          _
        // Predicated region
        $region37: #{forward.1} parent=11 // pred_check
          %p385 = pneg %p201
        $region38: #{forward.1} parent=11 // pred_check_branch
          %387 = sbr.rel (%p385) target = $region40
        $region39: #{forward.1} parent=11 // pred_region
          %389 = vsyncadd [#allocation15], 0
          %s390 = sshll.u32 %s7, 4
          %s391 = int_to_ptr.hbm [resolvable:$true] %s390
          %s392 = sshll.u32 [#allocation14], 4
          %s393 = int_to_ptr.vmem [resolvable:$true] %s392
          %398 = dma.hbm_to_vmem [thread:$0]  %s391, 94464, %s393, [#allocation15], 1152, 1152, 72
        $region40: #{forward.1} parent=11 // pred_fallthru
          _
        // Predicated region
        $region41: #{forward.1} parent=11 // pred_check
          %p399 = pneg %p222
        $region42: #{forward.1} parent=11 // pred_check_branch
          %401 = sbr.rel (%p399) target = $region44
        $region43: #{forward.1} parent=11 // pred_region
          %403 = vsyncadd [#allocation15], 0
          %s405 = sshll.u32 %s8, 4
          %s406 = int_to_ptr.hbm [resolvable:$true] %s405
          %s407 = sshll.u32 [#allocation16], 4
          %s408 = int_to_ptr.vmem [resolvable:$true] %s407
          %410 = dma.hbm_to_vmem [thread:$0]  %s406, 144, %s408, [#allocation15]
        $region44: #{forward.1} parent=11 // pred_fallthru
          _
        // Predicated region
        $region45: #{forward.1} parent=11 // pred_check
          %p411 = pneg %p243
        $region46: #{forward.1} parent=11 // pred_check_branch
          %413 = sbr.rel (%p411) target = $region48
        $region47: #{forward.1} parent=11 // pred_region
          %415 = vsyncadd [#allocation18], 0
          %s416 = sshll.u32 %s9, 4
          %s417 = int_to_ptr.hbm [resolvable:$true] %s416
          %s418 = sshll.u32 [#allocation17], 4
          %s419 = int_to_ptr.vmem [resolvable:$true] %s418
          %424 = dma.hbm_to_vmem [thread:$0]  %s417, 17920, %s419, [#allocation18], 128, 128, 8
        $region48: #{forward.1} parent=11 // pred_fallthru
          _
        // Predicated region
        $region49: #{forward.1} parent=11 // pred_check
          %p425 = pneg %p264
        $region50: #{forward.1} parent=11 // pred_check_branch
          %427 = sbr.rel (%p425) target = $region52
        $region51: #{forward.1} parent=11 // pred_region
          _
        $region52: #{forward.1} parent=11 // pred_fallthru
          _
      $region12: #{forward.1} parent=5 // pred_fallthru
        _
      %p428 = scmp.lt.s32.totalorder %s28, 2
      // Predicated region
      $region53: #{forward.1} parent=5 // pred_check
        %p429 = pneg %p428
      $region54: #{forward.1} parent=5 // pred_check_branch
        %431 = sbr.rel (%p429) target = $region56
      $region55: #{forward.1} parent=5 // pred_region
        // Predicated region
        $region57: #{forward.1} parent=55 // pred_check
          %p432 = pneg %p48
        $region58: #{forward.1} parent=55 // pred_check_branch
          %434 = sbr.rel (%p432) target = $region60
        $region59: #{forward.1} parent=55 // pred_region
          %s435 = sand.u32 %s38, 1
          %s436 = scalar_lea.sflag [#allocation3], %s435
          %s437 = sand.u32 %s38, 1
          %s438 = smul.addr %s437, 8
          %s439 = scalar_lea.vmem [#allocation2], %s438
          %441 = vsyncadd %s436, 0
          %s442 = smul.addr %s28, 8
          %s443 = scalar_lea.hbm %s0, %s442
          %s445 = sshll.u32 %s443, 4
          %s446 = int_to_ptr.hbm [resolvable:$true] %s445
          %s447 = sshll.u32 %s439, 4
          %s448 = int_to_ptr.vmem [resolvable:$true] %s447
          %450 = dma.hbm_to_vmem [thread:$0]  %s446, 128, %s448, %s436
        $region60: #{forward.1} parent=55 // pred_fallthru
          _
      $region56: #{forward.1} parent=5 // pred_fallthru
        _
      %p451 = scmp.le.s32.totalorder 1, %s28
      %p452 = scmp.lt.s32.totalorder %s28, 3
      %p453 = pnand %p451, %p452
      %p454 = pneg %p453
      // Predicated region
      $region61: #{forward.1} parent=5 // pred_check
        _
      $region62: #{forward.1} parent=5 // pred_check_branch
        %456 = sbr.rel (%p453) target = $region64
      $region63: #{forward.1} parent=5 // pred_region
        %s457 = ssub.s32 %s28, 1
        %s458 = sand.u32 %s41, 1
        %s459 = scalar_lea.sflag [#allocation3], %s458
        %s460 = sand.u32 %s41, 1
        %s461 = smul.addr %s460, 8
        %s462 = scalar_lea.vmem [#allocation2], %s461
        // Predicated region
        $region65: #{forward.1} parent=63 // pred_check
          %p463 = pneg %p54
        $region66: #{forward.1} parent=63 // pred_check_branch
          %465 = sbr.rel (%p463) target = $region68
        $region67: #{forward.1} parent=63 // pred_region
          %467 = dma.done %s459, 128
        $region68: #{forward.1} parent=63 // pred_fallthru
          _
        // Predicated region
        $region69: #{forward.1} parent=63 // pred_check
          %p468 = pneg %p75
        $region70: #{forward.1} parent=63 // pred_check_branch
          %470 = sbr.rel (%p468) target = $region72
        $region71: #{forward.1} parent=63 // pred_region
          %472 = dma.done [#allocation6], 5120
        $region72: #{forward.1} parent=63 // pred_fallthru
          _
        // Predicated region
        $region73: #{forward.1} parent=63 // pred_check
          %p473 = pneg %p96
        $region74: #{forward.1} parent=63 // pred_check_branch
          %475 = sbr.rel (%p473) target = $region76
        $region75: #{forward.1} parent=63 // pred_region
          %477 = dma.done [#allocation6], 5120
        $region76: #{forward.1} parent=63 // pred_fallthru
          _
        // Predicated region
        $region77: #{forward.1} parent=63 // pred_check
          %p478 = pneg %p117
        $region78: #{forward.1} parent=63 // pred_check_branch
          %480 = sbr.rel (%p478) target = $region80
        $region79: #{forward.1} parent=63 // pred_region
          %482 = dma.done [#allocation9], 80
        $region80: #{forward.1} parent=63 // pred_fallthru
          _
        // Predicated region
        $region81: #{forward.1} parent=63 // pred_check
          %p483 = pneg %p138
        $region82: #{forward.1} parent=63 // pred_check_branch
          %485 = sbr.rel (%p483) target = $region84
        $region83: #{forward.1} parent=63 // pred_region
          %487 = dma.done [#allocation9], 57600
        $region84: #{forward.1} parent=63 // pred_fallthru
          _
        // Predicated region
        $region85: #{forward.1} parent=63 // pred_check
          %p488 = pneg %p159
        $region86: #{forward.1} parent=63 // pred_check_branch
          %490 = sbr.rel (%p488) target = $region88
        $region87: #{forward.1} parent=63 // pred_region
          %492 = dma.done [#allocation12], 57600
        $region88: #{forward.1} parent=63 // pred_fallthru
          _
        // Predicated region
        $region89: #{forward.1} parent=63 // pred_check
          %p493 = pneg %p180
        $region90: #{forward.1} parent=63 // pred_check_branch
          %495 = sbr.rel (%p493) target = $region92
        $region91: #{forward.1} parent=63 // pred_region
          %497 = dma.done [#allocation12], 96
        $region92: #{forward.1} parent=63 // pred_fallthru
          _
        // Predicated region
        $region93: #{forward.1} parent=63 // pred_check
          %p498 = pneg %p201
        $region94: #{forward.1} parent=63 // pred_check_branch
          %500 = sbr.rel (%p498) target = $region96
        $region95: #{forward.1} parent=63 // pred_region
          %502 = dma.done [#allocation15], 94464
        $region96: #{forward.1} parent=63 // pred_fallthru
          _
        // Predicated region
        $region97: #{forward.1} parent=63 // pred_check
          %p503 = pneg %p222
        $region98: #{forward.1} parent=63 // pred_check_branch
          %505 = sbr.rel (%p503) target = $region100
        $region99: #{forward.1} parent=63 // pred_region
          %507 = dma.done [#allocation15], 144
        $region100: #{forward.1} parent=63 // pred_fallthru
          _
        // Predicated region
        $region101: #{forward.1} parent=63 // pred_check
          %p508 = pneg %p243
        $region102: #{forward.1} parent=63 // pred_check_branch
          %510 = sbr.rel (%p508) target = $region104
        $region103: #{forward.1} parent=63 // pred_region
          %512 = dma.done [#allocation18], 17920
        $region104: #{forward.1} parent=63 // pred_fallthru
          _
        %s513 = sand.u32 %s41, 1
        %s514 = scalar_lea.sflag [#allocation3], %s513
        %s515 = sand.u32 %s41, 1
        %s516 = smul.addr %s515, 8
        %s517 = scalar_lea.vmem [#allocation2], %s516
        %p518 = pneg %p54
        %p519 = pneg %p51
        %p520 = pneg %p75
        %p521 = pneg %p72
        %p522 = pneg %p96
        %p523 = pneg %p93
        %p524 = pneg %p117
        %p525 = pneg %p114
        %p526 = pneg %p138
        %p527 = pneg %p135
        %p528 = pneg %p159
        %p529 = pneg %p156
        %p530 = pneg %p180
        %p531 = pneg %p177
        %p532 = pneg %p201
        %p533 = pneg %p198
        %p534 = pneg %p222
        %p535 = pneg %p219
        %p536 = pneg %p243
        %p537 = pneg %p240
        %p538 = pneg %p264
        %p539 = pneg %p261
        %p540 = pneg %p290
        %p541 = pneg %p287
        %s542 = sand.u32 %s277, 1
        %s543 = scalar_lea.sflag [#allocation4], %s542
        %s544 = sand.u32 %s277, 1
        %s545 = smul.addr %s544, 8
        %s546 = scalar_lea.vmem [#allocation19], %s545
        %v547 = vld [vmem:[%s462] sm:$0xff]
        %v548 = vld [vmem:[#allocation5] sm:$0xff]
        %v549 = vld [vmem:[#allocation5 + $0x8] sm:$0xff]
        %v550 = vld [vmem:[#allocation5 + $0x10] sm:$0xff]
        %v551 = vld [vmem:[#allocation5 + $0x18] sm:$0xff]
        %v552 = vld [vmem:[#allocation5 + $0x20] sm:$0xff]
        %v553 = vld [vmem:[#allocation5 + $0x28] sm:$0xff]
        %v554 = vld [vmem:[#allocation5 + $0x30] sm:$0xff]
        %v555 = vld [vmem:[#allocation5 + $0x38] sm:$0xff]
        %v556 = vld [vmem:[#allocation5 + $0x40] sm:$0xff]
        %v557 = vld [vmem:[#allocation5 + $0x48] sm:$0xff]
        %v558 = vld [vmem:[#allocation5 + $0x50] sm:$0xff]
        %v559 = vld [vmem:[#allocation5 + $0x58] sm:$0xff]
        %v560 = vld [vmem:[#allocation5 + $0x60] sm:$0xff]
        %v561 = vld [vmem:[#allocation5 + $0x68] sm:$0xff]
        %v562 = vld [vmem:[#allocation5 + $0x70] sm:$0xff]
        %v563 = vld [vmem:[#allocation5 + $0x78] sm:$0xff]
        %v564 = vld [vmem:[#allocation5 + $0x80] sm:$0xff]
        %v565 = vld [vmem:[#allocation5 + $0x88] sm:$0xff]
        %v566 = vld [vmem:[#allocation5 + $0x90] sm:$0xff]
        %v567 = vld [vmem:[#allocation5 + $0x98] sm:$0xff]
        %v568 = vld [vmem:[#allocation5 + $0xa0] sm:$0xff]
        %v569 = vld [vmem:[#allocation5 + $0xa8] sm:$0xff]
        %v570 = vld [vmem:[#allocation5 + $0xb0] sm:$0xff]
        %v571 = vld [vmem:[#allocation5 + $0xb8] sm:$0xff]
        %v572 = vld [vmem:[#allocation5 + $0xc0] sm:$0xff]
        %v573 = vld [vmem:[#allocation5 + $0xc8] sm:$0xff]
        %v574 = vld [vmem:[#allocation5 + $0xd0] sm:$0xff]
        %v575 = vld [vmem:[#allocation5 + $0xd8] sm:$0xff]
        %v576 = vld [vmem:[#allocation5 + $0xe0] sm:$0xff]
        %v577 = vld [vmem:[#allocation5 + $0xe8] sm:$0xff]
        %v578 = vld [vmem:[#allocation5 + $0xf0] sm:$0xff]
        %v579 = vld [vmem:[#allocation5 + $0xf8] sm:$0xff]
        %v580 = vld [vmem:[#allocation5 + $0x100] sm:$0xff]
        %v581 = vld [vmem:[#allocation5 + $0x108] sm:$0xff]
        %v582 = vld [vmem:[#allocation5 + $0x110] sm:$0xff]
        %v583 = vld [vmem:[#allocation5 + $0x118] sm:$0xff]
        %v584 = vld [vmem:[#allocation5 + $0x120] sm:$0xff]
        %v585 = vld [vmem:[#allocation5 + $0x128] sm:$0xff]
        %v586 = vld [vmem:[#allocation5 + $0x130] sm:$0xff]
        %v587 = vld [vmem:[#allocation5 + $0x138] sm:$0xff]
        %vm588 = vcmask 523264
        %v590 = vsel %vm588, %v547, 0
        %592 = vmatpush.msra.mxu0 0.0
        %593 = vmatpush.msra.mxu0 0.0
        %594 = vmatpush.msra.mxu0 0.0
        %595 = vmatpush.msra.mxu0 0.0
        %596 = vmatpush.msra.mxu0 0.0
        %597 = vmatpush.msra.mxu0 0.0
        %598 = vmatpush.msra.mxu0 0.0
        %599 = vmatpush.msra.mxu0 0.0
        %600 = vmatpush.msra.mxu0 %v583
        %601 = vmatpush.msra.mxu0 %v578
        %602 = vmatpush.msra.mxu0 %v573
        %603 = vmatpush.msra.mxu0 %v568
        %604 = vmatpush.msra.mxu0 %v563
        %605 = vmatpush.msra.mxu0 %v558
        %606 = vmatpush.msra.mxu0 %v553
        %607 = vmatpush.msra.mxu0 %v548
        %608 = vmatmul.f32.gmra.mxu0 %v590
        %v609 = vpop.f32.mrf.mxu0
        %v610 = vadd.f32 0.0, %v609
        %611 = vdwg.mxu0
        %612 = vmatpush.msra.mxu0 0.0
        %613 = vmatpush.msra.mxu0 0.0
        %614 = vmatpush.msra.mxu0 0.0
        %615 = vmatpush.msra.mxu0 0.0
        %616 = vmatpush.msra.mxu0 0.0
        %617 = vmatpush.msra.mxu0 0.0
        %618 = vmatpush.msra.mxu0 0.0
        %619 = vmatpush.msra.mxu0 0.0
        %620 = vmatpush.msra.mxu0 %v584
        %621 = vmatpush.msra.mxu0 %v579
        %622 = vmatpush.msra.mxu0 %v574
        %623 = vmatpush.msra.mxu0 %v569
        %624 = vmatpush.msra.mxu0 %v564
        %625 = vmatpush.msra.mxu0 %v559
        %626 = vmatpush.msra.mxu0 %v554
        %627 = vmatpush.msra.mxu0 %v549
        %628 = vmatmul.f32.gmra.mxu0 %v590
        %v629 = vpop.f32.mrf.mxu0
        %v630 = vadd.f32 0.0, %v629
        %631 = vdwg.mxu0
        %632 = vmatpush.msra.mxu0 0.0
        %633 = vmatpush.msra.mxu0 0.0
        %634 = vmatpush.msra.mxu0 0.0
        %635 = vmatpush.msra.mxu0 0.0
        %636 = vmatpush.msra.mxu0 0.0
        %637 = vmatpush.msra.mxu0 0.0
        %638 = vmatpush.msra.mxu0 0.0
        %639 = vmatpush.msra.mxu0 0.0
        %640 = vmatpush.msra.mxu0 %v585
        %641 = vmatpush.msra.mxu0 %v580
        %642 = vmatpush.msra.mxu0 %v575
        %643 = vmatpush.msra.mxu0 %v570
        %644 = vmatpush.msra.mxu0 %v565
        %645 = vmatpush.msra.mxu0 %v560
        %646 = vmatpush.msra.mxu0 %v555
        %647 = vmatpush.msra.mxu0 %v550
        %648 = vmatmul.f32.gmra.mxu0 %v590
        %v649 = vpop.f32.mrf.mxu0
        %v650 = vadd.f32 0.0, %v649
        %651 = vdwg.mxu0
        %652 = vmatpush.msra.mxu0 0.0
        %653 = vmatpush.msra.mxu0 0.0
        %654 = vmatpush.msra.mxu0 0.0
        %655 = vmatpush.msra.mxu0 0.0
        %656 = vmatpush.msra.mxu0 0.0
        %657 = vmatpush.msra.mxu0 0.0
        %658 = vmatpush.msra.mxu0 0.0
        %659 = vmatpush.msra.mxu0 0.0
        %660 = vmatpush.msra.mxu0 %v586
        %661 = vmatpush.msra.mxu0 %v581
        %662 = vmatpush.msra.mxu0 %v576
        %663 = vmatpush.msra.mxu0 %v571
        %664 = vmatpush.msra.mxu0 %v566
        %665 = vmatpush.msra.mxu0 %v561
        %666 = vmatpush.msra.mxu0 %v556
        %667 = vmatpush.msra.mxu0 %v551
        %668 = vmatmul.f32.gmra.mxu0 %v590
        %v669 = vpop.f32.mrf.mxu0
        %v670 = vadd.f32 0.0, %v669
        %671 = vdwg.mxu0
        %672 = vmatpush.msra.mxu0 0.0
        %673 = vmatpush.msra.mxu0 0.0
        %674 = vmatpush.msra.mxu0 0.0
        %675 = vmatpush.msra.mxu0 0.0
        %676 = vmatpush.msra.mxu0 0.0
        %677 = vmatpush.msra.mxu0 0.0
        %678 = vmatpush.msra.mxu0 0.0
        %679 = vmatpush.msra.mxu0 0.0
        %680 = vmatpush.msra.mxu0 %v587
        %681 = vmatpush.msra.mxu0 %v582
        %682 = vmatpush.msra.mxu0 %v577
        %683 = vmatpush.msra.mxu0 %v572
        %684 = vmatpush.msra.mxu0 %v567
        %685 = vmatpush.msra.mxu0 %v562
        %686 = vmatpush.msra.mxu0 %v557
        %687 = vmatpush.msra.mxu0 %v552
        %688 = vmatmul.f32.gmra.mxu0 %v590
        %v689 = vpop.f32.mrf.mxu0
        %v690 = vadd.f32 0.0, %v689
        %691 = vdwg.mxu0
        %v692 = vld [vmem:[#allocation7] sm:$0xff]
        %v693 = vld [vmem:[#allocation7 + $0x8] sm:$0xff]
        %v694 = vld [vmem:[#allocation7 + $0x10] sm:$0xff]
        %v695 = vld [vmem:[#allocation7 + $0x18] sm:$0xff]
        %v696 = vld [vmem:[#allocation7 + $0x20] sm:$0xff]
        %v697 = vld [vmem:[#allocation7 + $0x28] sm:$0xff]
        %v698 = vld [vmem:[#allocation7 + $0x30] sm:$0xff]
        %v699 = vld [vmem:[#allocation7 + $0x38] sm:$0xff]
        %v700 = vld [vmem:[#allocation7 + $0x40] sm:$0xff]
        %v701 = vld [vmem:[#allocation7 + $0x48] sm:$0xff]
        %v702 = vld [vmem:[#allocation7 + $0x50] sm:$0xff]
        %v703 = vld [vmem:[#allocation7 + $0x58] sm:$0xff]
        %v704 = vld [vmem:[#allocation7 + $0x60] sm:$0xff]
        %v705 = vld [vmem:[#allocation7 + $0x68] sm:$0xff]
        %v706 = vld [vmem:[#allocation7 + $0x70] sm:$0xff]
        %v707 = vld [vmem:[#allocation7 + $0x78] sm:$0xff]
        %v708 = vld [vmem:[#allocation7 + $0x80] sm:$0xff]
        %v709 = vld [vmem:[#allocation7 + $0x88] sm:$0xff]
        %v710 = vld [vmem:[#allocation7 + $0x90] sm:$0xff]
        %v711 = vld [vmem:[#allocation7 + $0x98] sm:$0xff]
        %v712 = vld [vmem:[#allocation7 + $0xa0] sm:$0xff]
        %v713 = vld [vmem:[#allocation7 + $0xa8] sm:$0xff]
        %v714 = vld [vmem:[#allocation7 + $0xb0] sm:$0xff]
        %v715 = vld [vmem:[#allocation7 + $0xb8] sm:$0xff]
        %v716 = vld [vmem:[#allocation7 + $0xc0] sm:$0xff]
        %v717 = vld [vmem:[#allocation7 + $0xc8] sm:$0xff]
        %v718 = vld [vmem:[#allocation7 + $0xd0] sm:$0xff]
        %v719 = vld [vmem:[#allocation7 + $0xd8] sm:$0xff]
        %v720 = vld [vmem:[#allocation7 + $0xe0] sm:$0xff]
        %v721 = vld [vmem:[#allocation7 + $0xe8] sm:$0xff]
        %v722 = vld [vmem:[#allocation7 + $0xf0] sm:$0xff]
        %v723 = vld [vmem:[#allocation7 + $0xf8] sm:$0xff]
        %v724 = vld [vmem:[#allocation7 + $0x100] sm:$0xff]
        %v725 = vld [vmem:[#allocation7 + $0x108] sm:$0xff]
        %v726 = vld [vmem:[#allocation7 + $0x110] sm:$0xff]
        %v727 = vld [vmem:[#allocation7 + $0x118] sm:$0xff]
        %v728 = vld [vmem:[#allocation7 + $0x120] sm:$0xff]
        %v729 = vld [vmem:[#allocation7 + $0x128] sm:$0xff]
        %v730 = vld [vmem:[#allocation7 + $0x130] sm:$0xff]
        %v731 = vld [vmem:[#allocation7 + $0x138] sm:$0xff]
        %732 = vmatpush.msra.mxu0 0.0
        %733 = vmatpush.msra.mxu0 0.0
        %734 = vmatpush.msra.mxu0 0.0
        %735 = vmatpush.msra.mxu0 0.0
        %736 = vmatpush.msra.mxu0 0.0
        %737 = vmatpush.msra.mxu0 0.0
        %738 = vmatpush.msra.mxu0 0.0
        %739 = vmatpush.msra.mxu0 0.0
        %740 = vmatpush.msra.mxu0 %v727
        %741 = vmatpush.msra.mxu0 %v722
        %742 = vmatpush.msra.mxu0 %v717
        %743 = vmatpush.msra.mxu0 %v712
        %744 = vmatpush.msra.mxu0 %v707
        %745 = vmatpush.msra.mxu0 %v702
        %746 = vmatpush.msra.mxu0 %v697
        %747 = vmatpush.msra.mxu0 %v692
        %748 = vmatmul.f32.gmra.mxu0 %v590
        %v749 = vpop.f32.mrf.mxu0
        %v750 = vadd.f32 0.0, %v749
        %751 = vdwg.mxu0
        %752 = vmatpush.msra.mxu0 0.0
        %753 = vmatpush.msra.mxu0 0.0
        %754 = vmatpush.msra.mxu0 0.0
        %755 = vmatpush.msra.mxu0 0.0
        %756 = vmatpush.msra.mxu0 0.0
        %757 = vmatpush.msra.mxu0 0.0
        %758 = vmatpush.msra.mxu0 0.0
        %759 = vmatpush.msra.mxu0 0.0
        %760 = vmatpush.msra.mxu0 %v728
        %761 = vmatpush.msra.mxu0 %v723
        %762 = vmatpush.msra.mxu0 %v718
        %763 = vmatpush.msra.mxu0 %v713
        %764 = vmatpush.msra.mxu0 %v708
        %765 = vmatpush.msra.mxu0 %v703
        %766 = vmatpush.msra.mxu0 %v698
        %767 = vmatpush.msra.mxu0 %v693
        %768 = vmatmul.f32.gmra.mxu0 %v590
        %v769 = vpop.f32.mrf.mxu0
        %v770 = vadd.f32 0.0, %v769
        %771 = vdwg.mxu0
        %772 = vmatpush.msra.mxu0 0.0
        %773 = vmatpush.msra.mxu0 0.0
        %774 = vmatpush.msra.mxu0 0.0
        %775 = vmatpush.msra.mxu0 0.0
        %776 = vmatpush.msra.mxu0 0.0
        %777 = vmatpush.msra.mxu0 0.0
        %778 = vmatpush.msra.mxu0 0.0
        %779 = vmatpush.msra.mxu0 0.0
        %780 = vmatpush.msra.mxu0 %v729
        %781 = vmatpush.msra.mxu0 %v724
        %782 = vmatpush.msra.mxu0 %v719
        %783 = vmatpush.msra.mxu0 %v714
        %784 = vmatpush.msra.mxu0 %v709
        %785 = vmatpush.msra.mxu0 %v704
        %786 = vmatpush.msra.mxu0 %v699
        %787 = vmatpush.msra.mxu0 %v694
        %788 = vmatmul.f32.gmra.mxu0 %v590
        %v789 = vpop.f32.mrf.mxu0
        %v790 = vadd.f32 0.0, %v789
        %791 = vdwg.mxu0
        %792 = vmatpush.msra.mxu0 0.0
        %793 = vmatpush.msra.mxu0 0.0
        %794 = vmatpush.msra.mxu0 0.0
        %795 = vmatpush.msra.mxu0 0.0
        %796 = vmatpush.msra.mxu0 0.0
        %797 = vmatpush.msra.mxu0 0.0
        %798 = vmatpush.msra.mxu0 0.0
        %799 = vmatpush.msra.mxu0 0.0
        %800 = vmatpush.msra.mxu0 %v730
        %801 = vmatpush.msra.mxu0 %v725
        %802 = vmatpush.msra.mxu0 %v720
        %803 = vmatpush.msra.mxu0 %v715
        %804 = vmatpush.msra.mxu0 %v710
        %805 = vmatpush.msra.mxu0 %v705
        %806 = vmatpush.msra.mxu0 %v700
        %807 = vmatpush.msra.mxu0 %v695
        %808 = vmatmul.f32.gmra.mxu0 %v590
        %v809 = vpop.f32.mrf.mxu0
        %v810 = vadd.f32 0.0, %v809
        %811 = vdwg.mxu0
        %812 = vmatpush.msra.mxu0 0.0
        %813 = vmatpush.msra.mxu0 0.0
        %814 = vmatpush.msra.mxu0 0.0
        %815 = vmatpush.msra.mxu0 0.0
        %816 = vmatpush.msra.mxu0 0.0
        %817 = vmatpush.msra.mxu0 0.0
        %818 = vmatpush.msra.mxu0 0.0
        %819 = vmatpush.msra.mxu0 0.0
        %820 = vmatpush.msra.mxu0 %v731
        %821 = vmatpush.msra.mxu0 %v726
        %822 = vmatpush.msra.mxu0 %v721
        %823 = vmatpush.msra.mxu0 %v716
        %824 = vmatpush.msra.mxu0 %v711
        %825 = vmatpush.msra.mxu0 %v706
        %826 = vmatpush.msra.mxu0 %v701
        %827 = vmatpush.msra.mxu0 %v696
        %828 = vmatmul.f32.gmra.mxu0 %v590
        %v829 = vpop.f32.mrf.mxu0
        %v830 = vadd.f32 0.0, %v829
        %831 = vdwg.mxu0
        %v832 = vmax.f32 %v610, %v750
        %v833 = vmax.f32 %v630, %v770
        %v834 = vmax.f32 %v650, %v790
        %v835 = vmax.f32 %v670, %v810
        %v836 = vmax.f32 %v690, %v830
        %v837 = vld [vmem:[#allocation8] sm:$0x1f]
        %v839 = vperm.slane %v837, 0
        %v840 = vperm.slane %v837, 1
        %v841 = vperm.slane %v837, 2
        %v842 = vperm.slane %v837, 3
        %v843 = vperm.slane %v837, 4
        %v849 = vadd.f32 %v832, %v839
        %v850 = vadd.f32 %v833, %v840
        %v851 = vadd.f32 %v834, %v841
        %v852 = vadd.f32 %v835, %v842
        %v853 = vadd.f32 %v836, %v843
        %v854 = vmax.f32 %v849, 0.0
        %v855 = vmax.f32 %v850, 0.0
        %v856 = vmax.f32 %v851, 0.0
        %v857 = vmax.f32 %v852, 0.0
        %v858 = vmax.f32 %v853, 0.0
        %v859 = vld [vmem:[#allocation10] sm:$0xff]
        %v860 = vld [vmem:[#allocation10 + $0x8] sm:$0xff]
        %v861 = vld [vmem:[#allocation10 + $0x10] sm:$0xff]
        %v862 = vld [vmem:[#allocation10 + $0x18] sm:$0xff]
        %v863 = vld [vmem:[#allocation10 + $0x20] sm:$0xff]
        %v864 = vld [vmem:[#allocation10 + $0x28] sm:$0xff]
        %v865 = vld [vmem:[#allocation10 + $0x30] sm:$0xff]
        %v866 = vld [vmem:[#allocation10 + $0x38] sm:$0xff]
        %v867 = vld [vmem:[#allocation10 + $0x40] sm:$0xff]
        %v868 = vld [vmem:[#allocation10 + $0x48] sm:$0xff]
        %v869 = vld [vmem:[#allocation10 + $0x50] sm:$0xff]
        %v870 = vld [vmem:[#allocation10 + $0x58] sm:$0xff]
        %v871 = vld [vmem:[#allocation10 + $0x60] sm:$0xff]
        %v872 = vld [vmem:[#allocation10 + $0x68] sm:$0xff]
        %v873 = vld [vmem:[#allocation10 + $0x70] sm:$0xff]
        %v874 = vld [vmem:[#allocation10 + $0x78] sm:$0xff]
        %v875 = vld [vmem:[#allocation10 + $0x80] sm:$0xff]
        %v876 = vld [vmem:[#allocation10 + $0x88] sm:$0xff]
        %v877 = vld [vmem:[#allocation10 + $0x90] sm:$0xff]
        %v878 = vld [vmem:[#allocation10 + $0x98] sm:$0xff]
        %v879 = vld [vmem:[#allocation10 + $0xa0] sm:$0xff]
        %v880 = vld [vmem:[#allocation10 + $0xa8] sm:$0xff]
        %v881 = vld [vmem:[#allocation10 + $0xb0] sm:$0xff]
        %v882 = vld [vmem:[#allocation10 + $0xb8] sm:$0xff]
        %v883 = vld [vmem:[#allocation10 + $0xc0] sm:$0xff]
        %v884 = vld [vmem:[#allocation10 + $0xc8] sm:$0xff]
        %v885 = vld [vmem:[#allocation10 + $0xd0] sm:$0xff]
        %v886 = vld [vmem:[#allocation10 + $0xd8] sm:$0xff]
        %v887 = vld [vmem:[#allocation10 + $0xe0] sm:$0xff]
        %v888 = vld [vmem:[#allocation10 + $0xe8] sm:$0xff]
        %v889 = vld [vmem:[#allocation10 + $0xf0] sm:$0xff]
        %v890 = vld [vmem:[#allocation10 + $0xf8] sm:$0xff]
        %v891 = vld [vmem:[#allocation10 + $0x100] sm:$0xff]
        %v892 = vld [vmem:[#allocation10 + $0x108] sm:$0xff]
        %v893 = vld [vmem:[#allocation10 + $0x110] sm:$0xff]
        %v894 = vld [vmem:[#allocation10 + $0x118] sm:$0xff]
        %v895 = vld [vmem:[#allocation10 + $0x120] sm:$0xff]
        %v896 = vld [vmem:[#allocation10 + $0x128] sm:$0xff]
        %v897 = vld [vmem:[#allocation10 + $0x130] sm:$0xff]
        %v898 = vld [vmem:[#allocation10 + $0x138] sm:$0xff]
        %v899 = vld [vmem:[#allocation10 + $0x140] sm:$0xff]
        %v900 = vld [vmem:[#allocation10 + $0x148] sm:$0xff]
        %v901 = vld [vmem:[#allocation10 + $0x150] sm:$0xff]
        %v902 = vld [vmem:[#allocation10 + $0x158] sm:$0xff]
        %v903 = vld [vmem:[#allocation10 + $0x160] sm:$0xff]
        %v904 = vld [vmem:[#allocation10 + $0x168] sm:$0xff]
        %v905 = vld [vmem:[#allocation10 + $0x170] sm:$0xff]
        %v906 = vld [vmem:[#allocation10 + $0x178] sm:$0xff]
        %v907 = vld [vmem:[#allocation10 + $0x180] sm:$0xff]
        %v908 = vld [vmem:[#allocation10 + $0x188] sm:$0xff]
        %v909 = vld [vmem:[#allocation10 + $0x190] sm:$0xff]
        %v910 = vld [vmem:[#allocation10 + $0x198] sm:$0xff]
        %v911 = vld [vmem:[#allocation10 + $0x1a0] sm:$0xff]
        %v912 = vld [vmem:[#allocation10 + $0x1a8] sm:$0xff]
        %v913 = vld [vmem:[#allocation10 + $0x1b0] sm:$0xff]
        %v914 = vld [vmem:[#allocation10 + $0x1b8] sm:$0xff]
        %v915 = vld [vmem:[#allocation10 + $0x1c0] sm:$0xff]
        %v916 = vld [vmem:[#allocation10 + $0x1c8] sm:$0xff]
        %v917 = vld [vmem:[#allocation10 + $0x1d0] sm:$0xff]
        %v918 = vld [vmem:[#allocation10 + $0x1d8] sm:$0xff]
        %v919 = vld [vmem:[#allocation10 + $0x1e0] sm:$0xff]
        %v920 = vld [vmem:[#allocation10 + $0x1e8] sm:$0xff]
        %v921 = vld [vmem:[#allocation10 + $0x1f0] sm:$0xff]
        %v922 = vld [vmem:[#allocation10 + $0x1f8] sm:$0xff]
        %v923 = vld [vmem:[#allocation10 + $0x200] sm:$0xff]
        %v924 = vld [vmem:[#allocation10 + $0x208] sm:$0xff]
        %v925 = vld [vmem:[#allocation10 + $0x210] sm:$0xff]
        %v926 = vld [vmem:[#allocation10 + $0x218] sm:$0xff]
        %v927 = vld [vmem:[#allocation10 + $0x220] sm:$0xff]
        %v928 = vld [vmem:[#allocation10 + $0x228] sm:$0xff]
        %v929 = vld [vmem:[#allocation10 + $0x230] sm:$0xff]
        %v930 = vld [vmem:[#allocation10 + $0x238] sm:$0xff]
        %v931 = vld [vmem:[#allocation10 + $0x240] sm:$0xff]
        %v932 = vld [vmem:[#allocation10 + $0x248] sm:$0xff]
        %v933 = vld [vmem:[#allocation10 + $0x250] sm:$0xff]
        %v934 = vld [vmem:[#allocation10 + $0x258] sm:$0xff]
        %v935 = vld [vmem:[#allocation10 + $0x260] sm:$0xff]
        %v936 = vld [vmem:[#allocation10 + $0x268] sm:$0xff]
        %v937 = vld [vmem:[#allocation10 + $0x270] sm:$0xff]
        %v938 = vld [vmem:[#allocation10 + $0x278] sm:$0xff]
        %v939 = vld [vmem:[#allocation10 + $0x280] sm:$0xff]
        %v940 = vld [vmem:[#allocation10 + $0x288] sm:$0xff]
        %v941 = vld [vmem:[#allocation10 + $0x290] sm:$0xff]
        %v942 = vld [vmem:[#allocation10 + $0x298] sm:$0xff]
        %v943 = vld [vmem:[#allocation10 + $0x2a0] sm:$0xff]
        %v944 = vld [vmem:[#allocation10 + $0x2a8] sm:$0xff]
        %v945 = vld [vmem:[#allocation10 + $0x2b0] sm:$0xff]
        %v946 = vld [vmem:[#allocation10 + $0x2b8] sm:$0xff]
        %v947 = vld [vmem:[#allocation10 + $0x2c0] sm:$0xff]
        %v948 = vld [vmem:[#allocation10 + $0x2c8] sm:$0xff]
        %v949 = vld [vmem:[#allocation10 + $0x2d0] sm:$0xff]
        %v950 = vld [vmem:[#allocation10 + $0x2d8] sm:$0xff]
        %v951 = vld [vmem:[#allocation10 + $0x2e0] sm:$0xff]
        %v952 = vld [vmem:[#allocation10 + $0x2e8] sm:$0xff]
        %v953 = vld [vmem:[#allocation10 + $0x2f0] sm:$0xff]
        %v954 = vld [vmem:[#allocation10 + $0x2f8] sm:$0xff]
        %v955 = vld [vmem:[#allocation10 + $0x300] sm:$0xff]
        %v956 = vld [vmem:[#allocation10 + $0x308] sm:$0xff]
        %v957 = vld [vmem:[#allocation10 + $0x310] sm:$0xff]
        %v958 = vld [vmem:[#allocation10 + $0x318] sm:$0xff]
        %v959 = vld [vmem:[#allocation10 + $0x320] sm:$0xff]
        %v960 = vld [vmem:[#allocation10 + $0x328] sm:$0xff]
        %v961 = vld [vmem:[#allocation10 + $0x330] sm:$0xff]
        %v962 = vld [vmem:[#allocation10 + $0x338] sm:$0xff]
        %v963 = vld [vmem:[#allocation10 + $0x340] sm:$0xff]
        %v964 = vld [vmem:[#allocation10 + $0x348] sm:$0xff]
        %v965 = vld [vmem:[#allocation10 + $0x350] sm:$0xff]
        %v966 = vld [vmem:[#allocation10 + $0x358] sm:$0xff]
        %v967 = vld [vmem:[#allocation10 + $0x360] sm:$0xff]
        %v968 = vld [vmem:[#allocation10 + $0x368] sm:$0xff]
        %v969 = vld [vmem:[#allocation10 + $0x370] sm:$0xff]
        %v970 = vld [vmem:[#allocation10 + $0x378] sm:$0xff]
        %v971 = vld [vmem:[#allocation10 + $0x380] sm:$0xff]
        %v972 = vld [vmem:[#allocation10 + $0x388] sm:$0xff]
        %v973 = vld [vmem:[#allocation10 + $0x390] sm:$0xff]
        %v974 = vld [vmem:[#allocation10 + $0x398] sm:$0xff]
        %v975 = vld [vmem:[#allocation10 + $0x3a0] sm:$0xff]
        %v976 = vld [vmem:[#allocation10 + $0x3a8] sm:$0xff]
        %v977 = vld [vmem:[#allocation10 + $0x3b0] sm:$0xff]
        %v978 = vld [vmem:[#allocation10 + $0x3b8] sm:$0xff]
        %v979 = vld [vmem:[#allocation10 + $0x3c0] sm:$0xff]
        %v980 = vld [vmem:[#allocation10 + $0x3c8] sm:$0xff]
        %v981 = vld [vmem:[#allocation10 + $0x3d0] sm:$0xff]
        %v982 = vld [vmem:[#allocation10 + $0x3d8] sm:$0xff]
        %v983 = vld [vmem:[#allocation10 + $0x3e0] sm:$0xff]
        %v984 = vld [vmem:[#allocation10 + $0x3e8] sm:$0xff]
        %v985 = vld [vmem:[#allocation10 + $0x3f0] sm:$0xff]
        %v986 = vld [vmem:[#allocation10 + $0x3f8] sm:$0xff]
        %v987 = vld [vmem:[#allocation10 + $0x400] sm:$0xff]
        %v988 = vld [vmem:[#allocation10 + $0x408] sm:$0xff]
        %v989 = vld [vmem:[#allocation10 + $0x410] sm:$0xff]
        %v990 = vld [vmem:[#allocation10 + $0x418] sm:$0xff]
        %v991 = vld [vmem:[#allocation10 + $0x420] sm:$0xff]
        %v992 = vld [vmem:[#allocation10 + $0x428] sm:$0xff]
        %v993 = vld [vmem:[#allocation10 + $0x430] sm:$0xff]
        %v994 = vld [vmem:[#allocation10 + $0x438] sm:$0xff]
        %v995 = vld [vmem:[#allocation10 + $0x440] sm:$0xff]
        %v996 = vld [vmem:[#allocation10 + $0x448] sm:$0xff]
        %v997 = vld [vmem:[#allocation10 + $0x450] sm:$0xff]
        %v998 = vld [vmem:[#allocation10 + $0x458] sm:$0xff]
        %v999 = vld [vmem:[#allocation10 + $0x460] sm:$0xff]
        %v1000 = vld [vmem:[#allocation10 + $0x468] sm:$0xff]
        %v1001 = vld [vmem:[#allocation10 + $0x470] sm:$0xff]
        %v1002 = vld [vmem:[#allocation10 + $0x478] sm:$0xff]
        %v1003 = vld [vmem:[#allocation10 + $0x480] sm:$0xff]
        %v1004 = vld [vmem:[#allocation10 + $0x488] sm:$0xff]
        %v1005 = vld [vmem:[#allocation10 + $0x490] sm:$0xff]
        %v1006 = vld [vmem:[#allocation10 + $0x498] sm:$0xff]
        %v1007 = vld [vmem:[#allocation10 + $0x4a0] sm:$0xff]
        %v1008 = vld [vmem:[#allocation10 + $0x4a8] sm:$0xff]
        %v1009 = vld [vmem:[#allocation10 + $0x4b0] sm:$0xff]
        %v1010 = vld [vmem:[#allocation10 + $0x4b8] sm:$0xff]
        %v1011 = vld [vmem:[#allocation10 + $0x4c0] sm:$0xff]
        %v1012 = vld [vmem:[#allocation10 + $0x4c8] sm:$0xff]
        %v1013 = vld [vmem:[#allocation10 + $0x4d0] sm:$0xff]
        %v1014 = vld [vmem:[#allocation10 + $0x4d8] sm:$0xff]
        %v1015 = vld [vmem:[#allocation10 + $0x4e0] sm:$0xff]
        %v1016 = vld [vmem:[#allocation10 + $0x4e8] sm:$0xff]
        %v1017 = vld [vmem:[#allocation10 + $0x4f0] sm:$0xff]
        %v1018 = vld [vmem:[#allocation10 + $0x4f8] sm:$0xff]
        %v1019 = vld [vmem:[#allocation10 + $0x500] sm:$0xff]
        %v1020 = vld [vmem:[#allocation10 + $0x508] sm:$0xff]
        %v1021 = vld [vmem:[#allocation10 + $0x510] sm:$0xff]
        %v1022 = vld [vmem:[#allocation10 + $0x518] sm:$0xff]
        %v1023 = vld [vmem:[#allocation10 + $0x520] sm:$0xff]
        %v1024 = vld [vmem:[#allocation10 + $0x528] sm:$0xff]
        %v1025 = vld [vmem:[#allocation10 + $0x530] sm:$0xff]
        %v1026 = vld [vmem:[#allocation10 + $0x538] sm:$0xff]
        %v1027 = vld [vmem:[#allocation10 + $0x540] sm:$0xff]
        %v1028 = vld [vmem:[#allocation10 + $0x548] sm:$0xff]
        %v1029 = vld [vmem:[#allocation10 + $0x550] sm:$0xff]
        %v1030 = vld [vmem:[#allocation10 + $0x558] sm:$0xff]
        %v1031 = vld [vmem:[#allocation10 + $0x560] sm:$0xff]
        %v1032 = vld [vmem:[#allocation10 + $0x568] sm:$0xff]
        %v1033 = vld [vmem:[#allocation10 + $0x570] sm:$0xff]
        %v1034 = vld [vmem:[#allocation10 + $0x578] sm:$0xff]
        %v1035 = vld [vmem:[#allocation10 + $0x580] sm:$0xff]
        %v1036 = vld [vmem:[#allocation10 + $0x588] sm:$0xff]
        %v1037 = vld [vmem:[#allocation10 + $0x590] sm:$0xff]
        %v1038 = vld [vmem:[#allocation10 + $0x598] sm:$0xff]
        %v1039 = vld [vmem:[#allocation10 + $0x5a0] sm:$0xff]
        %v1040 = vld [vmem:[#allocation10 + $0x5a8] sm:$0xff]
        %v1041 = vld [vmem:[#allocation10 + $0x5b0] sm:$0xff]
        %v1042 = vld [vmem:[#allocation10 + $0x5b8] sm:$0xff]
        %v1043 = vld [vmem:[#allocation10 + $0x5c0] sm:$0xff]
        %v1044 = vld [vmem:[#allocation10 + $0x5c8] sm:$0xff]
        %v1045 = vld [vmem:[#allocation10 + $0x5d0] sm:$0xff]
        %v1046 = vld [vmem:[#allocation10 + $0x5d8] sm:$0xff]
        %v1047 = vld [vmem:[#allocation10 + $0x5e0] sm:$0xff]
        %v1048 = vld [vmem:[#allocation10 + $0x5e8] sm:$0xff]
        %v1049 = vld [vmem:[#allocation10 + $0x5f0] sm:$0xff]
        %v1050 = vld [vmem:[#allocation10 + $0x5f8] sm:$0xff]
        %v1051 = vld [vmem:[#allocation10 + $0x600] sm:$0xff]
        %v1052 = vld [vmem:[#allocation10 + $0x608] sm:$0xff]
        %v1053 = vld [vmem:[#allocation10 + $0x610] sm:$0xff]
        %v1054 = vld [vmem:[#allocation10 + $0x618] sm:$0xff]
        %v1055 = vld [vmem:[#allocation10 + $0x620] sm:$0xff]
        %v1056 = vld [vmem:[#allocation10 + $0x628] sm:$0xff]
        %v1057 = vld [vmem:[#allocation10 + $0x630] sm:$0xff]
        %v1058 = vld [vmem:[#allocation10 + $0x638] sm:$0xff]
        %v1059 = vld [vmem:[#allocation10 + $0x640] sm:$0xff]
        %v1060 = vld [vmem:[#allocation10 + $0x648] sm:$0xff]
        %v1061 = vld [vmem:[#allocation10 + $0x650] sm:$0xff]
        %v1062 = vld [vmem:[#allocation10 + $0x658] sm:$0xff]
        %v1063 = vld [vmem:[#allocation10 + $0x660] sm:$0xff]
        %v1064 = vld [vmem:[#allocation10 + $0x668] sm:$0xff]
        %v1065 = vld [vmem:[#allocation10 + $0x670] sm:$0xff]
        %v1066 = vld [vmem:[#allocation10 + $0x678] sm:$0xff]
        %v1067 = vld [vmem:[#allocation10 + $0x680] sm:$0xff]
        %v1068 = vld [vmem:[#allocation10 + $0x688] sm:$0xff]
        %v1069 = vld [vmem:[#allocation10 + $0x690] sm:$0xff]
        %v1070 = vld [vmem:[#allocation10 + $0x698] sm:$0xff]
        %v1071 = vld [vmem:[#allocation10 + $0x6a0] sm:$0xff]
        %v1072 = vld [vmem:[#allocation10 + $0x6a8] sm:$0xff]
        %v1073 = vld [vmem:[#allocation10 + $0x6b0] sm:$0xff]
        %v1074 = vld [vmem:[#allocation10 + $0x6b8] sm:$0xff]
        %v1075 = vld [vmem:[#allocation10 + $0x6c0] sm:$0xff]
        %v1076 = vld [vmem:[#allocation10 + $0x6c8] sm:$0xff]
        %v1077 = vld [vmem:[#allocation10 + $0x6d0] sm:$0xff]
        %v1078 = vld [vmem:[#allocation10 + $0x6d8] sm:$0xff]
        %v1079 = vld [vmem:[#allocation10 + $0x6e0] sm:$0xff]
        %v1080 = vld [vmem:[#allocation10 + $0x6e8] sm:$0xff]
        %v1081 = vld [vmem:[#allocation10 + $0x6f0] sm:$0xff]
        %v1082 = vld [vmem:[#allocation10 + $0x6f8] sm:$0xff]
        %v1083 = vld [vmem:[#allocation10 + $0x700] sm:$0xff]
        %v1084 = vld [vmem:[#allocation10 + $0x708] sm:$0xff]
        %v1085 = vld [vmem:[#allocation10 + $0x710] sm:$0xff]
        %v1086 = vld [vmem:[#allocation10 + $0x718] sm:$0xff]
        %v1087 = vld [vmem:[#allocation10 + $0x720] sm:$0xff]
        %v1088 = vld [vmem:[#allocation10 + $0x728] sm:$0xff]
        %v1089 = vld [vmem:[#allocation10 + $0x730] sm:$0xff]
        %v1090 = vld [vmem:[#allocation10 + $0x738] sm:$0xff]
        %v1091 = vld [vmem:[#allocation10 + $0x740] sm:$0xff]
        %v1092 = vld [vmem:[#allocation10 + $0x748] sm:$0xff]
        %v1093 = vld [vmem:[#allocation10 + $0x750] sm:$0xff]
        %v1094 = vld [vmem:[#allocation10 + $0x758] sm:$0xff]
        %v1095 = vld [vmem:[#allocation10 + $0x760] sm:$0xff]
        %v1096 = vld [vmem:[#allocation10 + $0x768] sm:$0xff]
        %v1097 = vld [vmem:[#allocation10 + $0x770] sm:$0xff]
        %v1098 = vld [vmem:[#allocation10 + $0x778] sm:$0xff]
        %v1099 = vld [vmem:[#allocation10 + $0x780] sm:$0xff]
        %v1100 = vld [vmem:[#allocation10 + $0x788] sm:$0xff]
        %v1101 = vld [vmem:[#allocation10 + $0x790] sm:$0xff]
        %v1102 = vld [vmem:[#allocation10 + $0x798] sm:$0xff]
        %v1103 = vld [vmem:[#allocation10 + $0x7a0] sm:$0xff]
        %v1104 = vld [vmem:[#allocation10 + $0x7a8] sm:$0xff]
        %v1105 = vld [vmem:[#allocation10 + $0x7b0] sm:$0xff]
        %v1106 = vld [vmem:[#allocation10 + $0x7b8] sm:$0xff]
        %v1107 = vld [vmem:[#allocation10 + $0x7c0] sm:$0xff]
        %v1108 = vld [vmem:[#allocation10 + $0x7c8] sm:$0xff]
        %v1109 = vld [vmem:[#allocation10 + $0x7d0] sm:$0xff]
        %v1110 = vld [vmem:[#allocation10 + $0x7d8] sm:$0xff]
        %v1111 = vld [vmem:[#allocation10 + $0x7e0] sm:$0xff]
        %v1112 = vld [vmem:[#allocation10 + $0x7e8] sm:$0xff]
        %v1113 = vld [vmem:[#allocation10 + $0x7f0] sm:$0xff]
        %v1114 = vld [vmem:[#allocation10 + $0x7f8] sm:$0xff]
        %v1115 = vld [vmem:[#allocation10 + $0x800] sm:$0xff]
        %v1116 = vld [vmem:[#allocation10 + $0x808] sm:$0xff]
        %v1117 = vld [vmem:[#allocation10 + $0x810] sm:$0xff]
        %v1118 = vld [vmem:[#allocation10 + $0x818] sm:$0xff]
        %v1119 = vld [vmem:[#allocation10 + $0x820] sm:$0xff]
        %v1120 = vld [vmem:[#allocation10 + $0x828] sm:$0xff]
        %v1121 = vld [vmem:[#allocation10 + $0x830] sm:$0xff]
        %v1122 = vld [vmem:[#allocation10 + $0x838] sm:$0xff]
        %v1123 = vld [vmem:[#allocation10 + $0x840] sm:$0xff]
        %v1124 = vld [vmem:[#allocation10 + $0x848] sm:$0xff]
        %v1125 = vld [vmem:[#allocation10 + $0x850] sm:$0xff]
        %v1126 = vld [vmem:[#allocation10 + $0x858] sm:$0xff]
        %v1127 = vld [vmem:[#allocation10 + $0x860] sm:$0xff]
        %v1128 = vld [vmem:[#allocation10 + $0x868] sm:$0xff]
        %v1129 = vld [vmem:[#allocation10 + $0x870] sm:$0xff]
        %v1130 = vld [vmem:[#allocation10 + $0x878] sm:$0xff]
        %v1131 = vld [vmem:[#allocation10 + $0x880] sm:$0xff]
        %v1132 = vld [vmem:[#allocation10 + $0x888] sm:$0xff]
        %v1133 = vld [vmem:[#allocation10 + $0x890] sm:$0xff]
        %v1134 = vld [vmem:[#allocation10 + $0x898] sm:$0xff]
        %v1135 = vld [vmem:[#allocation10 + $0x8a0] sm:$0xff]
        %v1136 = vld [vmem:[#allocation10 + $0x8a8] sm:$0xff]
        %v1137 = vld [vmem:[#allocation10 + $0x8b0] sm:$0xff]
        %v1138 = vld [vmem:[#allocation10 + $0x8b8] sm:$0xff]
        %v1139 = vld [vmem:[#allocation10 + $0x8c0] sm:$0xff]
        %v1140 = vld [vmem:[#allocation10 + $0x8c8] sm:$0xff]
        %v1141 = vld [vmem:[#allocation10 + $0x8d0] sm:$0xff]
        %v1142 = vld [vmem:[#allocation10 + $0x8d8] sm:$0xff]
        %v1143 = vld [vmem:[#allocation10 + $0x8e0] sm:$0xff]
        %v1144 = vld [vmem:[#allocation10 + $0x8e8] sm:$0xff]
        %v1145 = vld [vmem:[#allocation10 + $0x8f0] sm:$0xff]
        %v1146 = vld [vmem:[#allocation10 + $0x8f8] sm:$0xff]
        %v1147 = vld [vmem:[#allocation10 + $0x900] sm:$0xff]
        %v1148 = vld [vmem:[#allocation10 + $0x908] sm:$0xff]
        %v1149 = vld [vmem:[#allocation10 + $0x910] sm:$0xff]
        %v1150 = vld [vmem:[#allocation10 + $0x918] sm:$0xff]
        %v1151 = vld [vmem:[#allocation10 + $0x920] sm:$0xff]
        %v1152 = vld [vmem:[#allocation10 + $0x928] sm:$0xff]
        %v1153 = vld [vmem:[#allocation10 + $0x930] sm:$0xff]
        %v1154 = vld [vmem:[#allocation10 + $0x938] sm:$0xff]
        %v1155 = vld [vmem:[#allocation10 + $0x940] sm:$0xff]
        %v1156 = vld [vmem:[#allocation10 + $0x948] sm:$0xff]
        %v1157 = vld [vmem:[#allocation10 + $0x950] sm:$0xff]
        %v1158 = vld [vmem:[#allocation10 + $0x958] sm:$0xff]
        %v1159 = vld [vmem:[#allocation10 + $0x960] sm:$0xff]
        %v1160 = vld [vmem:[#allocation10 + $0x968] sm:$0xff]
        %v1161 = vld [vmem:[#allocation10 + $0x970] sm:$0xff]
        %v1162 = vld [vmem:[#allocation10 + $0x978] sm:$0xff]
        %v1163 = vld [vmem:[#allocation10 + $0x980] sm:$0xff]
        %v1164 = vld [vmem:[#allocation10 + $0x988] sm:$0xff]
        %v1165 = vld [vmem:[#allocation10 + $0x990] sm:$0xff]
        %v1166 = vld [vmem:[#allocation10 + $0x998] sm:$0xff]
        %v1167 = vld [vmem:[#allocation10 + $0x9a0] sm:$0xff]
        %v1168 = vld [vmem:[#allocation10 + $0x9a8] sm:$0xff]
        %v1169 = vld [vmem:[#allocation10 + $0x9b0] sm:$0xff]
        %v1170 = vld [vmem:[#allocation10 + $0x9b8] sm:$0xff]
        %v1171 = vld [vmem:[#allocation10 + $0x9c0] sm:$0xff]
        %v1172 = vld [vmem:[#allocation10 + $0x9c8] sm:$0xff]
        %v1173 = vld [vmem:[#allocation10 + $0x9d0] sm:$0xff]
        %v1174 = vld [vmem:[#allocation10 + $0x9d8] sm:$0xff]
        %v1175 = vld [vmem:[#allocation10 + $0x9e0] sm:$0xff]
        %v1176 = vld [vmem:[#allocation10 + $0x9e8] sm:$0xff]
        %v1177 = vld [vmem:[#allocation10 + $0x9f0] sm:$0xff]
        %v1178 = vld [vmem:[#allocation10 + $0x9f8] sm:$0xff]
        %v1179 = vld [vmem:[#allocation10 + $0xa00] sm:$0xff]
        %v1180 = vld [vmem:[#allocation10 + $0xa08] sm:$0xff]
        %v1181 = vld [vmem:[#allocation10 + $0xa10] sm:$0xff]
        %v1182 = vld [vmem:[#allocation10 + $0xa18] sm:$0xff]
        %v1183 = vld [vmem:[#allocation10 + $0xa20] sm:$0xff]
        %v1184 = vld [vmem:[#allocation10 + $0xa28] sm:$0xff]
        %v1185 = vld [vmem:[#allocation10 + $0xa30] sm:$0xff]
        %v1186 = vld [vmem:[#allocation10 + $0xa38] sm:$0xff]
        %v1187 = vld [vmem:[#allocation10 + $0xa40] sm:$0xff]
        %v1188 = vld [vmem:[#allocation10 + $0xa48] sm:$0xff]
        %v1189 = vld [vmem:[#allocation10 + $0xa50] sm:$0xff]
        %v1190 = vld [vmem:[#allocation10 + $0xa58] sm:$0xff]
        %v1191 = vld [vmem:[#allocation10 + $0xa60] sm:$0xff]
        %v1192 = vld [vmem:[#allocation10 + $0xa68] sm:$0xff]
        %v1193 = vld [vmem:[#allocation10 + $0xa70] sm:$0xff]
        %v1194 = vld [vmem:[#allocation10 + $0xa78] sm:$0xff]
        %v1195 = vld [vmem:[#allocation10 + $0xa80] sm:$0xff]
        %v1196 = vld [vmem:[#allocation10 + $0xa88] sm:$0xff]
        %v1197 = vld [vmem:[#allocation10 + $0xa90] sm:$0xff]
        %v1198 = vld [vmem:[#allocation10 + $0xa98] sm:$0xff]
        %v1199 = vld [vmem:[#allocation10 + $0xaa0] sm:$0xff]
        %v1200 = vld [vmem:[#allocation10 + $0xaa8] sm:$0xff]
        %v1201 = vld [vmem:[#allocation10 + $0xab0] sm:$0xff]
        %v1202 = vld [vmem:[#allocation10 + $0xab8] sm:$0xff]
        %v1203 = vld [vmem:[#allocation10 + $0xac0] sm:$0xff]
        %v1204 = vld [vmem:[#allocation10 + $0xac8] sm:$0xff]
        %v1205 = vld [vmem:[#allocation10 + $0xad0] sm:$0xff]
        %v1206 = vld [vmem:[#allocation10 + $0xad8] sm:$0xff]
        %v1207 = vld [vmem:[#allocation10 + $0xae0] sm:$0xff]
        %v1208 = vld [vmem:[#allocation10 + $0xae8] sm:$0xff]
        %v1209 = vld [vmem:[#allocation10 + $0xaf0] sm:$0xff]
        %v1210 = vld [vmem:[#allocation10 + $0xaf8] sm:$0xff]
        %v1211 = vld [vmem:[#allocation10 + $0xb00] sm:$0xff]
        %v1212 = vld [vmem:[#allocation10 + $0xb08] sm:$0xff]
        %v1213 = vld [vmem:[#allocation10 + $0xb10] sm:$0xff]
        %v1214 = vld [vmem:[#allocation10 + $0xb18] sm:$0xff]
        %v1215 = vld [vmem:[#allocation10 + $0xb20] sm:$0xff]
        %v1216 = vld [vmem:[#allocation10 + $0xb28] sm:$0xff]
        %v1217 = vld [vmem:[#allocation10 + $0xb30] sm:$0xff]
        %v1218 = vld [vmem:[#allocation10 + $0xb38] sm:$0xff]
        %v1219 = vld [vmem:[#allocation10 + $0xb40] sm:$0xff]
        %v1220 = vld [vmem:[#allocation10 + $0xb48] sm:$0xff]
        %v1221 = vld [vmem:[#allocation10 + $0xb50] sm:$0xff]
        %v1222 = vld [vmem:[#allocation10 + $0xb58] sm:$0xff]
        %v1223 = vld [vmem:[#allocation10 + $0xb60] sm:$0xff]
        %v1224 = vld [vmem:[#allocation10 + $0xb68] sm:$0xff]
        %v1225 = vld [vmem:[#allocation10 + $0xb70] sm:$0xff]
        %v1226 = vld [vmem:[#allocation10 + $0xb78] sm:$0xff]
        %v1227 = vld [vmem:[#allocation10 + $0xb80] sm:$0xff]
        %v1228 = vld [vmem:[#allocation10 + $0xb88] sm:$0xff]
        %v1229 = vld [vmem:[#allocation10 + $0xb90] sm:$0xff]
        %v1230 = vld [vmem:[#allocation10 + $0xb98] sm:$0xff]
        %v1231 = vld [vmem:[#allocation10 + $0xba0] sm:$0xff]
        %v1232 = vld [vmem:[#allocation10 + $0xba8] sm:$0xff]
        %v1233 = vld [vmem:[#allocation10 + $0xbb0] sm:$0xff]
        %v1234 = vld [vmem:[#allocation10 + $0xbb8] sm:$0xff]
        %v1235 = vld [vmem:[#allocation10 + $0xbc0] sm:$0xff]
        %v1236 = vld [vmem:[#allocation10 + $0xbc8] sm:$0xff]
        %v1237 = vld [vmem:[#allocation10 + $0xbd0] sm:$0xff]
        %v1238 = vld [vmem:[#allocation10 + $0xbd8] sm:$0xff]
        %v1239 = vld [vmem:[#allocation10 + $0xbe0] sm:$0xff]
        %v1240 = vld [vmem:[#allocation10 + $0xbe8] sm:$0xff]
        %v1241 = vld [vmem:[#allocation10 + $0xbf0] sm:$0xff]
        %v1242 = vld [vmem:[#allocation10 + $0xbf8] sm:$0xff]
        %v1243 = vld [vmem:[#allocation10 + $0xc00] sm:$0xff]
        %v1244 = vld [vmem:[#allocation10 + $0xc08] sm:$0xff]
        %v1245 = vld [vmem:[#allocation10 + $0xc10] sm:$0xff]
        %v1246 = vld [vmem:[#allocation10 + $0xc18] sm:$0xff]
        %v1247 = vld [vmem:[#allocation10 + $0xc20] sm:$0xff]
        %v1248 = vld [vmem:[#allocation10 + $0xc28] sm:$0xff]
        %v1249 = vld [vmem:[#allocation10 + $0xc30] sm:$0xff]
        %v1250 = vld [vmem:[#allocation10 + $0xc38] sm:$0xff]
        %v1251 = vld [vmem:[#allocation10 + $0xc40] sm:$0xff]
        %v1252 = vld [vmem:[#allocation10 + $0xc48] sm:$0xff]
        %v1253 = vld [vmem:[#allocation10 + $0xc50] sm:$0xff]
        %v1254 = vld [vmem:[#allocation10 + $0xc58] sm:$0xff]
        %v1255 = vld [vmem:[#allocation10 + $0xc60] sm:$0xff]
        %v1256 = vld [vmem:[#allocation10 + $0xc68] sm:$0xff]
        %v1257 = vld [vmem:[#allocation10 + $0xc70] sm:$0xff]
        %v1258 = vld [vmem:[#allocation10 + $0xc78] sm:$0xff]
        %v1259 = vld [vmem:[#allocation10 + $0xc80] sm:$0xff]
        %v1260 = vld [vmem:[#allocation10 + $0xc88] sm:$0xff]
        %v1261 = vld [vmem:[#allocation10 + $0xc90] sm:$0xff]
        %v1262 = vld [vmem:[#allocation10 + $0xc98] sm:$0xff]
        %v1263 = vld [vmem:[#allocation10 + $0xca0] sm:$0xff]
        %v1264 = vld [vmem:[#allocation10 + $0xca8] sm:$0xff]
        %v1265 = vld [vmem:[#allocation10 + $0xcb0] sm:$0xff]
        %v1266 = vld [vmem:[#allocation10 + $0xcb8] sm:$0xff]
        %v1267 = vld [vmem:[#allocation10 + $0xcc0] sm:$0xff]
        %v1268 = vld [vmem:[#allocation10 + $0xcc8] sm:$0xff]
        %v1269 = vld [vmem:[#allocation10 + $0xcd0] sm:$0xff]
        %v1270 = vld [vmem:[#allocation10 + $0xcd8] sm:$0xff]
        %v1271 = vld [vmem:[#allocation10 + $0xce0] sm:$0xff]
        %v1272 = vld [vmem:[#allocation10 + $0xce8] sm:$0xff]
        %v1273 = vld [vmem:[#allocation10 + $0xcf0] sm:$0xff]
        %v1274 = vld [vmem:[#allocation10 + $0xcf8] sm:$0xff]
        %v1275 = vld [vmem:[#allocation10 + $0xd00] sm:$0xff]
        %v1276 = vld [vmem:[#allocation10 + $0xd08] sm:$0xff]
        %v1277 = vld [vmem:[#allocation10 + $0xd10] sm:$0xff]
        %v1278 = vld [vmem:[#allocation10 + $0xd18] sm:$0xff]
        %v1279 = vld [vmem:[#allocation10 + $0xd20] sm:$0xff]
        %v1280 = vld [vmem:[#allocation10 + $0xd28] sm:$0xff]
        %v1281 = vld [vmem:[#allocation10 + $0xd30] sm:$0xff]
        %v1282 = vld [vmem:[#allocation10 + $0xd38] sm:$0xff]
        %v1283 = vld [vmem:[#allocation10 + $0xd40] sm:$0xff]
        %v1284 = vld [vmem:[#allocation10 + $0xd48] sm:$0xff]
        %v1285 = vld [vmem:[#allocation10 + $0xd50] sm:$0xff]
        %v1286 = vld [vmem:[#allocation10 + $0xd58] sm:$0xff]
        %v1287 = vld [vmem:[#allocation10 + $0xd60] sm:$0xff]
        %v1288 = vld [vmem:[#allocation10 + $0xd68] sm:$0xff]
        %v1289 = vld [vmem:[#allocation10 + $0xd70] sm:$0xff]
        %v1290 = vld [vmem:[#allocation10 + $0xd78] sm:$0xff]
        %v1291 = vld [vmem:[#allocation10 + $0xd80] sm:$0xff]
        %v1292 = vld [vmem:[#allocation10 + $0xd88] sm:$0xff]
        %v1293 = vld [vmem:[#allocation10 + $0xd90] sm:$0xff]
        %v1294 = vld [vmem:[#allocation10 + $0xd98] sm:$0xff]
        %v1295 = vld [vmem:[#allocation10 + $0xda0] sm:$0xff]
        %v1296 = vld [vmem:[#allocation10 + $0xda8] sm:$0xff]
        %v1297 = vld [vmem:[#allocation10 + $0xdb0] sm:$0xff]
        %v1298 = vld [vmem:[#allocation10 + $0xdb8] sm:$0xff]
        %v1299 = vld [vmem:[#allocation10 + $0xdc0] sm:$0xff]
        %v1300 = vld [vmem:[#allocation10 + $0xdc8] sm:$0xff]
        %v1301 = vld [vmem:[#allocation10 + $0xdd0] sm:$0xff]
        %v1302 = vld [vmem:[#allocation10 + $0xdd8] sm:$0xff]
        %v1303 = vld [vmem:[#allocation10 + $0xde0] sm:$0xff]
        %v1304 = vld [vmem:[#allocation10 + $0xde8] sm:$0xff]
        %v1305 = vld [vmem:[#allocation10 + $0xdf0] sm:$0xff]
        %v1306 = vld [vmem:[#allocation10 + $0xdf8] sm:$0xff]
        %v1307 = vld [vmem:[#allocation10 + $0xe00] sm:$0xff]
        %v1308 = vld [vmem:[#allocation10 + $0xe08] sm:$0xff]
        %vm1309 = vcmask 719872
        %v1311 = vsel %vm1309, %v858, 0
        %1313 = vmatpush.msra.mxu0 %v949
        %1314 = vmatpush.msra.mxu0 %v943
        %1315 = vmatpush.msra.mxu0 %v937
        %1316 = vmatpush.msra.mxu0 %v931
        %1317 = vmatpush.msra.mxu0 %v925
        %1318 = vmatpush.msra.mxu0 %v919
        %1319 = vmatpush.msra.mxu0 %v913
        %1320 = vmatpush.msra.mxu0 %v907
        %1321 = vmatpush.msra.mxu0 %v901
        %1322 = vmatpush.msra.mxu0 %v895
        %1323 = vmatpush.msra.mxu0 %v889
        %1324 = vmatpush.msra.mxu0 %v883
        %1325 = vmatpush.msra.mxu0 %v877
        %1326 = vmatpush.msra.mxu0 %v871
        %1327 = vmatpush.msra.mxu0 %v865
        %1328 = vmatpush.msra.mxu0 %v859
        %1329 = vmatmul.f32.gmra.mxu0 %v854
        %v1330 = vpop.f32.mrf.mxu0
        %v1331 = vadd.f32 0.0, %v1330
        %1332 = vdwg.mxu0
        %1333 = vmatpush.msra.mxu0 %v1045
        %1334 = vmatpush.msra.mxu0 %v1039
        %1335 = vmatpush.msra.mxu0 %v1033
        %1336 = vmatpush.msra.mxu0 %v1027
        %1337 = vmatpush.msra.mxu0 %v1021
        %1338 = vmatpush.msra.mxu0 %v1015
        %1339 = vmatpush.msra.mxu0 %v1009
        %1340 = vmatpush.msra.mxu0 %v1003
        %1341 = vmatpush.msra.mxu0 %v997
        %1342 = vmatpush.msra.mxu0 %v991
        %1343 = vmatpush.msra.mxu0 %v985
        %1344 = vmatpush.msra.mxu0 %v979
        %1345 = vmatpush.msra.mxu0 %v973
        %1346 = vmatpush.msra.mxu0 %v967
        %1347 = vmatpush.msra.mxu0 %v961
        %1348 = vmatpush.msra.mxu0 %v955
        %1349 = vmatmul.f32.gmra.mxu0 %v855
        %v1350 = vpop.f32.mrf.mxu0
        %v1351 = vadd.f32 %v1331, %v1350
        %1352 = vdwg.mxu0
        %1353 = vmatpush.msra.mxu0 %v1141
        %1354 = vmatpush.msra.mxu0 %v1135
        %1355 = vmatpush.msra.mxu0 %v1129
        %1356 = vmatpush.msra.mxu0 %v1123
        %1357 = vmatpush.msra.mxu0 %v1117
        %1358 = vmatpush.msra.mxu0 %v1111
        %1359 = vmatpush.msra.mxu0 %v1105
        %1360 = vmatpush.msra.mxu0 %v1099
        %1361 = vmatpush.msra.mxu0 %v1093
        %1362 = vmatpush.msra.mxu0 %v1087
        %1363 = vmatpush.msra.mxu0 %v1081
        %1364 = vmatpush.msra.mxu0 %v1075
        %1365 = vmatpush.msra.mxu0 %v1069
        %1366 = vmatpush.msra.mxu0 %v1063
        %1367 = vmatpush.msra.mxu0 %v1057
        %1368 = vmatpush.msra.mxu0 %v1051
        %1369 = vmatmul.f32.gmra.mxu0 %v856
        %v1370 = vpop.f32.mrf.mxu0
        %v1371 = vadd.f32 %v1351, %v1370
        %1372 = vdwg.mxu0
        %1373 = vmatpush.msra.mxu0 %v1237
        %1374 = vmatpush.msra.mxu0 %v1231
        %1375 = vmatpush.msra.mxu0 %v1225
        %1376 = vmatpush.msra.mxu0 %v1219
        %1377 = vmatpush.msra.mxu0 %v1213
        %1378 = vmatpush.msra.mxu0 %v1207
        %1379 = vmatpush.msra.mxu0 %v1201
        %1380 = vmatpush.msra.mxu0 %v1195
        %1381 = vmatpush.msra.mxu0 %v1189
        %1382 = vmatpush.msra.mxu0 %v1183
        %1383 = vmatpush.msra.mxu0 %v1177
        %1384 = vmatpush.msra.mxu0 %v1171
        %1385 = vmatpush.msra.mxu0 %v1165
        %1386 = vmatpush.msra.mxu0 %v1159
        %1387 = vmatpush.msra.mxu0 %v1153
        %1388 = vmatpush.msra.mxu0 %v1147
        %1389 = vmatmul.f32.gmra.mxu0 %v857
        %v1390 = vpop.f32.mrf.mxu0
        %v1391 = vadd.f32 %v1371, %v1390
        %1392 = vdwg.mxu0
        %1393 = vmatpush.msra.mxu0 0.0
        %1394 = vmatpush.msra.mxu0 0.0
        %1395 = vmatpush.msra.mxu0 0.0
        %1396 = vmatpush.msra.mxu0 0.0
        %1397 = vmatpush.msra.mxu0 0.0
        %1398 = vmatpush.msra.mxu0 %v1303
        %1399 = vmatpush.msra.mxu0 %v1297
        %1400 = vmatpush.msra.mxu0 %v1291
        %1401 = vmatpush.msra.mxu0 %v1285
        %1402 = vmatpush.msra.mxu0 %v1279
        %1403 = vmatpush.msra.mxu0 %v1273
        %1404 = vmatpush.msra.mxu0 %v1267
        %1405 = vmatpush.msra.mxu0 %v1261
        %1406 = vmatpush.msra.mxu0 %v1255
        %1407 = vmatpush.msra.mxu0 %v1249
        %1408 = vmatpush.msra.mxu0 %v1243
        %1409 = vmatmul.f32.gmra.mxu0 %v1311
        %v1410 = vpop.f32.mrf.mxu0
        %v1411 = vadd.f32 %v1391, %v1410
        %1412 = vdwg.mxu0
        %1413 = vmatpush.msra.mxu0 %v950
        %1414 = vmatpush.msra.mxu0 %v944
        %1415 = vmatpush.msra.mxu0 %v938
        %1416 = vmatpush.msra.mxu0 %v932
        %1417 = vmatpush.msra.mxu0 %v926
        %1418 = vmatpush.msra.mxu0 %v920
        %1419 = vmatpush.msra.mxu0 %v914
        %1420 = vmatpush.msra.mxu0 %v908
        %1421 = vmatpush.msra.mxu0 %v902
        %1422 = vmatpush.msra.mxu0 %v896
        %1423 = vmatpush.msra.mxu0 %v890
        %1424 = vmatpush.msra.mxu0 %v884
        %1425 = vmatpush.msra.mxu0 %v878
        %1426 = vmatpush.msra.mxu0 %v872
        %1427 = vmatpush.msra.mxu0 %v866
        %1428 = vmatpush.msra.mxu0 %v860
        %1429 = vmatmul.f32.gmra.mxu0 %v854
        %v1430 = vpop.f32.mrf.mxu0
        %v1431 = vadd.f32 0.0, %v1430
        %1432 = vdwg.mxu0
        %1433 = vmatpush.msra.mxu0 %v1046
        %1434 = vmatpush.msra.mxu0 %v1040
        %1435 = vmatpush.msra.mxu0 %v1034
        %1436 = vmatpush.msra.mxu0 %v1028
        %1437 = vmatpush.msra.mxu0 %v1022
        %1438 = vmatpush.msra.mxu0 %v1016
        %1439 = vmatpush.msra.mxu0 %v1010
        %1440 = vmatpush.msra.mxu0 %v1004
        %1441 = vmatpush.msra.mxu0 %v998
        %1442 = vmatpush.msra.mxu0 %v992
        %1443 = vmatpush.msra.mxu0 %v986
        %1444 = vmatpush.msra.mxu0 %v980
        %1445 = vmatpush.msra.mxu0 %v974
        %1446 = vmatpush.msra.mxu0 %v968
        %1447 = vmatpush.msra.mxu0 %v962
        %1448 = vmatpush.msra.mxu0 %v956
        %1449 = vmatmul.f32.gmra.mxu0 %v855
        %v1450 = vpop.f32.mrf.mxu0
        %v1451 = vadd.f32 %v1431, %v1450
        %1452 = vdwg.mxu0
        %1453 = vmatpush.msra.mxu0 %v1142
        %1454 = vmatpush.msra.mxu0 %v1136
        %1455 = vmatpush.msra.mxu0 %v1130
        %1456 = vmatpush.msra.mxu0 %v1124
        %1457 = vmatpush.msra.mxu0 %v1118
        %1458 = vmatpush.msra.mxu0 %v1112
        %1459 = vmatpush.msra.mxu0 %v1106
        %1460 = vmatpush.msra.mxu0 %v1100
        %1461 = vmatpush.msra.mxu0 %v1094
        %1462 = vmatpush.msra.mxu0 %v1088
        %1463 = vmatpush.msra.mxu0 %v1082
        %1464 = vmatpush.msra.mxu0 %v1076
        %1465 = vmatpush.msra.mxu0 %v1070
        %1466 = vmatpush.msra.mxu0 %v1064
        %1467 = vmatpush.msra.mxu0 %v1058
        %1468 = vmatpush.msra.mxu0 %v1052
        %1469 = vmatmul.f32.gmra.mxu0 %v856
        %v1470 = vpop.f32.mrf.mxu0
        %v1471 = vadd.f32 %v1451, %v1470
        %1472 = vdwg.mxu0
        %1473 = vmatpush.msra.mxu0 %v1238
        %1474 = vmatpush.msra.mxu0 %v1232
        %1475 = vmatpush.msra.mxu0 %v1226
        %1476 = vmatpush.msra.mxu0 %v1220
        %1477 = vmatpush.msra.mxu0 %v1214
        %1478 = vmatpush.msra.mxu0 %v1208
        %1479 = vmatpush.msra.mxu0 %v1202
        %1480 = vmatpush.msra.mxu0 %v1196
        %1481 = vmatpush.msra.mxu0 %v1190
        %1482 = vmatpush.msra.mxu0 %v1184
        %1483 = vmatpush.msra.mxu0 %v1178
        %1484 = vmatpush.msra.mxu0 %v1172
        %1485 = vmatpush.msra.mxu0 %v1166
        %1486 = vmatpush.msra.mxu0 %v1160
        %1487 = vmatpush.msra.mxu0 %v1154
        %1488 = vmatpush.msra.mxu0 %v1148
        %1489 = vmatmul.f32.gmra.mxu0 %v857
        %v1490 = vpop.f32.mrf.mxu0
        %v1491 = vadd.f32 %v1471, %v1490
        %1492 = vdwg.mxu0
        %1493 = vmatpush.msra.mxu0 0.0
        %1494 = vmatpush.msra.mxu0 0.0
        %1495 = vmatpush.msra.mxu0 0.0
        %1496 = vmatpush.msra.mxu0 0.0
        %1497 = vmatpush.msra.mxu0 0.0
        %1498 = vmatpush.msra.mxu0 %v1304
        %1499 = vmatpush.msra.mxu0 %v1298
        %1500 = vmatpush.msra.mxu0 %v1292
        %1501 = vmatpush.msra.mxu0 %v1286
        %1502 = vmatpush.msra.mxu0 %v1280
        %1503 = vmatpush.msra.mxu0 %v1274
        %1504 = vmatpush.msra.mxu0 %v1268
        %1505 = vmatpush.msra.mxu0 %v1262
        %1506 = vmatpush.msra.mxu0 %v1256
        %1507 = vmatpush.msra.mxu0 %v1250
        %1508 = vmatpush.msra.mxu0 %v1244
        %1509 = vmatmul.f32.gmra.mxu0 %v1311
        %v1510 = vpop.f32.mrf.mxu0
        %v1511 = vadd.f32 %v1491, %v1510
        %1512 = vdwg.mxu0
        %1513 = vmatpush.msra.mxu0 %v951
        %1514 = vmatpush.msra.mxu0 %v945
        %1515 = vmatpush.msra.mxu0 %v939
        %1516 = vmatpush.msra.mxu0 %v933
        %1517 = vmatpush.msra.mxu0 %v927
        %1518 = vmatpush.msra.mxu0 %v921
        %1519 = vmatpush.msra.mxu0 %v915
        %1520 = vmatpush.msra.mxu0 %v909
        %1521 = vmatpush.msra.mxu0 %v903
        %1522 = vmatpush.msra.mxu0 %v897
        %1523 = vmatpush.msra.mxu0 %v891
        %1524 = vmatpush.msra.mxu0 %v885
        %1525 = vmatpush.msra.mxu0 %v879
        %1526 = vmatpush.msra.mxu0 %v873
        %1527 = vmatpush.msra.mxu0 %v867
        %1528 = vmatpush.msra.mxu0 %v861
        %1529 = vmatmul.f32.gmra.mxu0 %v854
        %v1530 = vpop.f32.mrf.mxu0
        %v1531 = vadd.f32 0.0, %v1530
        %1532 = vdwg.mxu0
        %1533 = vmatpush.msra.mxu0 %v1047
        %1534 = vmatpush.msra.mxu0 %v1041
        %1535 = vmatpush.msra.mxu0 %v1035
        %1536 = vmatpush.msra.mxu0 %v1029
        %1537 = vmatpush.msra.mxu0 %v1023
        %1538 = vmatpush.msra.mxu0 %v1017
        %1539 = vmatpush.msra.mxu0 %v1011
        %1540 = vmatpush.msra.mxu0 %v1005
        %1541 = vmatpush.msra.mxu0 %v999
        %1542 = vmatpush.msra.mxu0 %v993
        %1543 = vmatpush.msra.mxu0 %v987
        %1544 = vmatpush.msra.mxu0 %v981
        %1545 = vmatpush.msra.mxu0 %v975
        %1546 = vmatpush.msra.mxu0 %v969
        %1547 = vmatpush.msra.mxu0 %v963
        %1548 = vmatpush.msra.mxu0 %v957
        %1549 = vmatmul.f32.gmra.mxu0 %v855
        %v1550 = vpop.f32.mrf.mxu0
        %v1551 = vadd.f32 %v1531, %v1550
        %1552 = vdwg.mxu0
        %1553 = vmatpush.msra.mxu0 %v1143
        %1554 = vmatpush.msra.mxu0 %v1137
        %1555 = vmatpush.msra.mxu0 %v1131
        %1556 = vmatpush.msra.mxu0 %v1125
        %1557 = vmatpush.msra.mxu0 %v1119
        %1558 = vmatpush.msra.mxu0 %v1113
        %1559 = vmatpush.msra.mxu0 %v1107
        %1560 = vmatpush.msra.mxu0 %v1101
        %1561 = vmatpush.msra.mxu0 %v1095
        %1562 = vmatpush.msra.mxu0 %v1089
        %1563 = vmatpush.msra.mxu0 %v1083
        %1564 = vmatpush.msra.mxu0 %v1077
        %1565 = vmatpush.msra.mxu0 %v1071
        %1566 = vmatpush.msra.mxu0 %v1065
        %1567 = vmatpush.msra.mxu0 %v1059
        %1568 = vmatpush.msra.mxu0 %v1053
        %1569 = vmatmul.f32.gmra.mxu0 %v856
        %v1570 = vpop.f32.mrf.mxu0
        %v1571 = vadd.f32 %v1551, %v1570
        %1572 = vdwg.mxu0
        %1573 = vmatpush.msra.mxu0 %v1239
        %1574 = vmatpush.msra.mxu0 %v1233
        %1575 = vmatpush.msra.mxu0 %v1227
        %1576 = vmatpush.msra.mxu0 %v1221
        %1577 = vmatpush.msra.mxu0 %v1215
        %1578 = vmatpush.msra.mxu0 %v1209
        %1579 = vmatpush.msra.mxu0 %v1203
        %1580 = vmatpush.msra.mxu0 %v1197
        %1581 = vmatpush.msra.mxu0 %v1191
        %1582 = vmatpush.msra.mxu0 %v1185
        %1583 = vmatpush.msra.mxu0 %v1179
        %1584 = vmatpush.msra.mxu0 %v1173
        %1585 = vmatpush.msra.mxu0 %v1167
        %1586 = vmatpush.msra.mxu0 %v1161
        %1587 = vmatpush.msra.mxu0 %v1155
        %1588 = vmatpush.msra.mxu0 %v1149
        %1589 = vmatmul.f32.gmra.mxu0 %v857
        %v1590 = vpop.f32.mrf.mxu0
        %v1591 = vadd.f32 %v1571, %v1590
        %1592 = vdwg.mxu0
        %1593 = vmatpush.msra.mxu0 0.0
        %1594 = vmatpush.msra.mxu0 0.0
        %1595 = vmatpush.msra.mxu0 0.0
        %1596 = vmatpush.msra.mxu0 0.0
        %1597 = vmatpush.msra.mxu0 0.0
        %1598 = vmatpush.msra.mxu0 %v1305
        %1599 = vmatpush.msra.mxu0 %v1299
        %1600 = vmatpush.msra.mxu0 %v1293
        %1601 = vmatpush.msra.mxu0 %v1287
        %1602 = vmatpush.msra.mxu0 %v1281
        %1603 = vmatpush.msra.mxu0 %v1275
        %1604 = vmatpush.msra.mxu0 %v1269
        %1605 = vmatpush.msra.mxu0 %v1263
        %1606 = vmatpush.msra.mxu0 %v1257
        %1607 = vmatpush.msra.mxu0 %v1251
        %1608 = vmatpush.msra.mxu0 %v1245
        %1609 = vmatmul.f32.gmra.mxu0 %v1311
        %v1610 = vpop.f32.mrf.mxu0
        %v1611 = vadd.f32 %v1591, %v1610
        %1612 = vdwg.mxu0
        %1613 = vmatpush.msra.mxu0 %v952
        %1614 = vmatpush.msra.mxu0 %v946
        %1615 = vmatpush.msra.mxu0 %v940
        %1616 = vmatpush.msra.mxu0 %v934
        %1617 = vmatpush.msra.mxu0 %v928
        %1618 = vmatpush.msra.mxu0 %v922
        %1619 = vmatpush.msra.mxu0 %v916
        %1620 = vmatpush.msra.mxu0 %v910
        %1621 = vmatpush.msra.mxu0 %v904
        %1622 = vmatpush.msra.mxu0 %v898
        %1623 = vmatpush.msra.mxu0 %v892
        %1624 = vmatpush.msra.mxu0 %v886
        %1625 = vmatpush.msra.mxu0 %v880
        %1626 = vmatpush.msra.mxu0 %v874
        %1627 = vmatpush.msra.mxu0 %v868
        %1628 = vmatpush.msra.mxu0 %v862
        %1629 = vmatmul.f32.gmra.mxu0 %v854
        %v1630 = vpop.f32.mrf.mxu0
        %v1631 = vadd.f32 0.0, %v1630
        %1632 = vdwg.mxu0
        %1633 = vmatpush.msra.mxu0 %v1048
        %1634 = vmatpush.msra.mxu0 %v1042
        %1635 = vmatpush.msra.mxu0 %v1036
        %1636 = vmatpush.msra.mxu0 %v1030
        %1637 = vmatpush.msra.mxu0 %v1024
        %1638 = vmatpush.msra.mxu0 %v1018
        %1639 = vmatpush.msra.mxu0 %v1012
        %1640 = vmatpush.msra.mxu0 %v1006
        %1641 = vmatpush.msra.mxu0 %v1000
        %1642 = vmatpush.msra.mxu0 %v994
        %1643 = vmatpush.msra.mxu0 %v988
        %1644 = vmatpush.msra.mxu0 %v982
        %1645 = vmatpush.msra.mxu0 %v976
        %1646 = vmatpush.msra.mxu0 %v970
        %1647 = vmatpush.msra.mxu0 %v964
        %1648 = vmatpush.msra.mxu0 %v958
        %1649 = vmatmul.f32.gmra.mxu0 %v855
        %v1650 = vpop.f32.mrf.mxu0
        %v1651 = vadd.f32 %v1631, %v1650
        %1652 = vdwg.mxu0
        %1653 = vmatpush.msra.mxu0 %v1144
        %1654 = vmatpush.msra.mxu0 %v1138
        %1655 = vmatpush.msra.mxu0 %v1132
        %1656 = vmatpush.msra.mxu0 %v1126
        %1657 = vmatpush.msra.mxu0 %v1120
        %1658 = vmatpush.msra.mxu0 %v1114
        %1659 = vmatpush.msra.mxu0 %v1108
        %1660 = vmatpush.msra.mxu0 %v1102
        %1661 = vmatpush.msra.mxu0 %v1096
        %1662 = vmatpush.msra.mxu0 %v1090
        %1663 = vmatpush.msra.mxu0 %v1084
        %1664 = vmatpush.msra.mxu0 %v1078
        %1665 = vmatpush.msra.mxu0 %v1072
        %1666 = vmatpush.msra.mxu0 %v1066
        %1667 = vmatpush.msra.mxu0 %v1060
        %1668 = vmatpush.msra.mxu0 %v1054
        %1669 = vmatmul.f32.gmra.mxu0 %v856
        %v1670 = vpop.f32.mrf.mxu0
        %v1671 = vadd.f32 %v1651, %v1670
        %1672 = vdwg.mxu0
        %1673 = vmatpush.msra.mxu0 %v1240
        %1674 = vmatpush.msra.mxu0 %v1234
        %1675 = vmatpush.msra.mxu0 %v1228
        %1676 = vmatpush.msra.mxu0 %v1222
        %1677 = vmatpush.msra.mxu0 %v1216
        %1678 = vmatpush.msra.mxu0 %v1210
        %1679 = vmatpush.msra.mxu0 %v1204
        %1680 = vmatpush.msra.mxu0 %v1198
        %1681 = vmatpush.msra.mxu0 %v1192
        %1682 = vmatpush.msra.mxu0 %v1186
        %1683 = vmatpush.msra.mxu0 %v1180
        %1684 = vmatpush.msra.mxu0 %v1174
        %1685 = vmatpush.msra.mxu0 %v1168
        %1686 = vmatpush.msra.mxu0 %v1162
        %1687 = vmatpush.msra.mxu0 %v1156
        %1688 = vmatpush.msra.mxu0 %v1150
        %1689 = vmatmul.f32.gmra.mxu0 %v857
        %v1690 = vpop.f32.mrf.mxu0
        %v1691 = vadd.f32 %v1671, %v1690
        %1692 = vdwg.mxu0
        %1693 = vmatpush.msra.mxu0 0.0
        %1694 = vmatpush.msra.mxu0 0.0
        %1695 = vmatpush.msra.mxu0 0.0
        %1696 = vmatpush.msra.mxu0 0.0
        %1697 = vmatpush.msra.mxu0 0.0
        %1698 = vmatpush.msra.mxu0 %v1306
        %1699 = vmatpush.msra.mxu0 %v1300
        %1700 = vmatpush.msra.mxu0 %v1294
        %1701 = vmatpush.msra.mxu0 %v1288
        %1702 = vmatpush.msra.mxu0 %v1282
        %1703 = vmatpush.msra.mxu0 %v1276
        %1704 = vmatpush.msra.mxu0 %v1270
        %1705 = vmatpush.msra.mxu0 %v1264
        %1706 = vmatpush.msra.mxu0 %v1258
        %1707 = vmatpush.msra.mxu0 %v1252
        %1708 = vmatpush.msra.mxu0 %v1246
        %1709 = vmatmul.f32.gmra.mxu0 %v1311
        %v1710 = vpop.f32.mrf.mxu0
        %v1711 = vadd.f32 %v1691, %v1710
        %1712 = vdwg.mxu0
        %1713 = vmatpush.msra.mxu0 %v953
        %1714 = vmatpush.msra.mxu0 %v947
        %1715 = vmatpush.msra.mxu0 %v941
        %1716 = vmatpush.msra.mxu0 %v935
        %1717 = vmatpush.msra.mxu0 %v929
        %1718 = vmatpush.msra.mxu0 %v923
        %1719 = vmatpush.msra.mxu0 %v917
        %1720 = vmatpush.msra.mxu0 %v911
        %1721 = vmatpush.msra.mxu0 %v905
        %1722 = vmatpush.msra.mxu0 %v899
        %1723 = vmatpush.msra.mxu0 %v893
        %1724 = vmatpush.msra.mxu0 %v887
        %1725 = vmatpush.msra.mxu0 %v881
        %1726 = vmatpush.msra.mxu0 %v875
        %1727 = vmatpush.msra.mxu0 %v869
        %1728 = vmatpush.msra.mxu0 %v863
        %1729 = vmatmul.f32.gmra.mxu0 %v854
        %v1730 = vpop.f32.mrf.mxu0
        %v1731 = vadd.f32 0.0, %v1730
        %1732 = vdwg.mxu0
        %1733 = vmatpush.msra.mxu0 %v1049
        %1734 = vmatpush.msra.mxu0 %v1043
        %1735 = vmatpush.msra.mxu0 %v1037
        %1736 = vmatpush.msra.mxu0 %v1031
        %1737 = vmatpush.msra.mxu0 %v1025
        %1738 = vmatpush.msra.mxu0 %v1019
        %1739 = vmatpush.msra.mxu0 %v1013
        %1740 = vmatpush.msra.mxu0 %v1007
        %1741 = vmatpush.msra.mxu0 %v1001
        %1742 = vmatpush.msra.mxu0 %v995
        %1743 = vmatpush.msra.mxu0 %v989
        %1744 = vmatpush.msra.mxu0 %v983
        %1745 = vmatpush.msra.mxu0 %v977
        %1746 = vmatpush.msra.mxu0 %v971
        %1747 = vmatpush.msra.mxu0 %v965
        %1748 = vmatpush.msra.mxu0 %v959
        %1749 = vmatmul.f32.gmra.mxu0 %v855
        %v1750 = vpop.f32.mrf.mxu0
        %v1751 = vadd.f32 %v1731, %v1750
        %1752 = vdwg.mxu0
        %1753 = vmatpush.msra.mxu0 %v1145
        %1754 = vmatpush.msra.mxu0 %v1139
        %1755 = vmatpush.msra.mxu0 %v1133
        %1756 = vmatpush.msra.mxu0 %v1127
        %1757 = vmatpush.msra.mxu0 %v1121
        %1758 = vmatpush.msra.mxu0 %v1115
        %1759 = vmatpush.msra.mxu0 %v1109
        %1760 = vmatpush.msra.mxu0 %v1103
        %1761 = vmatpush.msra.mxu0 %v1097
        %1762 = vmatpush.msra.mxu0 %v1091
        %1763 = vmatpush.msra.mxu0 %v1085
        %1764 = vmatpush.msra.mxu0 %v1079
        %1765 = vmatpush.msra.mxu0 %v1073
        %1766 = vmatpush.msra.mxu0 %v1067
        %1767 = vmatpush.msra.mxu0 %v1061
        %1768 = vmatpush.msra.mxu0 %v1055
        %1769 = vmatmul.f32.gmra.mxu0 %v856
        %v1770 = vpop.f32.mrf.mxu0
        %v1771 = vadd.f32 %v1751, %v1770
        %1772 = vdwg.mxu0
        %1773 = vmatpush.msra.mxu0 %v1241
        %1774 = vmatpush.msra.mxu0 %v1235
        %1775 = vmatpush.msra.mxu0 %v1229
        %1776 = vmatpush.msra.mxu0 %v1223
        %1777 = vmatpush.msra.mxu0 %v1217
        %1778 = vmatpush.msra.mxu0 %v1211
        %1779 = vmatpush.msra.mxu0 %v1205
        %1780 = vmatpush.msra.mxu0 %v1199
        %1781 = vmatpush.msra.mxu0 %v1193
        %1782 = vmatpush.msra.mxu0 %v1187
        %1783 = vmatpush.msra.mxu0 %v1181
        %1784 = vmatpush.msra.mxu0 %v1175
        %1785 = vmatpush.msra.mxu0 %v1169
        %1786 = vmatpush.msra.mxu0 %v1163
        %1787 = vmatpush.msra.mxu0 %v1157
        %1788 = vmatpush.msra.mxu0 %v1151
        %1789 = vmatmul.f32.gmra.mxu0 %v857
        %v1790 = vpop.f32.mrf.mxu0
        %v1791 = vadd.f32 %v1771, %v1790
        %1792 = vdwg.mxu0
        %1793 = vmatpush.msra.mxu0 0.0
        %1794 = vmatpush.msra.mxu0 0.0
        %1795 = vmatpush.msra.mxu0 0.0
        %1796 = vmatpush.msra.mxu0 0.0
        %1797 = vmatpush.msra.mxu0 0.0
        %1798 = vmatpush.msra.mxu0 %v1307
        %1799 = vmatpush.msra.mxu0 %v1301
        %1800 = vmatpush.msra.mxu0 %v1295
        %1801 = vmatpush.msra.mxu0 %v1289
        %1802 = vmatpush.msra.mxu0 %v1283
        %1803 = vmatpush.msra.mxu0 %v1277
        %1804 = vmatpush.msra.mxu0 %v1271
        %1805 = vmatpush.msra.mxu0 %v1265
        %1806 = vmatpush.msra.mxu0 %v1259
        %1807 = vmatpush.msra.mxu0 %v1253
        %1808 = vmatpush.msra.mxu0 %v1247
        %1809 = vmatmul.f32.gmra.mxu0 %v1311
        %v1810 = vpop.f32.mrf.mxu0
        %v1811 = vadd.f32 %v1791, %v1810
        %1812 = vdwg.mxu0
        %1813 = vmatpush.msra.mxu0 %v954
        %1814 = vmatpush.msra.mxu0 %v948
        %1815 = vmatpush.msra.mxu0 %v942
        %1816 = vmatpush.msra.mxu0 %v936
        %1817 = vmatpush.msra.mxu0 %v930
        %1818 = vmatpush.msra.mxu0 %v924
        %1819 = vmatpush.msra.mxu0 %v918
        %1820 = vmatpush.msra.mxu0 %v912
        %1821 = vmatpush.msra.mxu0 %v906
        %1822 = vmatpush.msra.mxu0 %v900
        %1823 = vmatpush.msra.mxu0 %v894
        %1824 = vmatpush.msra.mxu0 %v888
        %1825 = vmatpush.msra.mxu0 %v882
        %1826 = vmatpush.msra.mxu0 %v876
        %1827 = vmatpush.msra.mxu0 %v870
        %1828 = vmatpush.msra.mxu0 %v864
        %1829 = vmatmul.f32.gmra.mxu0 %v854
        %v1830 = vpop.f32.mrf.mxu0
        %v1831 = vadd.f32 0.0, %v1830
        %1832 = vdwg.mxu0
        %1833 = vmatpush.msra.mxu0 %v1050
        %1834 = vmatpush.msra.mxu0 %v1044
        %1835 = vmatpush.msra.mxu0 %v1038
        %1836 = vmatpush.msra.mxu0 %v1032
        %1837 = vmatpush.msra.mxu0 %v1026
        %1838 = vmatpush.msra.mxu0 %v1020
        %1839 = vmatpush.msra.mxu0 %v1014
        %1840 = vmatpush.msra.mxu0 %v1008
        %1841 = vmatpush.msra.mxu0 %v1002
        %1842 = vmatpush.msra.mxu0 %v996
        %1843 = vmatpush.msra.mxu0 %v990
        %1844 = vmatpush.msra.mxu0 %v984
        %1845 = vmatpush.msra.mxu0 %v978
        %1846 = vmatpush.msra.mxu0 %v972
        %1847 = vmatpush.msra.mxu0 %v966
        %1848 = vmatpush.msra.mxu0 %v960
        %1849 = vmatmul.f32.gmra.mxu0 %v855
        %v1850 = vpop.f32.mrf.mxu0
        %v1851 = vadd.f32 %v1831, %v1850
        %1852 = vdwg.mxu0
        %1853 = vmatpush.msra.mxu0 %v1146
        %1854 = vmatpush.msra.mxu0 %v1140
        %1855 = vmatpush.msra.mxu0 %v1134
        %1856 = vmatpush.msra.mxu0 %v1128
        %1857 = vmatpush.msra.mxu0 %v1122
        %1858 = vmatpush.msra.mxu0 %v1116
        %1859 = vmatpush.msra.mxu0 %v1110
        %1860 = vmatpush.msra.mxu0 %v1104
        %1861 = vmatpush.msra.mxu0 %v1098
        %1862 = vmatpush.msra.mxu0 %v1092
        %1863 = vmatpush.msra.mxu0 %v1086
        %1864 = vmatpush.msra.mxu0 %v1080
        %1865 = vmatpush.msra.mxu0 %v1074
        %1866 = vmatpush.msra.mxu0 %v1068
        %1867 = vmatpush.msra.mxu0 %v1062
        %1868 = vmatpush.msra.mxu0 %v1056
        %1869 = vmatmul.f32.gmra.mxu0 %v856
        %v1870 = vpop.f32.mrf.mxu0
        %v1871 = vadd.f32 %v1851, %v1870
        %1872 = vdwg.mxu0
        %1873 = vmatpush.msra.mxu0 %v1242
        %1874 = vmatpush.msra.mxu0 %v1236
        %1875 = vmatpush.msra.mxu0 %v1230
        %1876 = vmatpush.msra.mxu0 %v1224
        %1877 = vmatpush.msra.mxu0 %v1218
        %1878 = vmatpush.msra.mxu0 %v1212
        %1879 = vmatpush.msra.mxu0 %v1206
        %1880 = vmatpush.msra.mxu0 %v1200
        %1881 = vmatpush.msra.mxu0 %v1194
        %1882 = vmatpush.msra.mxu0 %v1188
        %1883 = vmatpush.msra.mxu0 %v1182
        %1884 = vmatpush.msra.mxu0 %v1176
        %1885 = vmatpush.msra.mxu0 %v1170
        %1886 = vmatpush.msra.mxu0 %v1164
        %1887 = vmatpush.msra.mxu0 %v1158
        %1888 = vmatpush.msra.mxu0 %v1152
        %1889 = vmatmul.f32.gmra.mxu0 %v857
        %v1890 = vpop.f32.mrf.mxu0
        %v1891 = vadd.f32 %v1871, %v1890
        %1892 = vdwg.mxu0
        %1893 = vmatpush.msra.mxu0 0.0
        %1894 = vmatpush.msra.mxu0 0.0
        %1895 = vmatpush.msra.mxu0 0.0
        %1896 = vmatpush.msra.mxu0 0.0
        %1897 = vmatpush.msra.mxu0 0.0
        %1898 = vmatpush.msra.mxu0 %v1308
        %1899 = vmatpush.msra.mxu0 %v1302
        %1900 = vmatpush.msra.mxu0 %v1296
        %1901 = vmatpush.msra.mxu0 %v1290
        %1902 = vmatpush.msra.mxu0 %v1284
        %1903 = vmatpush.msra.mxu0 %v1278
        %1904 = vmatpush.msra.mxu0 %v1272
        %1905 = vmatpush.msra.mxu0 %v1266
        %1906 = vmatpush.msra.mxu0 %v1260
        %1907 = vmatpush.msra.mxu0 %v1254
        %1908 = vmatpush.msra.mxu0 %v1248
        %1909 = vmatmul.f32.gmra.mxu0 %v1311
        %v1910 = vpop.f32.mrf.mxu0
        %v1911 = vadd.f32 %v1891, %v1910
        %1912 = vdwg.mxu0
        %v1913 = vld [vmem:[#allocation11] sm:$0xff]
        %v1914 = vld [vmem:[#allocation11 + $0x8] sm:$0xff]
        %v1915 = vld [vmem:[#allocation11 + $0x10] sm:$0xff]
        %v1916 = vld [vmem:[#allocation11 + $0x18] sm:$0xff]
        %v1917 = vld [vmem:[#allocation11 + $0x20] sm:$0xff]
        %v1918 = vld [vmem:[#allocation11 + $0x28] sm:$0xff]
        %v1919 = vld [vmem:[#allocation11 + $0x30] sm:$0xff]
        %v1920 = vld [vmem:[#allocation11 + $0x38] sm:$0xff]
        %v1921 = vld [vmem:[#allocation11 + $0x40] sm:$0xff]
        %v1922 = vld [vmem:[#allocation11 + $0x48] sm:$0xff]
        %v1923 = vld [vmem:[#allocation11 + $0x50] sm:$0xff]
        %v1924 = vld [vmem:[#allocation11 + $0x58] sm:$0xff]
        %v1925 = vld [vmem:[#allocation11 + $0x60] sm:$0xff]
        %v1926 = vld [vmem:[#allocation11 + $0x68] sm:$0xff]
        %v1927 = vld [vmem:[#allocation11 + $0x70] sm:$0xff]
        %v1928 = vld [vmem:[#allocation11 + $0x78] sm:$0xff]
        %v1929 = vld [vmem:[#allocation11 + $0x80] sm:$0xff]
        %v1930 = vld [vmem:[#allocation11 + $0x88] sm:$0xff]
        %v1931 = vld [vmem:[#allocation11 + $0x90] sm:$0xff]
        %v1932 = vld [vmem:[#allocation11 + $0x98] sm:$0xff]
        %v1933 = vld [vmem:[#allocation11 + $0xa0] sm:$0xff]
        %v1934 = vld [vmem:[#allocation11 + $0xa8] sm:$0xff]
        %v1935 = vld [vmem:[#allocation11 + $0xb0] sm:$0xff]
        %v1936 = vld [vmem:[#allocation11 + $0xb8] sm:$0xff]
        %v1937 = vld [vmem:[#allocation11 + $0xc0] sm:$0xff]
        %v1938 = vld [vmem:[#allocation11 + $0xc8] sm:$0xff]
        %v1939 = vld [vmem:[#allocation11 + $0xd0] sm:$0xff]
        %v1940 = vld [vmem:[#allocation11 + $0xd8] sm:$0xff]
        %v1941 = vld [vmem:[#allocation11 + $0xe0] sm:$0xff]
        %v1942 = vld [vmem:[#allocation11 + $0xe8] sm:$0xff]
        %v1943 = vld [vmem:[#allocation11 + $0xf0] sm:$0xff]
        %v1944 = vld [vmem:[#allocation11 + $0xf8] sm:$0xff]
        %v1945 = vld [vmem:[#allocation11 + $0x100] sm:$0xff]
        %v1946 = vld [vmem:[#allocation11 + $0x108] sm:$0xff]
        %v1947 = vld [vmem:[#allocation11 + $0x110] sm:$0xff]
        %v1948 = vld [vmem:[#allocation11 + $0x118] sm:$0xff]
        %v1949 = vld [vmem:[#allocation11 + $0x120] sm:$0xff]
        %v1950 = vld [vmem:[#allocation11 + $0x128] sm:$0xff]
        %v1951 = vld [vmem:[#allocation11 + $0x130] sm:$0xff]
        %v1952 = vld [vmem:[#allocation11 + $0x138] sm:$0xff]
        %v1953 = vld [vmem:[#allocation11 + $0x140] sm:$0xff]
        %v1954 = vld [vmem:[#allocation11 + $0x148] sm:$0xff]
        %v1955 = vld [vmem:[#allocation11 + $0x150] sm:$0xff]
        %v1956 = vld [vmem:[#allocation11 + $0x158] sm:$0xff]
        %v1957 = vld [vmem:[#allocation11 + $0x160] sm:$0xff]
        %v1958 = vld [vmem:[#allocation11 + $0x168] sm:$0xff]
        %v1959 = vld [vmem:[#allocation11 + $0x170] sm:$0xff]
        %v1960 = vld [vmem:[#allocation11 + $0x178] sm:$0xff]
        %v1961 = vld [vmem:[#allocation11 + $0x180] sm:$0xff]
        %v1962 = vld [vmem:[#allocation11 + $0x188] sm:$0xff]
        %v1963 = vld [vmem:[#allocation11 + $0x190] sm:$0xff]
        %v1964 = vld [vmem:[#allocation11 + $0x198] sm:$0xff]
        %v1965 = vld [vmem:[#allocation11 + $0x1a0] sm:$0xff]
        %v1966 = vld [vmem:[#allocation11 + $0x1a8] sm:$0xff]
        %v1967 = vld [vmem:[#allocation11 + $0x1b0] sm:$0xff]
        %v1968 = vld [vmem:[#allocation11 + $0x1b8] sm:$0xff]
        %v1969 = vld [vmem:[#allocation11 + $0x1c0] sm:$0xff]
        %v1970 = vld [vmem:[#allocation11 + $0x1c8] sm:$0xff]
        %v1971 = vld [vmem:[#allocation11 + $0x1d0] sm:$0xff]
        %v1972 = vld [vmem:[#allocation11 + $0x1d8] sm:$0xff]
        %v1973 = vld [vmem:[#allocation11 + $0x1e0] sm:$0xff]
        %v1974 = vld [vmem:[#allocation11 + $0x1e8] sm:$0xff]
        %v1975 = vld [vmem:[#allocation11 + $0x1f0] sm:$0xff]
        %v1976 = vld [vmem:[#allocation11 + $0x1f8] sm:$0xff]
        %v1977 = vld [vmem:[#allocation11 + $0x200] sm:$0xff]
        %v1978 = vld [vmem:[#allocation11 + $0x208] sm:$0xff]
        %v1979 = vld [vmem:[#allocation11 + $0x210] sm:$0xff]
        %v1980 = vld [vmem:[#allocation11 + $0x218] sm:$0xff]
        %v1981 = vld [vmem:[#allocation11 + $0x220] sm:$0xff]
        %v1982 = vld [vmem:[#allocation11 + $0x228] sm:$0xff]
        %v1983 = vld [vmem:[#allocation11 + $0x230] sm:$0xff]
        %v1984 = vld [vmem:[#allocation11 + $0x238] sm:$0xff]
        %v1985 = vld [vmem:[#allocation11 + $0x240] sm:$0xff]
        %v1986 = vld [vmem:[#allocation11 + $0x248] sm:$0xff]
        %v1987 = vld [vmem:[#allocation11 + $0x250] sm:$0xff]
        %v1988 = vld [vmem:[#allocation11 + $0x258] sm:$0xff]
        %v1989 = vld [vmem:[#allocation11 + $0x260] sm:$0xff]
        %v1990 = vld [vmem:[#allocation11 + $0x268] sm:$0xff]
        %v1991 = vld [vmem:[#allocation11 + $0x270] sm:$0xff]
        %v1992 = vld [vmem:[#allocation11 + $0x278] sm:$0xff]
        %v1993 = vld [vmem:[#allocation11 + $0x280] sm:$0xff]
        %v1994 = vld [vmem:[#allocation11 + $0x288] sm:$0xff]
        %v1995 = vld [vmem:[#allocation11 + $0x290] sm:$0xff]
        %v1996 = vld [vmem:[#allocation11 + $0x298] sm:$0xff]
        %v1997 = vld [vmem:[#allocation11 + $0x2a0] sm:$0xff]
        %v1998 = vld [vmem:[#allocation11 + $0x2a8] sm:$0xff]
        %v1999 = vld [vmem:[#allocation11 + $0x2b0] sm:$0xff]
        %v2000 = vld [vmem:[#allocation11 + $0x2b8] sm:$0xff]
        %v2001 = vld [vmem:[#allocation11 + $0x2c0] sm:$0xff]
        %v2002 = vld [vmem:[#allocation11 + $0x2c8] sm:$0xff]
        %v2003 = vld [vmem:[#allocation11 + $0x2d0] sm:$0xff]
        %v2004 = vld [vmem:[#allocation11 + $0x2d8] sm:$0xff]
        %v2005 = vld [vmem:[#allocation11 + $0x2e0] sm:$0xff]
        %v2006 = vld [vmem:[#allocation11 + $0x2e8] sm:$0xff]
        %v2007 = vld [vmem:[#allocation11 + $0x2f0] sm:$0xff]
        %v2008 = vld [vmem:[#allocation11 + $0x2f8] sm:$0xff]
        %v2009 = vld [vmem:[#allocation11 + $0x300] sm:$0xff]
        %v2010 = vld [vmem:[#allocation11 + $0x308] sm:$0xff]
        %v2011 = vld [vmem:[#allocation11 + $0x310] sm:$0xff]
        %v2012 = vld [vmem:[#allocation11 + $0x318] sm:$0xff]
        %v2013 = vld [vmem:[#allocation11 + $0x320] sm:$0xff]
        %v2014 = vld [vmem:[#allocation11 + $0x328] sm:$0xff]
        %v2015 = vld [vmem:[#allocation11 + $0x330] sm:$0xff]
        %v2016 = vld [vmem:[#allocation11 + $0x338] sm:$0xff]
        %v2017 = vld [vmem:[#allocation11 + $0x340] sm:$0xff]
        %v2018 = vld [vmem:[#allocation11 + $0x348] sm:$0xff]
        %v2019 = vld [vmem:[#allocation11 + $0x350] sm:$0xff]
        %v2020 = vld [vmem:[#allocation11 + $0x358] sm:$0xff]
        %v2021 = vld [vmem:[#allocation11 + $0x360] sm:$0xff]
        %v2022 = vld [vmem:[#allocation11 + $0x368] sm:$0xff]
        %v2023 = vld [vmem:[#allocation11 + $0x370] sm:$0xff]
        %v2024 = vld [vmem:[#allocation11 + $0x378] sm:$0xff]
        %v2025 = vld [vmem:[#allocation11 + $0x380] sm:$0xff]
        %v2026 = vld [vmem:[#allocation11 + $0x388] sm:$0xff]
        %v2027 = vld [vmem:[#allocation11 + $0x390] sm:$0xff]
        %v2028 = vld [vmem:[#allocation11 + $0x398] sm:$0xff]
        %v2029 = vld [vmem:[#allocation11 + $0x3a0] sm:$0xff]
        %v2030 = vld [vmem:[#allocation11 + $0x3a8] sm:$0xff]
        %v2031 = vld [vmem:[#allocation11 + $0x3b0] sm:$0xff]
        %v2032 = vld [vmem:[#allocation11 + $0x3b8] sm:$0xff]
        %v2033 = vld [vmem:[#allocation11 + $0x3c0] sm:$0xff]
        %v2034 = vld [vmem:[#allocation11 + $0x3c8] sm:$0xff]
        %v2035 = vld [vmem:[#allocation11 + $0x3d0] sm:$0xff]
        %v2036 = vld [vmem:[#allocation11 + $0x3d8] sm:$0xff]
        %v2037 = vld [vmem:[#allocation11 + $0x3e0] sm:$0xff]
        %v2038 = vld [vmem:[#allocation11 + $0x3e8] sm:$0xff]
        %v2039 = vld [vmem:[#allocation11 + $0x3f0] sm:$0xff]
        %v2040 = vld [vmem:[#allocation11 + $0x3f8] sm:$0xff]
        %v2041 = vld [vmem:[#allocation11 + $0x400] sm:$0xff]
        %v2042 = vld [vmem:[#allocation11 + $0x408] sm:$0xff]
        %v2043 = vld [vmem:[#allocation11 + $0x410] sm:$0xff]
        %v2044 = vld [vmem:[#allocation11 + $0x418] sm:$0xff]
        %v2045 = vld [vmem:[#allocation11 + $0x420] sm:$0xff]
        %v2046 = vld [vmem:[#allocation11 + $0x428] sm:$0xff]
        %v2047 = vld [vmem:[#allocation11 + $0x430] sm:$0xff]
        %v2048 = vld [vmem:[#allocation11 + $0x438] sm:$0xff]
        %v2049 = vld [vmem:[#allocation11 + $0x440] sm:$0xff]
        %v2050 = vld [vmem:[#allocation11 + $0x448] sm:$0xff]
        %v2051 = vld [vmem:[#allocation11 + $0x450] sm:$0xff]
        %v2052 = vld [vmem:[#allocation11 + $0x458] sm:$0xff]
        %v2053 = vld [vmem:[#allocation11 + $0x460] sm:$0xff]
        %v2054 = vld [vmem:[#allocation11 + $0x468] sm:$0xff]
        %v2055 = vld [vmem:[#allocation11 + $0x470] sm:$0xff]
        %v2056 = vld [vmem:[#allocation11 + $0x478] sm:$0xff]
        %v2057 = vld [vmem:[#allocation11 + $0x480] sm:$0xff]
        %v2058 = vld [vmem:[#allocation11 + $0x488] sm:$0xff]
        %v2059 = vld [vmem:[#allocation11 + $0x490] sm:$0xff]
        %v2060 = vld [vmem:[#allocation11 + $0x498] sm:$0xff]
        %v2061 = vld [vmem:[#allocation11 + $0x4a0] sm:$0xff]
        %v2062 = vld [vmem:[#allocation11 + $0x4a8] sm:$0xff]
        %v2063 = vld [vmem:[#allocation11 + $0x4b0] sm:$0xff]
        %v2064 = vld [vmem:[#allocation11 + $0x4b8] sm:$0xff]
        %v2065 = vld [vmem:[#allocation11 + $0x4c0] sm:$0xff]
        %v2066 = vld [vmem:[#allocation11 + $0x4c8] sm:$0xff]
        %v2067 = vld [vmem:[#allocation11 + $0x4d0] sm:$0xff]
        %v2068 = vld [vmem:[#allocation11 + $0x4d8] sm:$0xff]
        %v2069 = vld [vmem:[#allocation11 + $0x4e0] sm:$0xff]
        %v2070 = vld [vmem:[#allocation11 + $0x4e8] sm:$0xff]
        %v2071 = vld [vmem:[#allocation11 + $0x4f0] sm:$0xff]
        %v2072 = vld [vmem:[#allocation11 + $0x4f8] sm:$0xff]
        %v2073 = vld [vmem:[#allocation11 + $0x500] sm:$0xff]
        %v2074 = vld [vmem:[#allocation11 + $0x508] sm:$0xff]
        %v2075 = vld [vmem:[#allocation11 + $0x510] sm:$0xff]
        %v2076 = vld [vmem:[#allocation11 + $0x518] sm:$0xff]
        %v2077 = vld [vmem:[#allocation11 + $0x520] sm:$0xff]
        %v2078 = vld [vmem:[#allocation11 + $0x528] sm:$0xff]
        %v2079 = vld [vmem:[#allocation11 + $0x530] sm:$0xff]
        %v2080 = vld [vmem:[#allocation11 + $0x538] sm:$0xff]
        %v2081 = vld [vmem:[#allocation11 + $0x540] sm:$0xff]
        %v2082 = vld [vmem:[#allocation11 + $0x548] sm:$0xff]
        %v2083 = vld [vmem:[#allocation11 + $0x550] sm:$0xff]
        %v2084 = vld [vmem:[#allocation11 + $0x558] sm:$0xff]
        %v2085 = vld [vmem:[#allocation11 + $0x560] sm:$0xff]
        %v2086 = vld [vmem:[#allocation11 + $0x568] sm:$0xff]
        %v2087 = vld [vmem:[#allocation11 + $0x570] sm:$0xff]
        %v2088 = vld [vmem:[#allocation11 + $0x578] sm:$0xff]
        %v2089 = vld [vmem:[#allocation11 + $0x580] sm:$0xff]
        %v2090 = vld [vmem:[#allocation11 + $0x588] sm:$0xff]
        %v2091 = vld [vmem:[#allocation11 + $0x590] sm:$0xff]
        %v2092 = vld [vmem:[#allocation11 + $0x598] sm:$0xff]
        %v2093 = vld [vmem:[#allocation11 + $0x5a0] sm:$0xff]
        %v2094 = vld [vmem:[#allocation11 + $0x5a8] sm:$0xff]
        %v2095 = vld [vmem:[#allocation11 + $0x5b0] sm:$0xff]
        %v2096 = vld [vmem:[#allocation11 + $0x5b8] sm:$0xff]
        %v2097 = vld [vmem:[#allocation11 + $0x5c0] sm:$0xff]
        %v2098 = vld [vmem:[#allocation11 + $0x5c8] sm:$0xff]
        %v2099 = vld [vmem:[#allocation11 + $0x5d0] sm:$0xff]
        %v2100 = vld [vmem:[#allocation11 + $0x5d8] sm:$0xff]
        %v2101 = vld [vmem:[#allocation11 + $0x5e0] sm:$0xff]
        %v2102 = vld [vmem:[#allocation11 + $0x5e8] sm:$0xff]
        %v2103 = vld [vmem:[#allocation11 + $0x5f0] sm:$0xff]
        %v2104 = vld [vmem:[#allocation11 + $0x5f8] sm:$0xff]
        %v2105 = vld [vmem:[#allocation11 + $0x600] sm:$0xff]
        %v2106 = vld [vmem:[#allocation11 + $0x608] sm:$0xff]
        %v2107 = vld [vmem:[#allocation11 + $0x610] sm:$0xff]
        %v2108 = vld [vmem:[#allocation11 + $0x618] sm:$0xff]
        %v2109 = vld [vmem:[#allocation11 + $0x620] sm:$0xff]
        %v2110 = vld [vmem:[#allocation11 + $0x628] sm:$0xff]
        %v2111 = vld [vmem:[#allocation11 + $0x630] sm:$0xff]
        %v2112 = vld [vmem:[#allocation11 + $0x638] sm:$0xff]
        %v2113 = vld [vmem:[#allocation11 + $0x640] sm:$0xff]
        %v2114 = vld [vmem:[#allocation11 + $0x648] sm:$0xff]
        %v2115 = vld [vmem:[#allocation11 + $0x650] sm:$0xff]
        %v2116 = vld [vmem:[#allocation11 + $0x658] sm:$0xff]
        %v2117 = vld [vmem:[#allocation11 + $0x660] sm:$0xff]
        %v2118 = vld [vmem:[#allocation11 + $0x668] sm:$0xff]
        %v2119 = vld [vmem:[#allocation11 + $0x670] sm:$0xff]
        %v2120 = vld [vmem:[#allocation11 + $0x678] sm:$0xff]
        %v2121 = vld [vmem:[#allocation11 + $0x680] sm:$0xff]
        %v2122 = vld [vmem:[#allocation11 + $0x688] sm:$0xff]
        %v2123 = vld [vmem:[#allocation11 + $0x690] sm:$0xff]
        %v2124 = vld [vmem:[#allocation11 + $0x698] sm:$0xff]
        %v2125 = vld [vmem:[#allocation11 + $0x6a0] sm:$0xff]
        %v2126 = vld [vmem:[#allocation11 + $0x6a8] sm:$0xff]
        %v2127 = vld [vmem:[#allocation11 + $0x6b0] sm:$0xff]
        %v2128 = vld [vmem:[#allocation11 + $0x6b8] sm:$0xff]
        %v2129 = vld [vmem:[#allocation11 + $0x6c0] sm:$0xff]
        %v2130 = vld [vmem:[#allocation11 + $0x6c8] sm:$0xff]
        %v2131 = vld [vmem:[#allocation11 + $0x6d0] sm:$0xff]
        %v2132 = vld [vmem:[#allocation11 + $0x6d8] sm:$0xff]
        %v2133 = vld [vmem:[#allocation11 + $0x6e0] sm:$0xff]
        %v2134 = vld [vmem:[#allocation11 + $0x6e8] sm:$0xff]
        %v2135 = vld [vmem:[#allocation11 + $0x6f0] sm:$0xff]
        %v2136 = vld [vmem:[#allocation11 + $0x6f8] sm:$0xff]
        %v2137 = vld [vmem:[#allocation11 + $0x700] sm:$0xff]
        %v2138 = vld [vmem:[#allocation11 + $0x708] sm:$0xff]
        %v2139 = vld [vmem:[#allocation11 + $0x710] sm:$0xff]
        %v2140 = vld [vmem:[#allocation11 + $0x718] sm:$0xff]
        %v2141 = vld [vmem:[#allocation11 + $0x720] sm:$0xff]
        %v2142 = vld [vmem:[#allocation11 + $0x728] sm:$0xff]
        %v2143 = vld [vmem:[#allocation11 + $0x730] sm:$0xff]
        %v2144 = vld [vmem:[#allocation11 + $0x738] sm:$0xff]
        %v2145 = vld [vmem:[#allocation11 + $0x740] sm:$0xff]
        %v2146 = vld [vmem:[#allocation11 + $0x748] sm:$0xff]
        %v2147 = vld [vmem:[#allocation11 + $0x750] sm:$0xff]
        %v2148 = vld [vmem:[#allocation11 + $0x758] sm:$0xff]
        %v2149 = vld [vmem:[#allocation11 + $0x760] sm:$0xff]
        %v2150 = vld [vmem:[#allocation11 + $0x768] sm:$0xff]
        %v2151 = vld [vmem:[#allocation11 + $0x770] sm:$0xff]
        %v2152 = vld [vmem:[#allocation11 + $0x778] sm:$0xff]
        %v2153 = vld [vmem:[#allocation11 + $0x780] sm:$0xff]
        %v2154 = vld [vmem:[#allocation11 + $0x788] sm:$0xff]
        %v2155 = vld [vmem:[#allocation11 + $0x790] sm:$0xff]
        %v2156 = vld [vmem:[#allocation11 + $0x798] sm:$0xff]
        %v2157 = vld [vmem:[#allocation11 + $0x7a0] sm:$0xff]
        %v2158 = vld [vmem:[#allocation11 + $0x7a8] sm:$0xff]
        %v2159 = vld [vmem:[#allocation11 + $0x7b0] sm:$0xff]
        %v2160 = vld [vmem:[#allocation11 + $0x7b8] sm:$0xff]
        %v2161 = vld [vmem:[#allocation11 + $0x7c0] sm:$0xff]
        %v2162 = vld [vmem:[#allocation11 + $0x7c8] sm:$0xff]
        %v2163 = vld [vmem:[#allocation11 + $0x7d0] sm:$0xff]
        %v2164 = vld [vmem:[#allocation11 + $0x7d8] sm:$0xff]
        %v2165 = vld [vmem:[#allocation11 + $0x7e0] sm:$0xff]
        %v2166 = vld [vmem:[#allocation11 + $0x7e8] sm:$0xff]
        %v2167 = vld [vmem:[#allocation11 + $0x7f0] sm:$0xff]
        %v2168 = vld [vmem:[#allocation11 + $0x7f8] sm:$0xff]
        %v2169 = vld [vmem:[#allocation11 + $0x800] sm:$0xff]
        %v2170 = vld [vmem:[#allocation11 + $0x808] sm:$0xff]
        %v2171 = vld [vmem:[#allocation11 + $0x810] sm:$0xff]
        %v2172 = vld [vmem:[#allocation11 + $0x818] sm:$0xff]
        %v2173 = vld [vmem:[#allocation11 + $0x820] sm:$0xff]
        %v2174 = vld [vmem:[#allocation11 + $0x828] sm:$0xff]
        %v2175 = vld [vmem:[#allocation11 + $0x830] sm:$0xff]
        %v2176 = vld [vmem:[#allocation11 + $0x838] sm:$0xff]
        %v2177 = vld [vmem:[#allocation11 + $0x840] sm:$0xff]
        %v2178 = vld [vmem:[#allocation11 + $0x848] sm:$0xff]
        %v2179 = vld [vmem:[#allocation11 + $0x850] sm:$0xff]
        %v2180 = vld [vmem:[#allocation11 + $0x858] sm:$0xff]
        %v2181 = vld [vmem:[#allocation11 + $0x860] sm:$0xff]
        %v2182 = vld [vmem:[#allocation11 + $0x868] sm:$0xff]
        %v2183 = vld [vmem:[#allocation11 + $0x870] sm:$0xff]
        %v2184 = vld [vmem:[#allocation11 + $0x878] sm:$0xff]
        %v2185 = vld [vmem:[#allocation11 + $0x880] sm:$0xff]
        %v2186 = vld [vmem:[#allocation11 + $0x888] sm:$0xff]
        %v2187 = vld [vmem:[#allocation11 + $0x890] sm:$0xff]
        %v2188 = vld [vmem:[#allocation11 + $0x898] sm:$0xff]
        %v2189 = vld [vmem:[#allocation11 + $0x8a0] sm:$0xff]
        %v2190 = vld [vmem:[#allocation11 + $0x8a8] sm:$0xff]
        %v2191 = vld [vmem:[#allocation11 + $0x8b0] sm:$0xff]
        %v2192 = vld [vmem:[#allocation11 + $0x8b8] sm:$0xff]
        %v2193 = vld [vmem:[#allocation11 + $0x8c0] sm:$0xff]
        %v2194 = vld [vmem:[#allocation11 + $0x8c8] sm:$0xff]
        %v2195 = vld [vmem:[#allocation11 + $0x8d0] sm:$0xff]
        %v2196 = vld [vmem:[#allocation11 + $0x8d8] sm:$0xff]
        %v2197 = vld [vmem:[#allocation11 + $0x8e0] sm:$0xff]
        %v2198 = vld [vmem:[#allocation11 + $0x8e8] sm:$0xff]
        %v2199 = vld [vmem:[#allocation11 + $0x8f0] sm:$0xff]
        %v2200 = vld [vmem:[#allocation11 + $0x8f8] sm:$0xff]
        %v2201 = vld [vmem:[#allocation11 + $0x900] sm:$0xff]
        %v2202 = vld [vmem:[#allocation11 + $0x908] sm:$0xff]
        %v2203 = vld [vmem:[#allocation11 + $0x910] sm:$0xff]
        %v2204 = vld [vmem:[#allocation11 + $0x918] sm:$0xff]
        %v2205 = vld [vmem:[#allocation11 + $0x920] sm:$0xff]
        %v2206 = vld [vmem:[#allocation11 + $0x928] sm:$0xff]
        %v2207 = vld [vmem:[#allocation11 + $0x930] sm:$0xff]
        %v2208 = vld [vmem:[#allocation11 + $0x938] sm:$0xff]
        %v2209 = vld [vmem:[#allocation11 + $0x940] sm:$0xff]
        %v2210 = vld [vmem:[#allocation11 + $0x948] sm:$0xff]
        %v2211 = vld [vmem:[#allocation11 + $0x950] sm:$0xff]
        %v2212 = vld [vmem:[#allocation11 + $0x958] sm:$0xff]
        %v2213 = vld [vmem:[#allocation11 + $0x960] sm:$0xff]
        %v2214 = vld [vmem:[#allocation11 + $0x968] sm:$0xff]
        %v2215 = vld [vmem:[#allocation11 + $0x970] sm:$0xff]
        %v2216 = vld [vmem:[#allocation11 + $0x978] sm:$0xff]
        %v2217 = vld [vmem:[#allocation11 + $0x980] sm:$0xff]
        %v2218 = vld [vmem:[#allocation11 + $0x988] sm:$0xff]
        %v2219 = vld [vmem:[#allocation11 + $0x990] sm:$0xff]
        %v2220 = vld [vmem:[#allocation11 + $0x998] sm:$0xff]
        %v2221 = vld [vmem:[#allocation11 + $0x9a0] sm:$0xff]
        %v2222 = vld [vmem:[#allocation11 + $0x9a8] sm:$0xff]
        %v2223 = vld [vmem:[#allocation11 + $0x9b0] sm:$0xff]
        %v2224 = vld [vmem:[#allocation11 + $0x9b8] sm:$0xff]
        %v2225 = vld [vmem:[#allocation11 + $0x9c0] sm:$0xff]
        %v2226 = vld [vmem:[#allocation11 + $0x9c8] sm:$0xff]
        %v2227 = vld [vmem:[#allocation11 + $0x9d0] sm:$0xff]
        %v2228 = vld [vmem:[#allocation11 + $0x9d8] sm:$0xff]
        %v2229 = vld [vmem:[#allocation11 + $0x9e0] sm:$0xff]
        %v2230 = vld [vmem:[#allocation11 + $0x9e8] sm:$0xff]
        %v2231 = vld [vmem:[#allocation11 + $0x9f0] sm:$0xff]
        %v2232 = vld [vmem:[#allocation11 + $0x9f8] sm:$0xff]
        %v2233 = vld [vmem:[#allocation11 + $0xa00] sm:$0xff]
        %v2234 = vld [vmem:[#allocation11 + $0xa08] sm:$0xff]
        %v2235 = vld [vmem:[#allocation11 + $0xa10] sm:$0xff]
        %v2236 = vld [vmem:[#allocation11 + $0xa18] sm:$0xff]
        %v2237 = vld [vmem:[#allocation11 + $0xa20] sm:$0xff]
        %v2238 = vld [vmem:[#allocation11 + $0xa28] sm:$0xff]
        %v2239 = vld [vmem:[#allocation11 + $0xa30] sm:$0xff]
        %v2240 = vld [vmem:[#allocation11 + $0xa38] sm:$0xff]
        %v2241 = vld [vmem:[#allocation11 + $0xa40] sm:$0xff]
        %v2242 = vld [vmem:[#allocation11 + $0xa48] sm:$0xff]
        %v2243 = vld [vmem:[#allocation11 + $0xa50] sm:$0xff]
        %v2244 = vld [vmem:[#allocation11 + $0xa58] sm:$0xff]
        %v2245 = vld [vmem:[#allocation11 + $0xa60] sm:$0xff]
        %v2246 = vld [vmem:[#allocation11 + $0xa68] sm:$0xff]
        %v2247 = vld [vmem:[#allocation11 + $0xa70] sm:$0xff]
        %v2248 = vld [vmem:[#allocation11 + $0xa78] sm:$0xff]
        %v2249 = vld [vmem:[#allocation11 + $0xa80] sm:$0xff]
        %v2250 = vld [vmem:[#allocation11 + $0xa88] sm:$0xff]
        %v2251 = vld [vmem:[#allocation11 + $0xa90] sm:$0xff]
        %v2252 = vld [vmem:[#allocation11 + $0xa98] sm:$0xff]
        %v2253 = vld [vmem:[#allocation11 + $0xaa0] sm:$0xff]
        %v2254 = vld [vmem:[#allocation11 + $0xaa8] sm:$0xff]
        %v2255 = vld [vmem:[#allocation11 + $0xab0] sm:$0xff]
        %v2256 = vld [vmem:[#allocation11 + $0xab8] sm:$0xff]
        %v2257 = vld [vmem:[#allocation11 + $0xac0] sm:$0xff]
        %v2258 = vld [vmem:[#allocation11 + $0xac8] sm:$0xff]
        %v2259 = vld [vmem:[#allocation11 + $0xad0] sm:$0xff]
        %v2260 = vld [vmem:[#allocation11 + $0xad8] sm:$0xff]
        %v2261 = vld [vmem:[#allocation11 + $0xae0] sm:$0xff]
        %v2262 = vld [vmem:[#allocation11 + $0xae8] sm:$0xff]
        %v2263 = vld [vmem:[#allocation11 + $0xaf0] sm:$0xff]
        %v2264 = vld [vmem:[#allocation11 + $0xaf8] sm:$0xff]
        %v2265 = vld [vmem:[#allocation11 + $0xb00] sm:$0xff]
        %v2266 = vld [vmem:[#allocation11 + $0xb08] sm:$0xff]
        %v2267 = vld [vmem:[#allocation11 + $0xb10] sm:$0xff]
        %v2268 = vld [vmem:[#allocation11 + $0xb18] sm:$0xff]
        %v2269 = vld [vmem:[#allocation11 + $0xb20] sm:$0xff]
        %v2270 = vld [vmem:[#allocation11 + $0xb28] sm:$0xff]
        %v2271 = vld [vmem:[#allocation11 + $0xb30] sm:$0xff]
        %v2272 = vld [vmem:[#allocation11 + $0xb38] sm:$0xff]
        %v2273 = vld [vmem:[#allocation11 + $0xb40] sm:$0xff]
        %v2274 = vld [vmem:[#allocation11 + $0xb48] sm:$0xff]
        %v2275 = vld [vmem:[#allocation11 + $0xb50] sm:$0xff]
        %v2276 = vld [vmem:[#allocation11 + $0xb58] sm:$0xff]
        %v2277 = vld [vmem:[#allocation11 + $0xb60] sm:$0xff]
        %v2278 = vld [vmem:[#allocation11 + $0xb68] sm:$0xff]
        %v2279 = vld [vmem:[#allocation11 + $0xb70] sm:$0xff]
        %v2280 = vld [vmem:[#allocation11 + $0xb78] sm:$0xff]
        %v2281 = vld [vmem:[#allocation11 + $0xb80] sm:$0xff]
        %v2282 = vld [vmem:[#allocation11 + $0xb88] sm:$0xff]
        %v2283 = vld [vmem:[#allocation11 + $0xb90] sm:$0xff]
        %v2284 = vld [vmem:[#allocation11 + $0xb98] sm:$0xff]
        %v2285 = vld [vmem:[#allocation11 + $0xba0] sm:$0xff]
        %v2286 = vld [vmem:[#allocation11 + $0xba8] sm:$0xff]
        %v2287 = vld [vmem:[#allocation11 + $0xbb0] sm:$0xff]
        %v2288 = vld [vmem:[#allocation11 + $0xbb8] sm:$0xff]
        %v2289 = vld [vmem:[#allocation11 + $0xbc0] sm:$0xff]
        %v2290 = vld [vmem:[#allocation11 + $0xbc8] sm:$0xff]
        %v2291 = vld [vmem:[#allocation11 + $0xbd0] sm:$0xff]
        %v2292 = vld [vmem:[#allocation11 + $0xbd8] sm:$0xff]
        %v2293 = vld [vmem:[#allocation11 + $0xbe0] sm:$0xff]
        %v2294 = vld [vmem:[#allocation11 + $0xbe8] sm:$0xff]
        %v2295 = vld [vmem:[#allocation11 + $0xbf0] sm:$0xff]
        %v2296 = vld [vmem:[#allocation11 + $0xbf8] sm:$0xff]
        %v2297 = vld [vmem:[#allocation11 + $0xc00] sm:$0xff]
        %v2298 = vld [vmem:[#allocation11 + $0xc08] sm:$0xff]
        %v2299 = vld [vmem:[#allocation11 + $0xc10] sm:$0xff]
        %v2300 = vld [vmem:[#allocation11 + $0xc18] sm:$0xff]
        %v2301 = vld [vmem:[#allocation11 + $0xc20] sm:$0xff]
        %v2302 = vld [vmem:[#allocation11 + $0xc28] sm:$0xff]
        %v2303 = vld [vmem:[#allocation11 + $0xc30] sm:$0xff]
        %v2304 = vld [vmem:[#allocation11 + $0xc38] sm:$0xff]
        %v2305 = vld [vmem:[#allocation11 + $0xc40] sm:$0xff]
        %v2306 = vld [vmem:[#allocation11 + $0xc48] sm:$0xff]
        %v2307 = vld [vmem:[#allocation11 + $0xc50] sm:$0xff]
        %v2308 = vld [vmem:[#allocation11 + $0xc58] sm:$0xff]
        %v2309 = vld [vmem:[#allocation11 + $0xc60] sm:$0xff]
        %v2310 = vld [vmem:[#allocation11 + $0xc68] sm:$0xff]
        %v2311 = vld [vmem:[#allocation11 + $0xc70] sm:$0xff]
        %v2312 = vld [vmem:[#allocation11 + $0xc78] sm:$0xff]
        %v2313 = vld [vmem:[#allocation11 + $0xc80] sm:$0xff]
        %v2314 = vld [vmem:[#allocation11 + $0xc88] sm:$0xff]
        %v2315 = vld [vmem:[#allocation11 + $0xc90] sm:$0xff]
        %v2316 = vld [vmem:[#allocation11 + $0xc98] sm:$0xff]
        %v2317 = vld [vmem:[#allocation11 + $0xca0] sm:$0xff]
        %v2318 = vld [vmem:[#allocation11 + $0xca8] sm:$0xff]
        %v2319 = vld [vmem:[#allocation11 + $0xcb0] sm:$0xff]
        %v2320 = vld [vmem:[#allocation11 + $0xcb8] sm:$0xff]
        %v2321 = vld [vmem:[#allocation11 + $0xcc0] sm:$0xff]
        %v2322 = vld [vmem:[#allocation11 + $0xcc8] sm:$0xff]
        %v2323 = vld [vmem:[#allocation11 + $0xcd0] sm:$0xff]
        %v2324 = vld [vmem:[#allocation11 + $0xcd8] sm:$0xff]
        %v2325 = vld [vmem:[#allocation11 + $0xce0] sm:$0xff]
        %v2326 = vld [vmem:[#allocation11 + $0xce8] sm:$0xff]
        %v2327 = vld [vmem:[#allocation11 + $0xcf0] sm:$0xff]
        %v2328 = vld [vmem:[#allocation11 + $0xcf8] sm:$0xff]
        %v2329 = vld [vmem:[#allocation11 + $0xd00] sm:$0xff]
        %v2330 = vld [vmem:[#allocation11 + $0xd08] sm:$0xff]
        %v2331 = vld [vmem:[#allocation11 + $0xd10] sm:$0xff]
        %v2332 = vld [vmem:[#allocation11 + $0xd18] sm:$0xff]
        %v2333 = vld [vmem:[#allocation11 + $0xd20] sm:$0xff]
        %v2334 = vld [vmem:[#allocation11 + $0xd28] sm:$0xff]
        %v2335 = vld [vmem:[#allocation11 + $0xd30] sm:$0xff]
        %v2336 = vld [vmem:[#allocation11 + $0xd38] sm:$0xff]
        %v2337 = vld [vmem:[#allocation11 + $0xd40] sm:$0xff]
        %v2338 = vld [vmem:[#allocation11 + $0xd48] sm:$0xff]
        %v2339 = vld [vmem:[#allocation11 + $0xd50] sm:$0xff]
        %v2340 = vld [vmem:[#allocation11 + $0xd58] sm:$0xff]
        %v2341 = vld [vmem:[#allocation11 + $0xd60] sm:$0xff]
        %v2342 = vld [vmem:[#allocation11 + $0xd68] sm:$0xff]
        %v2343 = vld [vmem:[#allocation11 + $0xd70] sm:$0xff]
        %v2344 = vld [vmem:[#allocation11 + $0xd78] sm:$0xff]
        %v2345 = vld [vmem:[#allocation11 + $0xd80] sm:$0xff]
        %v2346 = vld [vmem:[#allocation11 + $0xd88] sm:$0xff]
        %v2347 = vld [vmem:[#allocation11 + $0xd90] sm:$0xff]
        %v2348 = vld [vmem:[#allocation11 + $0xd98] sm:$0xff]
        %v2349 = vld [vmem:[#allocation11 + $0xda0] sm:$0xff]
        %v2350 = vld [vmem:[#allocation11 + $0xda8] sm:$0xff]
        %v2351 = vld [vmem:[#allocation11 + $0xdb0] sm:$0xff]
        %v2352 = vld [vmem:[#allocation11 + $0xdb8] sm:$0xff]
        %v2353 = vld [vmem:[#allocation11 + $0xdc0] sm:$0xff]
        %v2354 = vld [vmem:[#allocation11 + $0xdc8] sm:$0xff]
        %v2355 = vld [vmem:[#allocation11 + $0xdd0] sm:$0xff]
        %v2356 = vld [vmem:[#allocation11 + $0xdd8] sm:$0xff]
        %v2357 = vld [vmem:[#allocation11 + $0xde0] sm:$0xff]
        %v2358 = vld [vmem:[#allocation11 + $0xde8] sm:$0xff]
        %v2359 = vld [vmem:[#allocation11 + $0xdf0] sm:$0xff]
        %v2360 = vld [vmem:[#allocation11 + $0xdf8] sm:$0xff]
        %v2361 = vld [vmem:[#allocation11 + $0xe00] sm:$0xff]
        %v2362 = vld [vmem:[#allocation11 + $0xe08] sm:$0xff]
        %2363 = vmatpush.msra.mxu0 %v2003
        %2364 = vmatpush.msra.mxu0 %v1997
        %2365 = vmatpush.msra.mxu0 %v1991
        %2366 = vmatpush.msra.mxu0 %v1985
        %2367 = vmatpush.msra.mxu0 %v1979
        %2368 = vmatpush.msra.mxu0 %v1973
        %2369 = vmatpush.msra.mxu0 %v1967
        %2370 = vmatpush.msra.mxu0 %v1961
        %2371 = vmatpush.msra.mxu0 %v1955
        %2372 = vmatpush.msra.mxu0 %v1949
        %2373 = vmatpush.msra.mxu0 %v1943
        %2374 = vmatpush.msra.mxu0 %v1937
        %2375 = vmatpush.msra.mxu0 %v1931
        %2376 = vmatpush.msra.mxu0 %v1925
        %2377 = vmatpush.msra.mxu0 %v1919
        %2378 = vmatpush.msra.mxu0 %v1913
        %2379 = vmatmul.f32.gmra.mxu0 %v854
        %v2380 = vpop.f32.mrf.mxu0
        %v2381 = vadd.f32 0.0, %v2380
        %2382 = vdwg.mxu0
        %2383 = vmatpush.msra.mxu0 %v2099
        %2384 = vmatpush.msra.mxu0 %v2093
        %2385 = vmatpush.msra.mxu0 %v2087
        %2386 = vmatpush.msra.mxu0 %v2081
        %2387 = vmatpush.msra.mxu0 %v2075
        %2388 = vmatpush.msra.mxu0 %v2069
        %2389 = vmatpush.msra.mxu0 %v2063
        %2390 = vmatpush.msra.mxu0 %v2057
        %2391 = vmatpush.msra.mxu0 %v2051
        %2392 = vmatpush.msra.mxu0 %v2045
        %2393 = vmatpush.msra.mxu0 %v2039
        %2394 = vmatpush.msra.mxu0 %v2033
        %2395 = vmatpush.msra.mxu0 %v2027
        %2396 = vmatpush.msra.mxu0 %v2021
        %2397 = vmatpush.msra.mxu0 %v2015
        %2398 = vmatpush.msra.mxu0 %v2009
        %2399 = vmatmul.f32.gmra.mxu0 %v855
        %v2400 = vpop.f32.mrf.mxu0
        %v2401 = vadd.f32 %v2381, %v2400
        %2402 = vdwg.mxu0
        %2403 = vmatpush.msra.mxu0 %v2195
        %2404 = vmatpush.msra.mxu0 %v2189
        %2405 = vmatpush.msra.mxu0 %v2183
        %2406 = vmatpush.msra.mxu0 %v2177
        %2407 = vmatpush.msra.mxu0 %v2171
        %2408 = vmatpush.msra.mxu0 %v2165
        %2409 = vmatpush.msra.mxu0 %v2159
        %2410 = vmatpush.msra.mxu0 %v2153
        %2411 = vmatpush.msra.mxu0 %v2147
        %2412 = vmatpush.msra.mxu0 %v2141
        %2413 = vmatpush.msra.mxu0 %v2135
        %2414 = vmatpush.msra.mxu0 %v2129
        %2415 = vmatpush.msra.mxu0 %v2123
        %2416 = vmatpush.msra.mxu0 %v2117
        %2417 = vmatpush.msra.mxu0 %v2111
        %2418 = vmatpush.msra.mxu0 %v2105
        %2419 = vmatmul.f32.gmra.mxu0 %v856
        %v2420 = vpop.f32.mrf.mxu0
        %v2421 = vadd.f32 %v2401, %v2420
        %2422 = vdwg.mxu0
        %2423 = vmatpush.msra.mxu0 %v2291
        %2424 = vmatpush.msra.mxu0 %v2285
        %2425 = vmatpush.msra.mxu0 %v2279
        %2426 = vmatpush.msra.mxu0 %v2273
        %2427 = vmatpush.msra.mxu0 %v2267
        %2428 = vmatpush.msra.mxu0 %v2261
        %2429 = vmatpush.msra.mxu0 %v2255
        %2430 = vmatpush.msra.mxu0 %v2249
        %2431 = vmatpush.msra.mxu0 %v2243
        %2432 = vmatpush.msra.mxu0 %v2237
        %2433 = vmatpush.msra.mxu0 %v2231
        %2434 = vmatpush.msra.mxu0 %v2225
        %2435 = vmatpush.msra.mxu0 %v2219
        %2436 = vmatpush.msra.mxu0 %v2213
        %2437 = vmatpush.msra.mxu0 %v2207
        %2438 = vmatpush.msra.mxu0 %v2201
        %2439 = vmatmul.f32.gmra.mxu0 %v857
        %v2440 = vpop.f32.mrf.mxu0
        %v2441 = vadd.f32 %v2421, %v2440
        %2442 = vdwg.mxu0
        %2443 = vmatpush.msra.mxu0 0.0
        %2444 = vmatpush.msra.mxu0 0.0
        %2445 = vmatpush.msra.mxu0 0.0
        %2446 = vmatpush.msra.mxu0 0.0
        %2447 = vmatpush.msra.mxu0 0.0
        %2448 = vmatpush.msra.mxu0 %v2357
        %2449 = vmatpush.msra.mxu0 %v2351
        %2450 = vmatpush.msra.mxu0 %v2345
        %2451 = vmatpush.msra.mxu0 %v2339
        %2452 = vmatpush.msra.mxu0 %v2333
        %2453 = vmatpush.msra.mxu0 %v2327
        %2454 = vmatpush.msra.mxu0 %v2321
        %2455 = vmatpush.msra.mxu0 %v2315
        %2456 = vmatpush.msra.mxu0 %v2309
        %2457 = vmatpush.msra.mxu0 %v2303
        %2458 = vmatpush.msra.mxu0 %v2297
        %2459 = vmatmul.f32.gmra.mxu0 %v1311
        %v2460 = vpop.f32.mrf.mxu0
        %v2461 = vadd.f32 %v2441, %v2460
        %2462 = vdwg.mxu0
        %2463 = vmatpush.msra.mxu0 %v2004
        %2464 = vmatpush.msra.mxu0 %v1998
        %2465 = vmatpush.msra.mxu0 %v1992
        %2466 = vmatpush.msra.mxu0 %v1986
        %2467 = vmatpush.msra.mxu0 %v1980
        %2468 = vmatpush.msra.mxu0 %v1974
        %2469 = vmatpush.msra.mxu0 %v1968
        %2470 = vmatpush.msra.mxu0 %v1962
        %2471 = vmatpush.msra.mxu0 %v1956
        %2472 = vmatpush.msra.mxu0 %v1950
        %2473 = vmatpush.msra.mxu0 %v1944
        %2474 = vmatpush.msra.mxu0 %v1938
        %2475 = vmatpush.msra.mxu0 %v1932
        %2476 = vmatpush.msra.mxu0 %v1926
        %2477 = vmatpush.msra.mxu0 %v1920
        %2478 = vmatpush.msra.mxu0 %v1914
        %2479 = vmatmul.f32.gmra.mxu0 %v854
        %v2480 = vpop.f32.mrf.mxu0
        %v2481 = vadd.f32 0.0, %v2480
        %2482 = vdwg.mxu0
        %2483 = vmatpush.msra.mxu0 %v2100
        %2484 = vmatpush.msra.mxu0 %v2094
        %2485 = vmatpush.msra.mxu0 %v2088
        %2486 = vmatpush.msra.mxu0 %v2082
        %2487 = vmatpush.msra.mxu0 %v2076
        %2488 = vmatpush.msra.mxu0 %v2070
        %2489 = vmatpush.msra.mxu0 %v2064
        %2490 = vmatpush.msra.mxu0 %v2058
        %2491 = vmatpush.msra.mxu0 %v2052
        %2492 = vmatpush.msra.mxu0 %v2046
        %2493 = vmatpush.msra.mxu0 %v2040
        %2494 = vmatpush.msra.mxu0 %v2034
        %2495 = vmatpush.msra.mxu0 %v2028
        %2496 = vmatpush.msra.mxu0 %v2022
        %2497 = vmatpush.msra.mxu0 %v2016
        %2498 = vmatpush.msra.mxu0 %v2010
        %2499 = vmatmul.f32.gmra.mxu0 %v855
        %v2500 = vpop.f32.mrf.mxu0
        %v2501 = vadd.f32 %v2481, %v2500
        %2502 = vdwg.mxu0
        %2503 = vmatpush.msra.mxu0 %v2196
        %2504 = vmatpush.msra.mxu0 %v2190
        %2505 = vmatpush.msra.mxu0 %v2184
        %2506 = vmatpush.msra.mxu0 %v2178
        %2507 = vmatpush.msra.mxu0 %v2172
        %2508 = vmatpush.msra.mxu0 %v2166
        %2509 = vmatpush.msra.mxu0 %v2160
        %2510 = vmatpush.msra.mxu0 %v2154
        %2511 = vmatpush.msra.mxu0 %v2148
        %2512 = vmatpush.msra.mxu0 %v2142
        %2513 = vmatpush.msra.mxu0 %v2136
        %2514 = vmatpush.msra.mxu0 %v2130
        %2515 = vmatpush.msra.mxu0 %v2124
        %2516 = vmatpush.msra.mxu0 %v2118
        %2517 = vmatpush.msra.mxu0 %v2112
        %2518 = vmatpush.msra.mxu0 %v2106
        %2519 = vmatmul.f32.gmra.mxu0 %v856
        %v2520 = vpop.f32.mrf.mxu0
        %v2521 = vadd.f32 %v2501, %v2520
        %2522 = vdwg.mxu0
        %2523 = vmatpush.msra.mxu0 %v2292
        %2524 = vmatpush.msra.mxu0 %v2286
        %2525 = vmatpush.msra.mxu0 %v2280
        %2526 = vmatpush.msra.mxu0 %v2274
        %2527 = vmatpush.msra.mxu0 %v2268
        %2528 = vmatpush.msra.mxu0 %v2262
        %2529 = vmatpush.msra.mxu0 %v2256
        %2530 = vmatpush.msra.mxu0 %v2250
        %2531 = vmatpush.msra.mxu0 %v2244
        %2532 = vmatpush.msra.mxu0 %v2238
        %2533 = vmatpush.msra.mxu0 %v2232
        %2534 = vmatpush.msra.mxu0 %v2226
        %2535 = vmatpush.msra.mxu0 %v2220
        %2536 = vmatpush.msra.mxu0 %v2214
        %2537 = vmatpush.msra.mxu0 %v2208
        %2538 = vmatpush.msra.mxu0 %v2202
        %2539 = vmatmul.f32.gmra.mxu0 %v857
        %v2540 = vpop.f32.mrf.mxu0
        %v2541 = vadd.f32 %v2521, %v2540
        %2542 = vdwg.mxu0
        %2543 = vmatpush.msra.mxu0 0.0
        %2544 = vmatpush.msra.mxu0 0.0
        %2545 = vmatpush.msra.mxu0 0.0
        %2546 = vmatpush.msra.mxu0 0.0
        %2547 = vmatpush.msra.mxu0 0.0
        %2548 = vmatpush.msra.mxu0 %v2358
        %2549 = vmatpush.msra.mxu0 %v2352
        %2550 = vmatpush.msra.mxu0 %v2346
        %2551 = vmatpush.msra.mxu0 %v2340
        %2552 = vmatpush.msra.mxu0 %v2334
        %2553 = vmatpush.msra.mxu0 %v2328
        %2554 = vmatpush.msra.mxu0 %v2322
        %2555 = vmatpush.msra.mxu0 %v2316
        %2556 = vmatpush.msra.mxu0 %v2310
        %2557 = vmatpush.msra.mxu0 %v2304
        %2558 = vmatpush.msra.mxu0 %v2298
        %2559 = vmatmul.f32.gmra.mxu0 %v1311
        %v2560 = vpop.f32.mrf.mxu0
        %v2561 = vadd.f32 %v2541, %v2560
        %2562 = vdwg.mxu0
        %2563 = vmatpush.msra.mxu0 %v2005
        %2564 = vmatpush.msra.mxu0 %v1999
        %2565 = vmatpush.msra.mxu0 %v1993
        %2566 = vmatpush.msra.mxu0 %v1987
        %2567 = vmatpush.msra.mxu0 %v1981
        %2568 = vmatpush.msra.mxu0 %v1975
        %2569 = vmatpush.msra.mxu0 %v1969
        %2570 = vmatpush.msra.mxu0 %v1963
        %2571 = vmatpush.msra.mxu0 %v1957
        %2572 = vmatpush.msra.mxu0 %v1951
        %2573 = vmatpush.msra.mxu0 %v1945
        %2574 = vmatpush.msra.mxu0 %v1939
        %2575 = vmatpush.msra.mxu0 %v1933
        %2576 = vmatpush.msra.mxu0 %v1927
        %2577 = vmatpush.msra.mxu0 %v1921
        %2578 = vmatpush.msra.mxu0 %v1915
        %2579 = vmatmul.f32.gmra.mxu0 %v854
        %v2580 = vpop.f32.mrf.mxu0
        %v2581 = vadd.f32 0.0, %v2580
        %2582 = vdwg.mxu0
        %2583 = vmatpush.msra.mxu0 %v2101
        %2584 = vmatpush.msra.mxu0 %v2095
        %2585 = vmatpush.msra.mxu0 %v2089
        %2586 = vmatpush.msra.mxu0 %v2083
        %2587 = vmatpush.msra.mxu0 %v2077
        %2588 = vmatpush.msra.mxu0 %v2071
        %2589 = vmatpush.msra.mxu0 %v2065
        %2590 = vmatpush.msra.mxu0 %v2059
        %2591 = vmatpush.msra.mxu0 %v2053
        %2592 = vmatpush.msra.mxu0 %v2047
        %2593 = vmatpush.msra.mxu0 %v2041
        %2594 = vmatpush.msra.mxu0 %v2035
        %2595 = vmatpush.msra.mxu0 %v2029
        %2596 = vmatpush.msra.mxu0 %v2023
        %2597 = vmatpush.msra.mxu0 %v2017
        %2598 = vmatpush.msra.mxu0 %v2011
        %2599 = vmatmul.f32.gmra.mxu0 %v855
        %v2600 = vpop.f32.mrf.mxu0
        %v2601 = vadd.f32 %v2581, %v2600
        %2602 = vdwg.mxu0
        %2603 = vmatpush.msra.mxu0 %v2197
        %2604 = vmatpush.msra.mxu0 %v2191
        %2605 = vmatpush.msra.mxu0 %v2185
        %2606 = vmatpush.msra.mxu0 %v2179
        %2607 = vmatpush.msra.mxu0 %v2173
        %2608 = vmatpush.msra.mxu0 %v2167
        %2609 = vmatpush.msra.mxu0 %v2161
        %2610 = vmatpush.msra.mxu0 %v2155
        %2611 = vmatpush.msra.mxu0 %v2149
        %2612 = vmatpush.msra.mxu0 %v2143
        %2613 = vmatpush.msra.mxu0 %v2137
        %2614 = vmatpush.msra.mxu0 %v2131
        %2615 = vmatpush.msra.mxu0 %v2125
        %2616 = vmatpush.msra.mxu0 %v2119
        %2617 = vmatpush.msra.mxu0 %v2113
        %2618 = vmatpush.msra.mxu0 %v2107
        %2619 = vmatmul.f32.gmra.mxu0 %v856
        %v2620 = vpop.f32.mrf.mxu0
        %v2621 = vadd.f32 %v2601, %v2620
        %2622 = vdwg.mxu0
        %2623 = vmatpush.msra.mxu0 %v2293
        %2624 = vmatpush.msra.mxu0 %v2287
        %2625 = vmatpush.msra.mxu0 %v2281
        %2626 = vmatpush.msra.mxu0 %v2275
        %2627 = vmatpush.msra.mxu0 %v2269
        %2628 = vmatpush.msra.mxu0 %v2263
        %2629 = vmatpush.msra.mxu0 %v2257
        %2630 = vmatpush.msra.mxu0 %v2251
        %2631 = vmatpush.msra.mxu0 %v2245
        %2632 = vmatpush.msra.mxu0 %v2239
        %2633 = vmatpush.msra.mxu0 %v2233
        %2634 = vmatpush.msra.mxu0 %v2227
        %2635 = vmatpush.msra.mxu0 %v2221
        %2636 = vmatpush.msra.mxu0 %v2215
        %2637 = vmatpush.msra.mxu0 %v2209
        %2638 = vmatpush.msra.mxu0 %v2203
        %2639 = vmatmul.f32.gmra.mxu0 %v857
        %v2640 = vpop.f32.mrf.mxu0
        %v2641 = vadd.f32 %v2621, %v2640
        %2642 = vdwg.mxu0
        %2643 = vmatpush.msra.mxu0 0.0
        %2644 = vmatpush.msra.mxu0 0.0
        %2645 = vmatpush.msra.mxu0 0.0
        %2646 = vmatpush.msra.mxu0 0.0
        %2647 = vmatpush.msra.mxu0 0.0
        %2648 = vmatpush.msra.mxu0 %v2359
        %2649 = vmatpush.msra.mxu0 %v2353
        %2650 = vmatpush.msra.mxu0 %v2347
        %2651 = vmatpush.msra.mxu0 %v2341
        %2652 = vmatpush.msra.mxu0 %v2335
        %2653 = vmatpush.msra.mxu0 %v2329
        %2654 = vmatpush.msra.mxu0 %v2323
        %2655 = vmatpush.msra.mxu0 %v2317
        %2656 = vmatpush.msra.mxu0 %v2311
        %2657 = vmatpush.msra.mxu0 %v2305
        %2658 = vmatpush.msra.mxu0 %v2299
        %2659 = vmatmul.f32.gmra.mxu0 %v1311
        %v2660 = vpop.f32.mrf.mxu0
        %v2661 = vadd.f32 %v2641, %v2660
        %2662 = vdwg.mxu0
        %2663 = vmatpush.msra.mxu0 %v2006
        %2664 = vmatpush.msra.mxu0 %v2000
        %2665 = vmatpush.msra.mxu0 %v1994
        %2666 = vmatpush.msra.mxu0 %v1988
        %2667 = vmatpush.msra.mxu0 %v1982
        %2668 = vmatpush.msra.mxu0 %v1976
        %2669 = vmatpush.msra.mxu0 %v1970
        %2670 = vmatpush.msra.mxu0 %v1964
        %2671 = vmatpush.msra.mxu0 %v1958
        %2672 = vmatpush.msra.mxu0 %v1952
        %2673 = vmatpush.msra.mxu0 %v1946
        %2674 = vmatpush.msra.mxu0 %v1940
        %2675 = vmatpush.msra.mxu0 %v1934
        %2676 = vmatpush.msra.mxu0 %v1928
        %2677 = vmatpush.msra.mxu0 %v1922
        %2678 = vmatpush.msra.mxu0 %v1916
        %2679 = vmatmul.f32.gmra.mxu0 %v854
        %v2680 = vpop.f32.mrf.mxu0
        %v2681 = vadd.f32 0.0, %v2680
        %2682 = vdwg.mxu0
        %2683 = vmatpush.msra.mxu0 %v2102
        %2684 = vmatpush.msra.mxu0 %v2096
        %2685 = vmatpush.msra.mxu0 %v2090
        %2686 = vmatpush.msra.mxu0 %v2084
        %2687 = vmatpush.msra.mxu0 %v2078
        %2688 = vmatpush.msra.mxu0 %v2072
        %2689 = vmatpush.msra.mxu0 %v2066
        %2690 = vmatpush.msra.mxu0 %v2060
        %2691 = vmatpush.msra.mxu0 %v2054
        %2692 = vmatpush.msra.mxu0 %v2048
        %2693 = vmatpush.msra.mxu0 %v2042
        %2694 = vmatpush.msra.mxu0 %v2036
        %2695 = vmatpush.msra.mxu0 %v2030
        %2696 = vmatpush.msra.mxu0 %v2024
        %2697 = vmatpush.msra.mxu0 %v2018
        %2698 = vmatpush.msra.mxu0 %v2012
        %2699 = vmatmul.f32.gmra.mxu0 %v855
        %v2700 = vpop.f32.mrf.mxu0
        %v2701 = vadd.f32 %v2681, %v2700
        %2702 = vdwg.mxu0
        %2703 = vmatpush.msra.mxu0 %v2198
        %2704 = vmatpush.msra.mxu0 %v2192
        %2705 = vmatpush.msra.mxu0 %v2186
        %2706 = vmatpush.msra.mxu0 %v2180
        %2707 = vmatpush.msra.mxu0 %v2174
        %2708 = vmatpush.msra.mxu0 %v2168
        %2709 = vmatpush.msra.mxu0 %v2162
        %2710 = vmatpush.msra.mxu0 %v2156
        %2711 = vmatpush.msra.mxu0 %v2150
        %2712 = vmatpush.msra.mxu0 %v2144
        %2713 = vmatpush.msra.mxu0 %v2138
        %2714 = vmatpush.msra.mxu0 %v2132
        %2715 = vmatpush.msra.mxu0 %v2126
        %2716 = vmatpush.msra.mxu0 %v2120
        %2717 = vmatpush.msra.mxu0 %v2114
        %2718 = vmatpush.msra.mxu0 %v2108
        %2719 = vmatmul.f32.gmra.mxu0 %v856
        %v2720 = vpop.f32.mrf.mxu0
        %v2721 = vadd.f32 %v2701, %v2720
        %2722 = vdwg.mxu0
        %2723 = vmatpush.msra.mxu0 %v2294
        %2724 = vmatpush.msra.mxu0 %v2288
        %2725 = vmatpush.msra.mxu0 %v2282
        %2726 = vmatpush.msra.mxu0 %v2276
        %2727 = vmatpush.msra.mxu0 %v2270
        %2728 = vmatpush.msra.mxu0 %v2264
        %2729 = vmatpush.msra.mxu0 %v2258
        %2730 = vmatpush.msra.mxu0 %v2252
        %2731 = vmatpush.msra.mxu0 %v2246
        %2732 = vmatpush.msra.mxu0 %v2240
        %2733 = vmatpush.msra.mxu0 %v2234
        %2734 = vmatpush.msra.mxu0 %v2228
        %2735 = vmatpush.msra.mxu0 %v2222
        %2736 = vmatpush.msra.mxu0 %v2216
        %2737 = vmatpush.msra.mxu0 %v2210
        %2738 = vmatpush.msra.mxu0 %v2204
        %2739 = vmatmul.f32.gmra.mxu0 %v857
        %v2740 = vpop.f32.mrf.mxu0
        %v2741 = vadd.f32 %v2721, %v2740
        %2742 = vdwg.mxu0
        %2743 = vmatpush.msra.mxu0 0.0
        %2744 = vmatpush.msra.mxu0 0.0
        %2745 = vmatpush.msra.mxu0 0.0
        %2746 = vmatpush.msra.mxu0 0.0
        %2747 = vmatpush.msra.mxu0 0.0
        %2748 = vmatpush.msra.mxu0 %v2360
        %2749 = vmatpush.msra.mxu0 %v2354
        %2750 = vmatpush.msra.mxu0 %v2348
        %2751 = vmatpush.msra.mxu0 %v2342
        %2752 = vmatpush.msra.mxu0 %v2336
        %2753 = vmatpush.msra.mxu0 %v2330
        %2754 = vmatpush.msra.mxu0 %v2324
        %2755 = vmatpush.msra.mxu0 %v2318
        %2756 = vmatpush.msra.mxu0 %v2312
        %2757 = vmatpush.msra.mxu0 %v2306
        %2758 = vmatpush.msra.mxu0 %v2300
        %2759 = vmatmul.f32.gmra.mxu0 %v1311
        %v2760 = vpop.f32.mrf.mxu0
        %v2761 = vadd.f32 %v2741, %v2760
        %2762 = vdwg.mxu0
        %2763 = vmatpush.msra.mxu0 %v2007
        %2764 = vmatpush.msra.mxu0 %v2001
        %2765 = vmatpush.msra.mxu0 %v1995
        %2766 = vmatpush.msra.mxu0 %v1989
        %2767 = vmatpush.msra.mxu0 %v1983
        %2768 = vmatpush.msra.mxu0 %v1977
        %2769 = vmatpush.msra.mxu0 %v1971
        %2770 = vmatpush.msra.mxu0 %v1965
        %2771 = vmatpush.msra.mxu0 %v1959
        %2772 = vmatpush.msra.mxu0 %v1953
        %2773 = vmatpush.msra.mxu0 %v1947
        %2774 = vmatpush.msra.mxu0 %v1941
        %2775 = vmatpush.msra.mxu0 %v1935
        %2776 = vmatpush.msra.mxu0 %v1929
        %2777 = vmatpush.msra.mxu0 %v1923
        %2778 = vmatpush.msra.mxu0 %v1917
        %2779 = vmatmul.f32.gmra.mxu0 %v854
        %v2780 = vpop.f32.mrf.mxu0
        %v2781 = vadd.f32 0.0, %v2780
        %2782 = vdwg.mxu0
        %2783 = vmatpush.msra.mxu0 %v2103
        %2784 = vmatpush.msra.mxu0 %v2097
        %2785 = vmatpush.msra.mxu0 %v2091
        %2786 = vmatpush.msra.mxu0 %v2085
        %2787 = vmatpush.msra.mxu0 %v2079
        %2788 = vmatpush.msra.mxu0 %v2073
        %2789 = vmatpush.msra.mxu0 %v2067
        %2790 = vmatpush.msra.mxu0 %v2061
        %2791 = vmatpush.msra.mxu0 %v2055
        %2792 = vmatpush.msra.mxu0 %v2049
        %2793 = vmatpush.msra.mxu0 %v2043
        %2794 = vmatpush.msra.mxu0 %v2037
        %2795 = vmatpush.msra.mxu0 %v2031
        %2796 = vmatpush.msra.mxu0 %v2025
        %2797 = vmatpush.msra.mxu0 %v2019
        %2798 = vmatpush.msra.mxu0 %v2013
        %2799 = vmatmul.f32.gmra.mxu0 %v855
        %v2800 = vpop.f32.mrf.mxu0
        %v2801 = vadd.f32 %v2781, %v2800
        %2802 = vdwg.mxu0
        %2803 = vmatpush.msra.mxu0 %v2199
        %2804 = vmatpush.msra.mxu0 %v2193
        %2805 = vmatpush.msra.mxu0 %v2187
        %2806 = vmatpush.msra.mxu0 %v2181
        %2807 = vmatpush.msra.mxu0 %v2175
        %2808 = vmatpush.msra.mxu0 %v2169
        %2809 = vmatpush.msra.mxu0 %v2163
        %2810 = vmatpush.msra.mxu0 %v2157
        %2811 = vmatpush.msra.mxu0 %v2151
        %2812 = vmatpush.msra.mxu0 %v2145
        %2813 = vmatpush.msra.mxu0 %v2139
        %2814 = vmatpush.msra.mxu0 %v2133
        %2815 = vmatpush.msra.mxu0 %v2127
        %2816 = vmatpush.msra.mxu0 %v2121
        %2817 = vmatpush.msra.mxu0 %v2115
        %2818 = vmatpush.msra.mxu0 %v2109
        %2819 = vmatmul.f32.gmra.mxu0 %v856
        %v2820 = vpop.f32.mrf.mxu0
        %v2821 = vadd.f32 %v2801, %v2820
        %2822 = vdwg.mxu0
        %2823 = vmatpush.msra.mxu0 %v2295
        %2824 = vmatpush.msra.mxu0 %v2289
        %2825 = vmatpush.msra.mxu0 %v2283
        %2826 = vmatpush.msra.mxu0 %v2277
        %2827 = vmatpush.msra.mxu0 %v2271
        %2828 = vmatpush.msra.mxu0 %v2265
        %2829 = vmatpush.msra.mxu0 %v2259
        %2830 = vmatpush.msra.mxu0 %v2253
        %2831 = vmatpush.msra.mxu0 %v2247
        %2832 = vmatpush.msra.mxu0 %v2241
        %2833 = vmatpush.msra.mxu0 %v2235
        %2834 = vmatpush.msra.mxu0 %v2229
        %2835 = vmatpush.msra.mxu0 %v2223
        %2836 = vmatpush.msra.mxu0 %v2217
        %2837 = vmatpush.msra.mxu0 %v2211
        %2838 = vmatpush.msra.mxu0 %v2205
        %2839 = vmatmul.f32.gmra.mxu0 %v857
        %v2840 = vpop.f32.mrf.mxu0
        %v2841 = vadd.f32 %v2821, %v2840
        %2842 = vdwg.mxu0
        %2843 = vmatpush.msra.mxu0 0.0
        %2844 = vmatpush.msra.mxu0 0.0
        %2845 = vmatpush.msra.mxu0 0.0
        %2846 = vmatpush.msra.mxu0 0.0
        %2847 = vmatpush.msra.mxu0 0.0
        %2848 = vmatpush.msra.mxu0 %v2361
        %2849 = vmatpush.msra.mxu0 %v2355
        %2850 = vmatpush.msra.mxu0 %v2349
        %2851 = vmatpush.msra.mxu0 %v2343
        %2852 = vmatpush.msra.mxu0 %v2337
        %2853 = vmatpush.msra.mxu0 %v2331
        %2854 = vmatpush.msra.mxu0 %v2325
        %2855 = vmatpush.msra.mxu0 %v2319
        %2856 = vmatpush.msra.mxu0 %v2313
        %2857 = vmatpush.msra.mxu0 %v2307
        %2858 = vmatpush.msra.mxu0 %v2301
        %2859 = vmatmul.f32.gmra.mxu0 %v1311
        %v2860 = vpop.f32.mrf.mxu0
        %v2861 = vadd.f32 %v2841, %v2860
        %2862 = vdwg.mxu0
        %2863 = vmatpush.msra.mxu0 %v2008
        %2864 = vmatpush.msra.mxu0 %v2002
        %2865 = vmatpush.msra.mxu0 %v1996
        %2866 = vmatpush.msra.mxu0 %v1990
        %2867 = vmatpush.msra.mxu0 %v1984
        %2868 = vmatpush.msra.mxu0 %v1978
        %2869 = vmatpush.msra.mxu0 %v1972
        %2870 = vmatpush.msra.mxu0 %v1966
        %2871 = vmatpush.msra.mxu0 %v1960
        %2872 = vmatpush.msra.mxu0 %v1954
        %2873 = vmatpush.msra.mxu0 %v1948
        %2874 = vmatpush.msra.mxu0 %v1942
        %2875 = vmatpush.msra.mxu0 %v1936
        %2876 = vmatpush.msra.mxu0 %v1930
        %2877 = vmatpush.msra.mxu0 %v1924
        %2878 = vmatpush.msra.mxu0 %v1918
        %2879 = vmatmul.f32.gmra.mxu0 %v854
        %v2880 = vpop.f32.mrf.mxu0
        %v2881 = vadd.f32 0.0, %v2880
        %2882 = vdwg.mxu0
        %2883 = vmatpush.msra.mxu0 %v2104
        %2884 = vmatpush.msra.mxu0 %v2098
        %2885 = vmatpush.msra.mxu0 %v2092
        %2886 = vmatpush.msra.mxu0 %v2086
        %2887 = vmatpush.msra.mxu0 %v2080
        %2888 = vmatpush.msra.mxu0 %v2074
        %2889 = vmatpush.msra.mxu0 %v2068
        %2890 = vmatpush.msra.mxu0 %v2062
        %2891 = vmatpush.msra.mxu0 %v2056
        %2892 = vmatpush.msra.mxu0 %v2050
        %2893 = vmatpush.msra.mxu0 %v2044
        %2894 = vmatpush.msra.mxu0 %v2038
        %2895 = vmatpush.msra.mxu0 %v2032
        %2896 = vmatpush.msra.mxu0 %v2026
        %2897 = vmatpush.msra.mxu0 %v2020
        %2898 = vmatpush.msra.mxu0 %v2014
        %2899 = vmatmul.f32.gmra.mxu0 %v855
        %v2900 = vpop.f32.mrf.mxu0
        %v2901 = vadd.f32 %v2881, %v2900
        %2902 = vdwg.mxu0
        %2903 = vmatpush.msra.mxu0 %v2200
        %2904 = vmatpush.msra.mxu0 %v2194
        %2905 = vmatpush.msra.mxu0 %v2188
        %2906 = vmatpush.msra.mxu0 %v2182
        %2907 = vmatpush.msra.mxu0 %v2176
        %2908 = vmatpush.msra.mxu0 %v2170
        %2909 = vmatpush.msra.mxu0 %v2164
        %2910 = vmatpush.msra.mxu0 %v2158
        %2911 = vmatpush.msra.mxu0 %v2152
        %2912 = vmatpush.msra.mxu0 %v2146
        %2913 = vmatpush.msra.mxu0 %v2140
        %2914 = vmatpush.msra.mxu0 %v2134
        %2915 = vmatpush.msra.mxu0 %v2128
        %2916 = vmatpush.msra.mxu0 %v2122
        %2917 = vmatpush.msra.mxu0 %v2116
        %2918 = vmatpush.msra.mxu0 %v2110
        %2919 = vmatmul.f32.gmra.mxu0 %v856
        %v2920 = vpop.f32.mrf.mxu0
        %v2921 = vadd.f32 %v2901, %v2920
        %2922 = vdwg.mxu0
        %2923 = vmatpush.msra.mxu0 %v2296
        %2924 = vmatpush.msra.mxu0 %v2290
        %2925 = vmatpush.msra.mxu0 %v2284
        %2926 = vmatpush.msra.mxu0 %v2278
        %2927 = vmatpush.msra.mxu0 %v2272
        %2928 = vmatpush.msra.mxu0 %v2266
        %2929 = vmatpush.msra.mxu0 %v2260
        %2930 = vmatpush.msra.mxu0 %v2254
        %2931 = vmatpush.msra.mxu0 %v2248
        %2932 = vmatpush.msra.mxu0 %v2242
        %2933 = vmatpush.msra.mxu0 %v2236
        %2934 = vmatpush.msra.mxu0 %v2230
        %2935 = vmatpush.msra.mxu0 %v2224
        %2936 = vmatpush.msra.mxu0 %v2218
        %2937 = vmatpush.msra.mxu0 %v2212
        %2938 = vmatpush.msra.mxu0 %v2206
        %2939 = vmatmul.f32.gmra.mxu0 %v857
        %v2940 = vpop.f32.mrf.mxu0
        %v2941 = vadd.f32 %v2921, %v2940
        %2942 = vdwg.mxu0
        %2943 = vmatpush.msra.mxu0 0.0
        %2944 = vmatpush.msra.mxu0 0.0
        %2945 = vmatpush.msra.mxu0 0.0
        %2946 = vmatpush.msra.mxu0 0.0
        %2947 = vmatpush.msra.mxu0 0.0
        %2948 = vmatpush.msra.mxu0 %v2362
        %2949 = vmatpush.msra.mxu0 %v2356
        %2950 = vmatpush.msra.mxu0 %v2350
        %2951 = vmatpush.msra.mxu0 %v2344
        %2952 = vmatpush.msra.mxu0 %v2338
        %2953 = vmatpush.msra.mxu0 %v2332
        %2954 = vmatpush.msra.mxu0 %v2326
        %2955 = vmatpush.msra.mxu0 %v2320
        %2956 = vmatpush.msra.mxu0 %v2314
        %2957 = vmatpush.msra.mxu0 %v2308
        %2958 = vmatpush.msra.mxu0 %v2302
        %2959 = vmatmul.f32.gmra.mxu0 %v1311
        %v2960 = vpop.f32.mrf.mxu0
        %v2961 = vadd.f32 %v2941, %v2960
        %2962 = vdwg.mxu0
        %v2963 = vmax.f32 %v1411, %v2461
        %v2964 = vmax.f32 %v1511, %v2561
        %v2965 = vmax.f32 %v1611, %v2661
        %v2966 = vmax.f32 %v1711, %v2761
        %v2967 = vmax.f32 %v1811, %v2861
        %v2968 = vmax.f32 %v1911, %v2961
        %v2969 = vld [vmem:[#allocation13] sm:$0x3f]
        %v2971 = vperm.slane %v2969, 0
        %v2972 = vperm.slane %v2969, 1
        %v2973 = vperm.slane %v2969, 2
        %v2974 = vperm.slane %v2969, 3
        %v2975 = vperm.slane %v2969, 4
        %v2976 = vperm.slane %v2969, 5
        %v2983 = vadd.f32 %v2963, %v2971
        %v2984 = vadd.f32 %v2964, %v2972
        %v2985 = vadd.f32 %v2965, %v2973
        %v2986 = vadd.f32 %v2966, %v2974
        %v2987 = vadd.f32 %v2967, %v2975
        %v2988 = vadd.f32 %v2968, %v2976
        %v2989 = vmax.f32 %v2983, 0.0
        %v2990 = vmax.f32 %v2984, 0.0
        %v2991 = vmax.f32 %v2985, 0.0
        %v2992 = vmax.f32 %v2986, 0.0
        %v2993 = vmax.f32 %v2987, 0.0
        %v2994 = vmax.f32 %v2988, 0.0
        %v2995 = vld [vmem:[#allocation14] sm:$0xff]
        %v2996 = vld [vmem:[#allocation14 + $0x8] sm:$0xff]
        %v2997 = vld [vmem:[#allocation14 + $0x10] sm:$0xff]
        %v2998 = vld [vmem:[#allocation14 + $0x18] sm:$0xff]
        %v2999 = vld [vmem:[#allocation14 + $0x20] sm:$0xff]
        %v3000 = vld [vmem:[#allocation14 + $0x28] sm:$0xff]
        %v3001 = vld [vmem:[#allocation14 + $0x30] sm:$0xff]
        %v3002 = vld [vmem:[#allocation14 + $0x38] sm:$0xff]
        %v3003 = vld [vmem:[#allocation14 + $0x40] sm:$0xff]
        %v3004 = vld [vmem:[#allocation14 + $0x48] sm:$0xff]
        %v3005 = vld [vmem:[#allocation14 + $0x50] sm:$0xff]
        %v3006 = vld [vmem:[#allocation14 + $0x58] sm:$0xff]
        %v3007 = vld [vmem:[#allocation14 + $0x60] sm:$0xff]
        %v3008 = vld [vmem:[#allocation14 + $0x68] sm:$0xff]
        %v3009 = vld [vmem:[#allocation14 + $0x70] sm:$0xff]
        %v3010 = vld [vmem:[#allocation14 + $0x78] sm:$0xff]
        %v3011 = vld [vmem:[#allocation14 + $0x80] sm:$0xff]
        %v3012 = vld [vmem:[#allocation14 + $0x88] sm:$0xff]
        %v3013 = vld [vmem:[#allocation14 + $0x90] sm:$0xff]
        %v3014 = vld [vmem:[#allocation14 + $0x98] sm:$0xff]
        %v3015 = vld [vmem:[#allocation14 + $0xa0] sm:$0xff]
        %v3016 = vld [vmem:[#allocation14 + $0xa8] sm:$0xff]
        %v3017 = vld [vmem:[#allocation14 + $0xb0] sm:$0xff]
        %v3018 = vld [vmem:[#allocation14 + $0xb8] sm:$0xff]
        %v3019 = vld [vmem:[#allocation14 + $0xc0] sm:$0xff]
        %v3020 = vld [vmem:[#allocation14 + $0xc8] sm:$0xff]
        %v3021 = vld [vmem:[#allocation14 + $0xd0] sm:$0xff]
        %v3022 = vld [vmem:[#allocation14 + $0xd8] sm:$0xff]
        %v3023 = vld [vmem:[#allocation14 + $0xe0] sm:$0xff]
        %v3024 = vld [vmem:[#allocation14 + $0xe8] sm:$0xff]
        %v3025 = vld [vmem:[#allocation14 + $0xf0] sm:$0xff]
        %v3026 = vld [vmem:[#allocation14 + $0xf8] sm:$0xff]
        %v3027 = vld [vmem:[#allocation14 + $0x100] sm:$0xff]
        %v3028 = vld [vmem:[#allocation14 + $0x108] sm:$0xff]
        %v3029 = vld [vmem:[#allocation14 + $0x110] sm:$0xff]
        %v3030 = vld [vmem:[#allocation14 + $0x118] sm:$0xff]
        %v3031 = vld [vmem:[#allocation14 + $0x120] sm:$0xff]
        %v3032 = vld [vmem:[#allocation14 + $0x128] sm:$0xff]
        %v3033 = vld [vmem:[#allocation14 + $0x130] sm:$0xff]
        %v3034 = vld [vmem:[#allocation14 + $0x138] sm:$0xff]
        %v3035 = vld [vmem:[#allocation14 + $0x140] sm:$0xff]
        %v3036 = vld [vmem:[#allocation14 + $0x148] sm:$0xff]
        %v3037 = vld [vmem:[#allocation14 + $0x150] sm:$0xff]
        %v3038 = vld [vmem:[#allocation14 + $0x158] sm:$0xff]
        %v3039 = vld [vmem:[#allocation14 + $0x160] sm:$0xff]
        %v3040 = vld [vmem:[#allocation14 + $0x168] sm:$0xff]
        %v3041 = vld [vmem:[#allocation14 + $0x170] sm:$0xff]
        %v3042 = vld [vmem:[#allocation14 + $0x178] sm:$0xff]
        %v3043 = vld [vmem:[#allocation14 + $0x180] sm:$0xff]
        %v3044 = vld [vmem:[#allocation14 + $0x188] sm:$0xff]
        %v3045 = vld [vmem:[#allocation14 + $0x190] sm:$0xff]
        %v3046 = vld [vmem:[#allocation14 + $0x198] sm:$0xff]
        %v3047 = vld [vmem:[#allocation14 + $0x1a0] sm:$0xff]
        %v3048 = vld [vmem:[#allocation14 + $0x1a8] sm:$0xff]
        %v3049 = vld [vmem:[#allocation14 + $0x1b0] sm:$0xff]
        %v3050 = vld [vmem:[#allocation14 + $0x1b8] sm:$0xff]
        %v3051 = vld [vmem:[#allocation14 + $0x1c0] sm:$0xff]
        %v3052 = vld [vmem:[#allocation14 + $0x1c8] sm:$0xff]
        %v3053 = vld [vmem:[#allocation14 + $0x1d0] sm:$0xff]
        %v3054 = vld [vmem:[#allocation14 + $0x1d8] sm:$0xff]
        %v3055 = vld [vmem:[#allocation14 + $0x1e0] sm:$0xff]
        %v3056 = vld [vmem:[#allocation14 + $0x1e8] sm:$0xff]
        %v3057 = vld [vmem:[#allocation14 + $0x1f0] sm:$0xff]
        %v3058 = vld [vmem:[#allocation14 + $0x1f8] sm:$0xff]
        %v3059 = vld [vmem:[#allocation14 + $0x200] sm:$0xff]
        %v3060 = vld [vmem:[#allocation14 + $0x208] sm:$0xff]
        %v3061 = vld [vmem:[#allocation14 + $0x210] sm:$0xff]
        %v3062 = vld [vmem:[#allocation14 + $0x218] sm:$0xff]
        %v3063 = vld [vmem:[#allocation14 + $0x220] sm:$0xff]
        %v3064 = vld [vmem:[#allocation14 + $0x228] sm:$0xff]
        %v3065 = vld [vmem:[#allocation14 + $0x230] sm:$0xff]
        %v3066 = vld [vmem:[#allocation14 + $0x238] sm:$0xff]
        %v3067 = vld [vmem:[#allocation14 + $0x240] sm:$0xff]
        %v3068 = vld [vmem:[#allocation14 + $0x248] sm:$0xff]
        %v3069 = vld [vmem:[#allocation14 + $0x250] sm:$0xff]
        %v3070 = vld [vmem:[#allocation14 + $0x258] sm:$0xff]
        %v3071 = vld [vmem:[#allocation14 + $0x260] sm:$0xff]
        %v3072 = vld [vmem:[#allocation14 + $0x268] sm:$0xff]
        %v3073 = vld [vmem:[#allocation14 + $0x270] sm:$0xff]
        %v3074 = vld [vmem:[#allocation14 + $0x278] sm:$0xff]
        %v3075 = vld [vmem:[#allocation14 + $0x280] sm:$0xff]
        %v3076 = vld [vmem:[#allocation14 + $0x288] sm:$0xff]
        %v3077 = vld [vmem:[#allocation14 + $0x290] sm:$0xff]
        %v3078 = vld [vmem:[#allocation14 + $0x298] sm:$0xff]
        %v3079 = vld [vmem:[#allocation14 + $0x2a0] sm:$0xff]
        %v3080 = vld [vmem:[#allocation14 + $0x2a8] sm:$0xff]
        %v3081 = vld [vmem:[#allocation14 + $0x2b0] sm:$0xff]
        %v3082 = vld [vmem:[#allocation14 + $0x2b8] sm:$0xff]
        %v3083 = vld [vmem:[#allocation14 + $0x2c0] sm:$0xff]
        %v3084 = vld [vmem:[#allocation14 + $0x2c8] sm:$0xff]
        %v3085 = vld [vmem:[#allocation14 + $0x2d0] sm:$0xff]
        %v3086 = vld [vmem:[#allocation14 + $0x2d8] sm:$0xff]
        %v3087 = vld [vmem:[#allocation14 + $0x2e0] sm:$0xff]
        %v3088 = vld [vmem:[#allocation14 + $0x2e8] sm:$0xff]
        %v3089 = vld [vmem:[#allocation14 + $0x2f0] sm:$0xff]
        %v3090 = vld [vmem:[#allocation14 + $0x2f8] sm:$0xff]
        %v3091 = vld [vmem:[#allocation14 + $0x300] sm:$0xff]
        %v3092 = vld [vmem:[#allocation14 + $0x308] sm:$0xff]
        %v3093 = vld [vmem:[#allocation14 + $0x310] sm:$0xff]
        %v3094 = vld [vmem:[#allocation14 + $0x318] sm:$0xff]
        %v3095 = vld [vmem:[#allocation14 + $0x320] sm:$0xff]
        %v3096 = vld [vmem:[#allocation14 + $0x328] sm:$0xff]
        %v3097 = vld [vmem:[#allocation14 + $0x330] sm:$0xff]
        %v3098 = vld [vmem:[#allocation14 + $0x338] sm:$0xff]
        %v3099 = vld [vmem:[#allocation14 + $0x340] sm:$0xff]
        %v3100 = vld [vmem:[#allocation14 + $0x348] sm:$0xff]
        %v3101 = vld [vmem:[#allocation14 + $0x350] sm:$0xff]
        %v3102 = vld [vmem:[#allocation14 + $0x358] sm:$0xff]
        %v3103 = vld [vmem:[#allocation14 + $0x360] sm:$0xff]
        %v3104 = vld [vmem:[#allocation14 + $0x368] sm:$0xff]
        %v3105 = vld [vmem:[#allocation14 + $0x370] sm:$0xff]
        %v3106 = vld [vmem:[#allocation14 + $0x378] sm:$0xff]
        %v3107 = vld [vmem:[#allocation14 + $0x380] sm:$0xff]
        %v3108 = vld [vmem:[#allocation14 + $0x388] sm:$0xff]
        %v3109 = vld [vmem:[#allocation14 + $0x390] sm:$0xff]
        %v3110 = vld [vmem:[#allocation14 + $0x398] sm:$0xff]
        %v3111 = vld [vmem:[#allocation14 + $0x3a0] sm:$0xff]
        %v3112 = vld [vmem:[#allocation14 + $0x3a8] sm:$0xff]
        %v3113 = vld [vmem:[#allocation14 + $0x3b0] sm:$0xff]
        %v3114 = vld [vmem:[#allocation14 + $0x3b8] sm:$0xff]
        %v3115 = vld [vmem:[#allocation14 + $0x3c0] sm:$0xff]
        %v3116 = vld [vmem:[#allocation14 + $0x3c8] sm:$0xff]
        %v3117 = vld [vmem:[#allocation14 + $0x3d0] sm:$0xff]
        %v3118 = vld [vmem:[#allocation14 + $0x3d8] sm:$0xff]
        %v3119 = vld [vmem:[#allocation14 + $0x3e0] sm:$0xff]
        %v3120 = vld [vmem:[#allocation14 + $0x3e8] sm:$0xff]
        %v3121 = vld [vmem:[#allocation14 + $0x3f0] sm:$0xff]
        %v3122 = vld [vmem:[#allocation14 + $0x3f8] sm:$0xff]
        %v3123 = vld [vmem:[#allocation14 + $0x400] sm:$0xff]
        %v3124 = vld [vmem:[#allocation14 + $0x408] sm:$0xff]
        %v3125 = vld [vmem:[#allocation14 + $0x410] sm:$0xff]
        %v3126 = vld [vmem:[#allocation14 + $0x418] sm:$0xff]
        %v3127 = vld [vmem:[#allocation14 + $0x420] sm:$0xff]
        %v3128 = vld [vmem:[#allocation14 + $0x428] sm:$0xff]
        %v3129 = vld [vmem:[#allocation14 + $0x430] sm:$0xff]
        %v3130 = vld [vmem:[#allocation14 + $0x438] sm:$0xff]
        %v3131 = vld [vmem:[#allocation14 + $0x440] sm:$0xff]
        %v3132 = vld [vmem:[#allocation14 + $0x448] sm:$0xff]
        %v3133 = vld [vmem:[#allocation14 + $0x450] sm:$0xff]
        %v3134 = vld [vmem:[#allocation14 + $0x458] sm:$0xff]
        %v3135 = vld [vmem:[#allocation14 + $0x460] sm:$0xff]
        %v3136 = vld [vmem:[#allocation14 + $0x468] sm:$0xff]
        %v3137 = vld [vmem:[#allocation14 + $0x470] sm:$0xff]
        %v3138 = vld [vmem:[#allocation14 + $0x478] sm:$0xff]
        %v3139 = vld [vmem:[#allocation14 + $0x480] sm:$0xff]
        %v3140 = vld [vmem:[#allocation14 + $0x488] sm:$0xff]
        %v3141 = vld [vmem:[#allocation14 + $0x490] sm:$0xff]
        %v3142 = vld [vmem:[#allocation14 + $0x498] sm:$0xff]
        %v3143 = vld [vmem:[#allocation14 + $0x4a0] sm:$0xff]
        %v3144 = vld [vmem:[#allocation14 + $0x4a8] sm:$0xff]
        %v3145 = vld [vmem:[#allocation14 + $0x4b0] sm:$0xff]
        %v3146 = vld [vmem:[#allocation14 + $0x4b8] sm:$0xff]
        %v3147 = vld [vmem:[#allocation14 + $0x4c0] sm:$0xff]
        %v3148 = vld [vmem:[#allocation14 + $0x4c8] sm:$0xff]
        %v3149 = vld [vmem:[#allocation14 + $0x4d0] sm:$0xff]
        %v3150 = vld [vmem:[#allocation14 + $0x4d8] sm:$0xff]
        %v3151 = vld [vmem:[#allocation14 + $0x4e0] sm:$0xff]
        %v3152 = vld [vmem:[#allocation14 + $0x4e8] sm:$0xff]
        %v3153 = vld [vmem:[#allocation14 + $0x4f0] sm:$0xff]
        %v3154 = vld [vmem:[#allocation14 + $0x4f8] sm:$0xff]
        %v3155 = vld [vmem:[#allocation14 + $0x500] sm:$0xff]
        %v3156 = vld [vmem:[#allocation14 + $0x508] sm:$0xff]
        %v3157 = vld [vmem:[#allocation14 + $0x510] sm:$0xff]
        %v3158 = vld [vmem:[#allocation14 + $0x518] sm:$0xff]
        %v3159 = vld [vmem:[#allocation14 + $0x520] sm:$0xff]
        %v3160 = vld [vmem:[#allocation14 + $0x528] sm:$0xff]
        %v3161 = vld [vmem:[#allocation14 + $0x530] sm:$0xff]
        %v3162 = vld [vmem:[#allocation14 + $0x538] sm:$0xff]
        %v3163 = vld [vmem:[#allocation14 + $0x540] sm:$0xff]
        %v3164 = vld [vmem:[#allocation14 + $0x548] sm:$0xff]
        %v3165 = vld [vmem:[#allocation14 + $0x550] sm:$0xff]
        %v3166 = vld [vmem:[#allocation14 + $0x558] sm:$0xff]
        %v3167 = vld [vmem:[#allocation14 + $0x560] sm:$0xff]
        %v3168 = vld [vmem:[#allocation14 + $0x568] sm:$0xff]
        %v3169 = vld [vmem:[#allocation14 + $0x570] sm:$0xff]
        %v3170 = vld [vmem:[#allocation14 + $0x578] sm:$0xff]
        %v3171 = vld [vmem:[#allocation14 + $0x580] sm:$0xff]
        %v3172 = vld [vmem:[#allocation14 + $0x588] sm:$0xff]
        %v3173 = vld [vmem:[#allocation14 + $0x590] sm:$0xff]
        %v3174 = vld [vmem:[#allocation14 + $0x598] sm:$0xff]
        %v3175 = vld [vmem:[#allocation14 + $0x5a0] sm:$0xff]
        %v3176 = vld [vmem:[#allocation14 + $0x5a8] sm:$0xff]
        %v3177 = vld [vmem:[#allocation14 + $0x5b0] sm:$0xff]
        %v3178 = vld [vmem:[#allocation14 + $0x5b8] sm:$0xff]
        %v3179 = vld [vmem:[#allocation14 + $0x5c0] sm:$0xff]
        %v3180 = vld [vmem:[#allocation14 + $0x5c8] sm:$0xff]
        %v3181 = vld [vmem:[#allocation14 + $0x5d0] sm:$0xff]
        %v3182 = vld [vmem:[#allocation14 + $0x5d8] sm:$0xff]
        %v3183 = vld [vmem:[#allocation14 + $0x5e0] sm:$0xff]
        %v3184 = vld [vmem:[#allocation14 + $0x5e8] sm:$0xff]
        %v3185 = vld [vmem:[#allocation14 + $0x5f0] sm:$0xff]
        %v3186 = vld [vmem:[#allocation14 + $0x5f8] sm:$0xff]
        %v3187 = vld [vmem:[#allocation14 + $0x600] sm:$0xff]
        %v3188 = vld [vmem:[#allocation14 + $0x608] sm:$0xff]
        %v3189 = vld [vmem:[#allocation14 + $0x610] sm:$0xff]
        %v3190 = vld [vmem:[#allocation14 + $0x618] sm:$0xff]
        %v3191 = vld [vmem:[#allocation14 + $0x620] sm:$0xff]
        %v3192 = vld [vmem:[#allocation14 + $0x628] sm:$0xff]
        %v3193 = vld [vmem:[#allocation14 + $0x630] sm:$0xff]
        %v3194 = vld [vmem:[#allocation14 + $0x638] sm:$0xff]
        %v3195 = vld [vmem:[#allocation14 + $0x640] sm:$0xff]
        %v3196 = vld [vmem:[#allocation14 + $0x648] sm:$0xff]
        %v3197 = vld [vmem:[#allocation14 + $0x650] sm:$0xff]
        %v3198 = vld [vmem:[#allocation14 + $0x658] sm:$0xff]
        %v3199 = vld [vmem:[#allocation14 + $0x660] sm:$0xff]
        %v3200 = vld [vmem:[#allocation14 + $0x668] sm:$0xff]
        %v3201 = vld [vmem:[#allocation14 + $0x670] sm:$0xff]
        %v3202 = vld [vmem:[#allocation14 + $0x678] sm:$0xff]
        %v3203 = vld [vmem:[#allocation14 + $0x680] sm:$0xff]
        %v3204 = vld [vmem:[#allocation14 + $0x688] sm:$0xff]
        %v3205 = vld [vmem:[#allocation14 + $0x690] sm:$0xff]
        %v3206 = vld [vmem:[#allocation14 + $0x698] sm:$0xff]
        %v3207 = vld [vmem:[#allocation14 + $0x6a0] sm:$0xff]
        %v3208 = vld [vmem:[#allocation14 + $0x6a8] sm:$0xff]
        %v3209 = vld [vmem:[#allocation14 + $0x6b0] sm:$0xff]
        %v3210 = vld [vmem:[#allocation14 + $0x6b8] sm:$0xff]
        %v3211 = vld [vmem:[#allocation14 + $0x6c0] sm:$0xff]
        %v3212 = vld [vmem:[#allocation14 + $0x6c8] sm:$0xff]
        %v3213 = vld [vmem:[#allocation14 + $0x6d0] sm:$0xff]
        %v3214 = vld [vmem:[#allocation14 + $0x6d8] sm:$0xff]
        %v3215 = vld [vmem:[#allocation14 + $0x6e0] sm:$0xff]
        %v3216 = vld [vmem:[#allocation14 + $0x6e8] sm:$0xff]
        %v3217 = vld [vmem:[#allocation14 + $0x6f0] sm:$0xff]
        %v3218 = vld [vmem:[#allocation14 + $0x6f8] sm:$0xff]
        %v3219 = vld [vmem:[#allocation14 + $0x700] sm:$0xff]
        %v3220 = vld [vmem:[#allocation14 + $0x708] sm:$0xff]
        %v3221 = vld [vmem:[#allocation14 + $0x710] sm:$0xff]
        %v3222 = vld [vmem:[#allocation14 + $0x718] sm:$0xff]
        %v3223 = vld [vmem:[#allocation14 + $0x720] sm:$0xff]
        %v3224 = vld [vmem:[#allocation14 + $0x728] sm:$0xff]
        %v3225 = vld [vmem:[#allocation14 + $0x730] sm:$0xff]
        %v3226 = vld [vmem:[#allocation14 + $0x738] sm:$0xff]
        %v3227 = vld [vmem:[#allocation14 + $0x740] sm:$0xff]
        %v3228 = vld [vmem:[#allocation14 + $0x748] sm:$0xff]
        %v3229 = vld [vmem:[#allocation14 + $0x750] sm:$0xff]
        %v3230 = vld [vmem:[#allocation14 + $0x758] sm:$0xff]
        %v3231 = vld [vmem:[#allocation14 + $0x760] sm:$0xff]
        %v3232 = vld [vmem:[#allocation14 + $0x768] sm:$0xff]
        %v3233 = vld [vmem:[#allocation14 + $0x770] sm:$0xff]
        %v3234 = vld [vmem:[#allocation14 + $0x778] sm:$0xff]
        %v3235 = vld [vmem:[#allocation14 + $0x780] sm:$0xff]
        %v3236 = vld [vmem:[#allocation14 + $0x788] sm:$0xff]
        %v3237 = vld [vmem:[#allocation14 + $0x790] sm:$0xff]
        %v3238 = vld [vmem:[#allocation14 + $0x798] sm:$0xff]
        %v3239 = vld [vmem:[#allocation14 + $0x7a0] sm:$0xff]
        %v3240 = vld [vmem:[#allocation14 + $0x7a8] sm:$0xff]
        %v3241 = vld [vmem:[#allocation14 + $0x7b0] sm:$0xff]
        %v3242 = vld [vmem:[#allocation14 + $0x7b8] sm:$0xff]
        %v3243 = vld [vmem:[#allocation14 + $0x7c0] sm:$0xff]
        %v3244 = vld [vmem:[#allocation14 + $0x7c8] sm:$0xff]
        %v3245 = vld [vmem:[#allocation14 + $0x7d0] sm:$0xff]
        %v3246 = vld [vmem:[#allocation14 + $0x7d8] sm:$0xff]
        %v3247 = vld [vmem:[#allocation14 + $0x7e0] sm:$0xff]
        %v3248 = vld [vmem:[#allocation14 + $0x7e8] sm:$0xff]
        %v3249 = vld [vmem:[#allocation14 + $0x7f0] sm:$0xff]
        %v3250 = vld [vmem:[#allocation14 + $0x7f8] sm:$0xff]
        %v3251 = vld [vmem:[#allocation14 + $0x800] sm:$0xff]
        %v3252 = vld [vmem:[#allocation14 + $0x808] sm:$0xff]
        %v3253 = vld [vmem:[#allocation14 + $0x810] sm:$0xff]
        %v3254 = vld [vmem:[#allocation14 + $0x818] sm:$0xff]
        %v3255 = vld [vmem:[#allocation14 + $0x820] sm:$0xff]
        %v3256 = vld [vmem:[#allocation14 + $0x828] sm:$0xff]
        %v3257 = vld [vmem:[#allocation14 + $0x830] sm:$0xff]
        %v3258 = vld [vmem:[#allocation14 + $0x838] sm:$0xff]
        %v3259 = vld [vmem:[#allocation14 + $0x840] sm:$0xff]
        %v3260 = vld [vmem:[#allocation14 + $0x848] sm:$0xff]
        %v3261 = vld [vmem:[#allocation14 + $0x850] sm:$0xff]
        %v3262 = vld [vmem:[#allocation14 + $0x858] sm:$0xff]
        %v3263 = vld [vmem:[#allocation14 + $0x860] sm:$0xff]
        %v3264 = vld [vmem:[#allocation14 + $0x868] sm:$0xff]
        %v3265 = vld [vmem:[#allocation14 + $0x870] sm:$0xff]
        %v3266 = vld [vmem:[#allocation14 + $0x878] sm:$0xff]
        %v3267 = vld [vmem:[#allocation14 + $0x880] sm:$0xff]
        %v3268 = vld [vmem:[#allocation14 + $0x888] sm:$0xff]
        %v3269 = vld [vmem:[#allocation14 + $0x890] sm:$0xff]
        %v3270 = vld [vmem:[#allocation14 + $0x898] sm:$0xff]
        %v3271 = vld [vmem:[#allocation14 + $0x8a0] sm:$0xff]
        %v3272 = vld [vmem:[#allocation14 + $0x8a8] sm:$0xff]
        %v3273 = vld [vmem:[#allocation14 + $0x8b0] sm:$0xff]
        %v3274 = vld [vmem:[#allocation14 + $0x8b8] sm:$0xff]
        %v3275 = vld [vmem:[#allocation14 + $0x8c0] sm:$0xff]
        %v3276 = vld [vmem:[#allocation14 + $0x8c8] sm:$0xff]
        %v3277 = vld [vmem:[#allocation14 + $0x8d0] sm:$0xff]
        %v3278 = vld [vmem:[#allocation14 + $0x8d8] sm:$0xff]
        %v3279 = vld [vmem:[#allocation14 + $0x8e0] sm:$0xff]
        %v3280 = vld [vmem:[#allocation14 + $0x8e8] sm:$0xff]
        %v3281 = vld [vmem:[#allocation14 + $0x8f0] sm:$0xff]
        %v3282 = vld [vmem:[#allocation14 + $0x8f8] sm:$0xff]
        %v3283 = vld [vmem:[#allocation14 + $0x900] sm:$0xff]
        %v3284 = vld [vmem:[#allocation14 + $0x908] sm:$0xff]
        %v3285 = vld [vmem:[#allocation14 + $0x910] sm:$0xff]
        %v3286 = vld [vmem:[#allocation14 + $0x918] sm:$0xff]
        %v3287 = vld [vmem:[#allocation14 + $0x920] sm:$0xff]
        %v3288 = vld [vmem:[#allocation14 + $0x928] sm:$0xff]
        %v3289 = vld [vmem:[#allocation14 + $0x930] sm:$0xff]
        %v3290 = vld [vmem:[#allocation14 + $0x938] sm:$0xff]
        %v3291 = vld [vmem:[#allocation14 + $0x940] sm:$0xff]
        %v3292 = vld [vmem:[#allocation14 + $0x948] sm:$0xff]
        %v3293 = vld [vmem:[#allocation14 + $0x950] sm:$0xff]
        %v3294 = vld [vmem:[#allocation14 + $0x958] sm:$0xff]
        %v3295 = vld [vmem:[#allocation14 + $0x960] sm:$0xff]
        %v3296 = vld [vmem:[#allocation14 + $0x968] sm:$0xff]
        %v3297 = vld [vmem:[#allocation14 + $0x970] sm:$0xff]
        %v3298 = vld [vmem:[#allocation14 + $0x978] sm:$0xff]
        %v3299 = vld [vmem:[#allocation14 + $0x980] sm:$0xff]
        %v3300 = vld [vmem:[#allocation14 + $0x988] sm:$0xff]
        %v3301 = vld [vmem:[#allocation14 + $0x990] sm:$0xff]
        %v3302 = vld [vmem:[#allocation14 + $0x998] sm:$0xff]
        %v3303 = vld [vmem:[#allocation14 + $0x9a0] sm:$0xff]
        %v3304 = vld [vmem:[#allocation14 + $0x9a8] sm:$0xff]
        %v3305 = vld [vmem:[#allocation14 + $0x9b0] sm:$0xff]
        %v3306 = vld [vmem:[#allocation14 + $0x9b8] sm:$0xff]
        %v3307 = vld [vmem:[#allocation14 + $0x9c0] sm:$0xff]
        %v3308 = vld [vmem:[#allocation14 + $0x9c8] sm:$0xff]
        %v3309 = vld [vmem:[#allocation14 + $0x9d0] sm:$0xff]
        %v3310 = vld [vmem:[#allocation14 + $0x9d8] sm:$0xff]
        %v3311 = vld [vmem:[#allocation14 + $0x9e0] sm:$0xff]
        %v3312 = vld [vmem:[#allocation14 + $0x9e8] sm:$0xff]
        %v3313 = vld [vmem:[#allocation14 + $0x9f0] sm:$0xff]
        %v3314 = vld [vmem:[#allocation14 + $0x9f8] sm:$0xff]
        %v3315 = vld [vmem:[#allocation14 + $0xa00] sm:$0xff]
        %v3316 = vld [vmem:[#allocation14 + $0xa08] sm:$0xff]
        %v3317 = vld [vmem:[#allocation14 + $0xa10] sm:$0xff]
        %v3318 = vld [vmem:[#allocation14 + $0xa18] sm:$0xff]
        %v3319 = vld [vmem:[#allocation14 + $0xa20] sm:$0xff]
        %v3320 = vld [vmem:[#allocation14 + $0xa28] sm:$0xff]
        %v3321 = vld [vmem:[#allocation14 + $0xa30] sm:$0xff]
        %v3322 = vld [vmem:[#allocation14 + $0xa38] sm:$0xff]
        %v3323 = vld [vmem:[#allocation14 + $0xa40] sm:$0xff]
        %v3324 = vld [vmem:[#allocation14 + $0xa48] sm:$0xff]
        %v3325 = vld [vmem:[#allocation14 + $0xa50] sm:$0xff]
        %v3326 = vld [vmem:[#allocation14 + $0xa58] sm:$0xff]
        %v3327 = vld [vmem:[#allocation14 + $0xa60] sm:$0xff]
        %v3328 = vld [vmem:[#allocation14 + $0xa68] sm:$0xff]
        %v3329 = vld [vmem:[#allocation14 + $0xa70] sm:$0xff]
        %v3330 = vld [vmem:[#allocation14 + $0xa78] sm:$0xff]
        %v3331 = vld [vmem:[#allocation14 + $0xa80] sm:$0xff]
        %v3332 = vld [vmem:[#allocation14 + $0xa88] sm:$0xff]
        %v3333 = vld [vmem:[#allocation14 + $0xa90] sm:$0xff]
        %v3334 = vld [vmem:[#allocation14 + $0xa98] sm:$0xff]
        %v3335 = vld [vmem:[#allocation14 + $0xaa0] sm:$0xff]
        %v3336 = vld [vmem:[#allocation14 + $0xaa8] sm:$0xff]
        %v3337 = vld [vmem:[#allocation14 + $0xab0] sm:$0xff]
        %v3338 = vld [vmem:[#allocation14 + $0xab8] sm:$0xff]
        %v3339 = vld [vmem:[#allocation14 + $0xac0] sm:$0xff]
        %v3340 = vld [vmem:[#allocation14 + $0xac8] sm:$0xff]
        %v3341 = vld [vmem:[#allocation14 + $0xad0] sm:$0xff]
        %v3342 = vld [vmem:[#allocation14 + $0xad8] sm:$0xff]
        %v3343 = vld [vmem:[#allocation14 + $0xae0] sm:$0xff]
        %v3344 = vld [vmem:[#allocation14 + $0xae8] sm:$0xff]
        %v3345 = vld [vmem:[#allocation14 + $0xaf0] sm:$0xff]
        %v3346 = vld [vmem:[#allocation14 + $0xaf8] sm:$0xff]
        %v3347 = vld [vmem:[#allocation14 + $0xb00] sm:$0xff]
        %v3348 = vld [vmem:[#allocation14 + $0xb08] sm:$0xff]
        %v3349 = vld [vmem:[#allocation14 + $0xb10] sm:$0xff]
        %v3350 = vld [vmem:[#allocation14 + $0xb18] sm:$0xff]
        %v3351 = vld [vmem:[#allocation14 + $0xb20] sm:$0xff]
        %v3352 = vld [vmem:[#allocation14 + $0xb28] sm:$0xff]
        %v3353 = vld [vmem:[#allocation14 + $0xb30] sm:$0xff]
        %v3354 = vld [vmem:[#allocation14 + $0xb38] sm:$0xff]
        %v3355 = vld [vmem:[#allocation14 + $0xb40] sm:$0xff]
        %v3356 = vld [vmem:[#allocation14 + $0xb48] sm:$0xff]
        %v3357 = vld [vmem:[#allocation14 + $0xb50] sm:$0xff]
        %v3358 = vld [vmem:[#allocation14 + $0xb58] sm:$0xff]
        %v3359 = vld [vmem:[#allocation14 + $0xb60] sm:$0xff]
        %v3360 = vld [vmem:[#allocation14 + $0xb68] sm:$0xff]
        %v3361 = vld [vmem:[#allocation14 + $0xb70] sm:$0xff]
        %v3362 = vld [vmem:[#allocation14 + $0xb78] sm:$0xff]
        %v3363 = vld [vmem:[#allocation14 + $0xb80] sm:$0xff]
        %v3364 = vld [vmem:[#allocation14 + $0xb88] sm:$0xff]
        %v3365 = vld [vmem:[#allocation14 + $0xb90] sm:$0xff]
        %v3366 = vld [vmem:[#allocation14 + $0xb98] sm:$0xff]
        %v3367 = vld [vmem:[#allocation14 + $0xba0] sm:$0xff]
        %v3368 = vld [vmem:[#allocation14 + $0xba8] sm:$0xff]
        %v3369 = vld [vmem:[#allocation14 + $0xbb0] sm:$0xff]
        %v3370 = vld [vmem:[#allocation14 + $0xbb8] sm:$0xff]
        %v3371 = vld [vmem:[#allocation14 + $0xbc0] sm:$0xff]
        %v3372 = vld [vmem:[#allocation14 + $0xbc8] sm:$0xff]
        %v3373 = vld [vmem:[#allocation14 + $0xbd0] sm:$0xff]
        %v3374 = vld [vmem:[#allocation14 + $0xbd8] sm:$0xff]
        %v3375 = vld [vmem:[#allocation14 + $0xbe0] sm:$0xff]
        %v3376 = vld [vmem:[#allocation14 + $0xbe8] sm:$0xff]
        %v3377 = vld [vmem:[#allocation14 + $0xbf0] sm:$0xff]
        %v3378 = vld [vmem:[#allocation14 + $0xbf8] sm:$0xff]
        %v3379 = vld [vmem:[#allocation14 + $0xc00] sm:$0xff]
        %v3380 = vld [vmem:[#allocation14 + $0xc08] sm:$0xff]
        %v3381 = vld [vmem:[#allocation14 + $0xc10] sm:$0xff]
        %v3382 = vld [vmem:[#allocation14 + $0xc18] sm:$0xff]
        %v3383 = vld [vmem:[#allocation14 + $0xc20] sm:$0xff]
        %v3384 = vld [vmem:[#allocation14 + $0xc28] sm:$0xff]
        %v3385 = vld [vmem:[#allocation14 + $0xc30] sm:$0xff]
        %v3386 = vld [vmem:[#allocation14 + $0xc38] sm:$0xff]
        %v3387 = vld [vmem:[#allocation14 + $0xc40] sm:$0xff]
        %v3388 = vld [vmem:[#allocation14 + $0xc48] sm:$0xff]
        %v3389 = vld [vmem:[#allocation14 + $0xc50] sm:$0xff]
        %v3390 = vld [vmem:[#allocation14 + $0xc58] sm:$0xff]
        %v3391 = vld [vmem:[#allocation14 + $0xc60] sm:$0xff]
        %v3392 = vld [vmem:[#allocation14 + $0xc68] sm:$0xff]
        %v3393 = vld [vmem:[#allocation14 + $0xc70] sm:$0xff]
        %v3394 = vld [vmem:[#allocation14 + $0xc78] sm:$0xff]
        %v3395 = vld [vmem:[#allocation14 + $0xc80] sm:$0xff]
        %v3396 = vld [vmem:[#allocation14 + $0xc88] sm:$0xff]
        %v3397 = vld [vmem:[#allocation14 + $0xc90] sm:$0xff]
        %v3398 = vld [vmem:[#allocation14 + $0xc98] sm:$0xff]
        %v3399 = vld [vmem:[#allocation14 + $0xca0] sm:$0xff]
        %v3400 = vld [vmem:[#allocation14 + $0xca8] sm:$0xff]
        %v3401 = vld [vmem:[#allocation14 + $0xcb0] sm:$0xff]
        %v3402 = vld [vmem:[#allocation14 + $0xcb8] sm:$0xff]
        %v3403 = vld [vmem:[#allocation14 + $0xcc0] sm:$0xff]
        %v3404 = vld [vmem:[#allocation14 + $0xcc8] sm:$0xff]
        %v3405 = vld [vmem:[#allocation14 + $0xcd0] sm:$0xff]
        %v3406 = vld [vmem:[#allocation14 + $0xcd8] sm:$0xff]
        %v3407 = vld [vmem:[#allocation14 + $0xce0] sm:$0xff]
        %v3408 = vld [vmem:[#allocation14 + $0xce8] sm:$0xff]
        %v3409 = vld [vmem:[#allocation14 + $0xcf0] sm:$0xff]
        %v3410 = vld [vmem:[#allocation14 + $0xcf8] sm:$0xff]
        %v3411 = vld [vmem:[#allocation14 + $0xd00] sm:$0xff]
        %v3412 = vld [vmem:[#allocation14 + $0xd08] sm:$0xff]
        %v3413 = vld [vmem:[#allocation14 + $0xd10] sm:$0xff]
        %v3414 = vld [vmem:[#allocation14 + $0xd18] sm:$0xff]
        %v3415 = vld [vmem:[#allocation14 + $0xd20] sm:$0xff]
        %v3416 = vld [vmem:[#allocation14 + $0xd28] sm:$0xff]
        %v3417 = vld [vmem:[#allocation14 + $0xd30] sm:$0xff]
        %v3418 = vld [vmem:[#allocation14 + $0xd38] sm:$0xff]
        %v3419 = vld [vmem:[#allocation14 + $0xd40] sm:$0xff]
        %v3420 = vld [vmem:[#allocation14 + $0xd48] sm:$0xff]
        %v3421 = vld [vmem:[#allocation14 + $0xd50] sm:$0xff]
        %v3422 = vld [vmem:[#allocation14 + $0xd58] sm:$0xff]
        %v3423 = vld [vmem:[#allocation14 + $0xd60] sm:$0xff]
        %v3424 = vld [vmem:[#allocation14 + $0xd68] sm:$0xff]
        %v3425 = vld [vmem:[#allocation14 + $0xd70] sm:$0xff]
        %v3426 = vld [vmem:[#allocation14 + $0xd78] sm:$0xff]
        %v3427 = vld [vmem:[#allocation14 + $0xd80] sm:$0xff]
        %v3428 = vld [vmem:[#allocation14 + $0xd88] sm:$0xff]
        %v3429 = vld [vmem:[#allocation14 + $0xd90] sm:$0xff]
        %v3430 = vld [vmem:[#allocation14 + $0xd98] sm:$0xff]
        %v3431 = vld [vmem:[#allocation14 + $0xda0] sm:$0xff]
        %v3432 = vld [vmem:[#allocation14 + $0xda8] sm:$0xff]
        %v3433 = vld [vmem:[#allocation14 + $0xdb0] sm:$0xff]
        %v3434 = vld [vmem:[#allocation14 + $0xdb8] sm:$0xff]
        %v3435 = vld [vmem:[#allocation14 + $0xdc0] sm:$0xff]
        %v3436 = vld [vmem:[#allocation14 + $0xdc8] sm:$0xff]
        %v3437 = vld [vmem:[#allocation14 + $0xdd0] sm:$0xff]
        %v3438 = vld [vmem:[#allocation14 + $0xdd8] sm:$0xff]
        %v3439 = vld [vmem:[#allocation14 + $0xde0] sm:$0xff]
        %v3440 = vld [vmem:[#allocation14 + $0xde8] sm:$0xff]
        %v3441 = vld [vmem:[#allocation14 + $0xdf0] sm:$0xff]
        %v3442 = vld [vmem:[#allocation14 + $0xdf8] sm:$0xff]
        %v3443 = vld [vmem:[#allocation14 + $0xe00] sm:$0xff]
        %v3444 = vld [vmem:[#allocation14 + $0xe08] sm:$0xff]
        %v3445 = vld [vmem:[#allocation14 + $0xe10] sm:$0xff]
        %v3446 = vld [vmem:[#allocation14 + $0xe18] sm:$0xff]
        %v3447 = vld [vmem:[#allocation14 + $0xe20] sm:$0xff]
        %v3448 = vld [vmem:[#allocation14 + $0xe28] sm:$0xff]
        %v3449 = vld [vmem:[#allocation14 + $0xe30] sm:$0xff]
        %v3450 = vld [vmem:[#allocation14 + $0xe38] sm:$0xff]
        %v3451 = vld [vmem:[#allocation14 + $0xe40] sm:$0xff]
        %v3452 = vld [vmem:[#allocation14 + $0xe48] sm:$0xff]
        %v3453 = vld [vmem:[#allocation14 + $0xe50] sm:$0xff]
        %v3454 = vld [vmem:[#allocation14 + $0xe58] sm:$0xff]
        %v3455 = vld [vmem:[#allocation14 + $0xe60] sm:$0xff]
        %v3456 = vld [vmem:[#allocation14 + $0xe68] sm:$0xff]
        %v3457 = vld [vmem:[#allocation14 + $0xe70] sm:$0xff]
        %v3458 = vld [vmem:[#allocation14 + $0xe78] sm:$0xff]
        %v3459 = vld [vmem:[#allocation14 + $0xe80] sm:$0xff]
        %v3460 = vld [vmem:[#allocation14 + $0xe88] sm:$0xff]
        %v3461 = vld [vmem:[#allocation14 + $0xe90] sm:$0xff]
        %v3462 = vld [vmem:[#allocation14 + $0xe98] sm:$0xff]
        %v3463 = vld [vmem:[#allocation14 + $0xea0] sm:$0xff]
        %v3464 = vld [vmem:[#allocation14 + $0xea8] sm:$0xff]
        %v3465 = vld [vmem:[#allocation14 + $0xeb0] sm:$0xff]
        %v3466 = vld [vmem:[#allocation14 + $0xeb8] sm:$0xff]
        %v3467 = vld [vmem:[#allocation14 + $0xec0] sm:$0xff]
        %v3468 = vld [vmem:[#allocation14 + $0xec8] sm:$0xff]
        %v3469 = vld [vmem:[#allocation14 + $0xed0] sm:$0xff]
        %v3470 = vld [vmem:[#allocation14 + $0xed8] sm:$0xff]
        %v3471 = vld [vmem:[#allocation14 + $0xee0] sm:$0xff]
        %v3472 = vld [vmem:[#allocation14 + $0xee8] sm:$0xff]
        %v3473 = vld [vmem:[#allocation14 + $0xef0] sm:$0xff]
        %v3474 = vld [vmem:[#allocation14 + $0xef8] sm:$0xff]
        %v3475 = vld [vmem:[#allocation14 + $0xf00] sm:$0xff]
        %v3476 = vld [vmem:[#allocation14 + $0xf08] sm:$0xff]
        %v3477 = vld [vmem:[#allocation14 + $0xf10] sm:$0xff]
        %v3478 = vld [vmem:[#allocation14 + $0xf18] sm:$0xff]
        %v3479 = vld [vmem:[#allocation14 + $0xf20] sm:$0xff]
        %v3480 = vld [vmem:[#allocation14 + $0xf28] sm:$0xff]
        %v3481 = vld [vmem:[#allocation14 + $0xf30] sm:$0xff]
        %v3482 = vld [vmem:[#allocation14 + $0xf38] sm:$0xff]
        %v3483 = vld [vmem:[#allocation14 + $0xf40] sm:$0xff]
        %v3484 = vld [vmem:[#allocation14 + $0xf48] sm:$0xff]
        %v3485 = vld [vmem:[#allocation14 + $0xf50] sm:$0xff]
        %v3486 = vld [vmem:[#allocation14 + $0xf58] sm:$0xff]
        %v3487 = vld [vmem:[#allocation14 + $0xf60] sm:$0xff]
        %v3488 = vld [vmem:[#allocation14 + $0xf68] sm:$0xff]
        %v3489 = vld [vmem:[#allocation14 + $0xf70] sm:$0xff]
        %v3490 = vld [vmem:[#allocation14 + $0xf78] sm:$0xff]
        %v3491 = vld [vmem:[#allocation14 + $0xf80] sm:$0xff]
        %v3492 = vld [vmem:[#allocation14 + $0xf88] sm:$0xff]
        %v3493 = vld [vmem:[#allocation14 + $0xf90] sm:$0xff]
        %v3494 = vld [vmem:[#allocation14 + $0xf98] sm:$0xff]
        %v3495 = vld [vmem:[#allocation14 + $0xfa0] sm:$0xff]
        %v3496 = vld [vmem:[#allocation14 + $0xfa8] sm:$0xff]
        %v3497 = vld [vmem:[#allocation14 + $0xfb0] sm:$0xff]
        %v3498 = vld [vmem:[#allocation14 + $0xfb8] sm:$0xff]
        %v3499 = vld [vmem:[#allocation14 + $0xfc0] sm:$0xff]
        %v3500 = vld [vmem:[#allocation14 + $0xfc8] sm:$0xff]
        %v3501 = vld [vmem:[#allocation14 + $0xfd0] sm:$0xff]
        %v3502 = vld [vmem:[#allocation14 + $0xfd8] sm:$0xff]
        %v3503 = vld [vmem:[#allocation14 + $0xfe0] sm:$0xff]
        %v3504 = vld [vmem:[#allocation14 + $0xfe8] sm:$0xff]
        %v3505 = vld [vmem:[#allocation14 + $0xff0] sm:$0xff]
        %v3506 = vld [vmem:[#allocation14 + $0xff8] sm:$0xff]
        %v3507 = vld [vmem:[#allocation14 + $0x1000] sm:$0xff]
        %v3508 = vld [vmem:[#allocation14 + $0x1008] sm:$0xff]
        %v3509 = vld [vmem:[#allocation14 + $0x1010] sm:$0xff]
        %v3510 = vld [vmem:[#allocation14 + $0x1018] sm:$0xff]
        %v3511 = vld [vmem:[#allocation14 + $0x1020] sm:$0xff]
        %v3512 = vld [vmem:[#allocation14 + $0x1028] sm:$0xff]
        %v3513 = vld [vmem:[#allocation14 + $0x1030] sm:$0xff]
        %v3514 = vld [vmem:[#allocation14 + $0x1038] sm:$0xff]
        %v3515 = vld [vmem:[#allocation14 + $0x1040] sm:$0xff]
        %v3516 = vld [vmem:[#allocation14 + $0x1048] sm:$0xff]
        %v3517 = vld [vmem:[#allocation14 + $0x1050] sm:$0xff]
        %v3518 = vld [vmem:[#allocation14 + $0x1058] sm:$0xff]
        %v3519 = vld [vmem:[#allocation14 + $0x1060] sm:$0xff]
        %v3520 = vld [vmem:[#allocation14 + $0x1068] sm:$0xff]
        %v3521 = vld [vmem:[#allocation14 + $0x1070] sm:$0xff]
        %v3522 = vld [vmem:[#allocation14 + $0x1078] sm:$0xff]
        %v3523 = vld [vmem:[#allocation14 + $0x1080] sm:$0xff]
        %v3524 = vld [vmem:[#allocation14 + $0x1088] sm:$0xff]
        %v3525 = vld [vmem:[#allocation14 + $0x1090] sm:$0xff]
        %v3526 = vld [vmem:[#allocation14 + $0x1098] sm:$0xff]
        %v3527 = vld [vmem:[#allocation14 + $0x10a0] sm:$0xff]
        %v3528 = vld [vmem:[#allocation14 + $0x10a8] sm:$0xff]
        %v3529 = vld [vmem:[#allocation14 + $0x10b0] sm:$0xff]
        %v3530 = vld [vmem:[#allocation14 + $0x10b8] sm:$0xff]
        %v3531 = vld [vmem:[#allocation14 + $0x10c0] sm:$0xff]
        %v3532 = vld [vmem:[#allocation14 + $0x10c8] sm:$0xff]
        %v3533 = vld [vmem:[#allocation14 + $0x10d0] sm:$0xff]
        %v3534 = vld [vmem:[#allocation14 + $0x10d8] sm:$0xff]
        %v3535 = vld [vmem:[#allocation14 + $0x10e0] sm:$0xff]
        %v3536 = vld [vmem:[#allocation14 + $0x10e8] sm:$0xff]
        %v3537 = vld [vmem:[#allocation14 + $0x10f0] sm:$0xff]
        %v3538 = vld [vmem:[#allocation14 + $0x10f8] sm:$0xff]
        %v3539 = vld [vmem:[#allocation14 + $0x1100] sm:$0xff]
        %v3540 = vld [vmem:[#allocation14 + $0x1108] sm:$0xff]
        %v3541 = vld [vmem:[#allocation14 + $0x1110] sm:$0xff]
        %v3542 = vld [vmem:[#allocation14 + $0x1118] sm:$0xff]
        %v3543 = vld [vmem:[#allocation14 + $0x1120] sm:$0xff]
        %v3544 = vld [vmem:[#allocation14 + $0x1128] sm:$0xff]
        %v3545 = vld [vmem:[#allocation14 + $0x1130] sm:$0xff]
        %v3546 = vld [vmem:[#allocation14 + $0x1138] sm:$0xff]
        %v3547 = vld [vmem:[#allocation14 + $0x1140] sm:$0xff]
        %v3548 = vld [vmem:[#allocation14 + $0x1148] sm:$0xff]
        %v3549 = vld [vmem:[#allocation14 + $0x1150] sm:$0xff]
        %v3550 = vld [vmem:[#allocation14 + $0x1158] sm:$0xff]
        %v3551 = vld [vmem:[#allocation14 + $0x1160] sm:$0xff]
        %v3552 = vld [vmem:[#allocation14 + $0x1168] sm:$0xff]
        %v3553 = vld [vmem:[#allocation14 + $0x1170] sm:$0xff]
        %v3554 = vld [vmem:[#allocation14 + $0x1178] sm:$0xff]
        %v3555 = vld [vmem:[#allocation14 + $0x1180] sm:$0xff]
        %v3556 = vld [vmem:[#allocation14 + $0x1188] sm:$0xff]
        %v3557 = vld [vmem:[#allocation14 + $0x1190] sm:$0xff]
        %v3558 = vld [vmem:[#allocation14 + $0x1198] sm:$0xff]
        %v3559 = vld [vmem:[#allocation14 + $0x11a0] sm:$0xff]
        %v3560 = vld [vmem:[#allocation14 + $0x11a8] sm:$0xff]
        %v3561 = vld [vmem:[#allocation14 + $0x11b0] sm:$0xff]
        %v3562 = vld [vmem:[#allocation14 + $0x11b8] sm:$0xff]
        %v3563 = vld [vmem:[#allocation14 + $0x11c0] sm:$0xff]
        %v3564 = vld [vmem:[#allocation14 + $0x11c8] sm:$0xff]
        %v3565 = vld [vmem:[#allocation14 + $0x11d0] sm:$0xff]
        %v3566 = vld [vmem:[#allocation14 + $0x11d8] sm:$0xff]
        %v3567 = vld [vmem:[#allocation14 + $0x11e0] sm:$0xff]
        %v3568 = vld [vmem:[#allocation14 + $0x11e8] sm:$0xff]
        %v3569 = vld [vmem:[#allocation14 + $0x11f0] sm:$0xff]
        %v3570 = vld [vmem:[#allocation14 + $0x11f8] sm:$0xff]
        %v3571 = vld [vmem:[#allocation14 + $0x1200] sm:$0xff]
        %v3572 = vld [vmem:[#allocation14 + $0x1208] sm:$0xff]
        %v3573 = vld [vmem:[#allocation14 + $0x1210] sm:$0xff]
        %v3574 = vld [vmem:[#allocation14 + $0x1218] sm:$0xff]
        %v3575 = vld [vmem:[#allocation14 + $0x1220] sm:$0xff]
        %v3576 = vld [vmem:[#allocation14 + $0x1228] sm:$0xff]
        %v3577 = vld [vmem:[#allocation14 + $0x1230] sm:$0xff]
        %v3578 = vld [vmem:[#allocation14 + $0x1238] sm:$0xff]
        %v3579 = vld [vmem:[#allocation14 + $0x1240] sm:$0xff]
        %v3580 = vld [vmem:[#allocation14 + $0x1248] sm:$0xff]
        %v3581 = vld [vmem:[#allocation14 + $0x1250] sm:$0xff]
        %v3582 = vld [vmem:[#allocation14 + $0x1258] sm:$0xff]
        %v3583 = vld [vmem:[#allocation14 + $0x1260] sm:$0xff]
        %v3584 = vld [vmem:[#allocation14 + $0x1268] sm:$0xff]
        %v3585 = vld [vmem:[#allocation14 + $0x1270] sm:$0xff]
        %v3586 = vld [vmem:[#allocation14 + $0x1278] sm:$0xff]
        %v3587 = vld [vmem:[#allocation14 + $0x1280] sm:$0xff]
        %v3588 = vld [vmem:[#allocation14 + $0x1288] sm:$0xff]
        %v3589 = vld [vmem:[#allocation14 + $0x1290] sm:$0xff]
        %v3590 = vld [vmem:[#allocation14 + $0x1298] sm:$0xff]
        %v3591 = vld [vmem:[#allocation14 + $0x12a0] sm:$0xff]
        %v3592 = vld [vmem:[#allocation14 + $0x12a8] sm:$0xff]
        %v3593 = vld [vmem:[#allocation14 + $0x12b0] sm:$0xff]
        %v3594 = vld [vmem:[#allocation14 + $0x12b8] sm:$0xff]
        %v3595 = vld [vmem:[#allocation14 + $0x12c0] sm:$0xff]
        %v3596 = vld [vmem:[#allocation14 + $0x12c8] sm:$0xff]
        %v3597 = vld [vmem:[#allocation14 + $0x12d0] sm:$0xff]
        %v3598 = vld [vmem:[#allocation14 + $0x12d8] sm:$0xff]
        %v3599 = vld [vmem:[#allocation14 + $0x12e0] sm:$0xff]
        %v3600 = vld [vmem:[#allocation14 + $0x12e8] sm:$0xff]
        %v3601 = vld [vmem:[#allocation14 + $0x12f0] sm:$0xff]
        %v3602 = vld [vmem:[#allocation14 + $0x12f8] sm:$0xff]
        %v3603 = vld [vmem:[#allocation14 + $0x1300] sm:$0xff]
        %v3604 = vld [vmem:[#allocation14 + $0x1308] sm:$0xff]
        %v3605 = vld [vmem:[#allocation14 + $0x1310] sm:$0xff]
        %v3606 = vld [vmem:[#allocation14 + $0x1318] sm:$0xff]
        %v3607 = vld [vmem:[#allocation14 + $0x1320] sm:$0xff]
        %v3608 = vld [vmem:[#allocation14 + $0x1328] sm:$0xff]
        %v3609 = vld [vmem:[#allocation14 + $0x1330] sm:$0xff]
        %v3610 = vld [vmem:[#allocation14 + $0x1338] sm:$0xff]
        %v3611 = vld [vmem:[#allocation14 + $0x1340] sm:$0xff]
        %v3612 = vld [vmem:[#allocation14 + $0x1348] sm:$0xff]
        %v3613 = vld [vmem:[#allocation14 + $0x1350] sm:$0xff]
        %v3614 = vld [vmem:[#allocation14 + $0x1358] sm:$0xff]
        %v3615 = vld [vmem:[#allocation14 + $0x1360] sm:$0xff]
        %v3616 = vld [vmem:[#allocation14 + $0x1368] sm:$0xff]
        %v3617 = vld [vmem:[#allocation14 + $0x1370] sm:$0xff]
        %v3618 = vld [vmem:[#allocation14 + $0x1378] sm:$0xff]
        %v3619 = vld [vmem:[#allocation14 + $0x1380] sm:$0xff]
        %v3620 = vld [vmem:[#allocation14 + $0x1388] sm:$0xff]
        %v3621 = vld [vmem:[#allocation14 + $0x1390] sm:$0xff]
        %v3622 = vld [vmem:[#allocation14 + $0x1398] sm:$0xff]
        %v3623 = vld [vmem:[#allocation14 + $0x13a0] sm:$0xff]
        %v3624 = vld [vmem:[#allocation14 + $0x13a8] sm:$0xff]
        %v3625 = vld [vmem:[#allocation14 + $0x13b0] sm:$0xff]
        %v3626 = vld [vmem:[#allocation14 + $0x13b8] sm:$0xff]
        %v3627 = vld [vmem:[#allocation14 + $0x13c0] sm:$0xff]
        %v3628 = vld [vmem:[#allocation14 + $0x13c8] sm:$0xff]
        %v3629 = vld [vmem:[#allocation14 + $0x13d0] sm:$0xff]
        %v3630 = vld [vmem:[#allocation14 + $0x13d8] sm:$0xff]
        %v3631 = vld [vmem:[#allocation14 + $0x13e0] sm:$0xff]
        %v3632 = vld [vmem:[#allocation14 + $0x13e8] sm:$0xff]
        %v3633 = vld [vmem:[#allocation14 + $0x13f0] sm:$0xff]
        %v3634 = vld [vmem:[#allocation14 + $0x13f8] sm:$0xff]
        %v3635 = vld [vmem:[#allocation14 + $0x1400] sm:$0xff]
        %v3636 = vld [vmem:[#allocation14 + $0x1408] sm:$0xff]
        %v3637 = vld [vmem:[#allocation14 + $0x1410] sm:$0xff]
        %v3638 = vld [vmem:[#allocation14 + $0x1418] sm:$0xff]
        %v3639 = vld [vmem:[#allocation14 + $0x1420] sm:$0xff]
        %v3640 = vld [vmem:[#allocation14 + $0x1428] sm:$0xff]
        %v3641 = vld [vmem:[#allocation14 + $0x1430] sm:$0xff]
        %v3642 = vld [vmem:[#allocation14 + $0x1438] sm:$0xff]
        %v3643 = vld [vmem:[#allocation14 + $0x1440] sm:$0xff]
        %v3644 = vld [vmem:[#allocation14 + $0x1448] sm:$0xff]
        %v3645 = vld [vmem:[#allocation14 + $0x1450] sm:$0xff]
        %v3646 = vld [vmem:[#allocation14 + $0x1458] sm:$0xff]
        %v3647 = vld [vmem:[#allocation14 + $0x1460] sm:$0xff]
        %v3648 = vld [vmem:[#allocation14 + $0x1468] sm:$0xff]
        %v3649 = vld [vmem:[#allocation14 + $0x1470] sm:$0xff]
        %v3650 = vld [vmem:[#allocation14 + $0x1478] sm:$0xff]
        %v3651 = vld [vmem:[#allocation14 + $0x1480] sm:$0xff]
        %v3652 = vld [vmem:[#allocation14 + $0x1488] sm:$0xff]
        %v3653 = vld [vmem:[#allocation14 + $0x1490] sm:$0xff]
        %v3654 = vld [vmem:[#allocation14 + $0x1498] sm:$0xff]
        %v3655 = vld [vmem:[#allocation14 + $0x14a0] sm:$0xff]
        %v3656 = vld [vmem:[#allocation14 + $0x14a8] sm:$0xff]
        %v3657 = vld [vmem:[#allocation14 + $0x14b0] sm:$0xff]
        %v3658 = vld [vmem:[#allocation14 + $0x14b8] sm:$0xff]
        %v3659 = vld [vmem:[#allocation14 + $0x14c0] sm:$0xff]
        %v3660 = vld [vmem:[#allocation14 + $0x14c8] sm:$0xff]
        %v3661 = vld [vmem:[#allocation14 + $0x14d0] sm:$0xff]
        %v3662 = vld [vmem:[#allocation14 + $0x14d8] sm:$0xff]
        %v3663 = vld [vmem:[#allocation14 + $0x14e0] sm:$0xff]
        %v3664 = vld [vmem:[#allocation14 + $0x14e8] sm:$0xff]
        %v3665 = vld [vmem:[#allocation14 + $0x14f0] sm:$0xff]
        %v3666 = vld [vmem:[#allocation14 + $0x14f8] sm:$0xff]
        %v3667 = vld [vmem:[#allocation14 + $0x1500] sm:$0xff]
        %v3668 = vld [vmem:[#allocation14 + $0x1508] sm:$0xff]
        %v3669 = vld [vmem:[#allocation14 + $0x1510] sm:$0xff]
        %v3670 = vld [vmem:[#allocation14 + $0x1518] sm:$0xff]
        %v3671 = vld [vmem:[#allocation14 + $0x1520] sm:$0xff]
        %v3672 = vld [vmem:[#allocation14 + $0x1528] sm:$0xff]
        %v3673 = vld [vmem:[#allocation14 + $0x1530] sm:$0xff]
        %v3674 = vld [vmem:[#allocation14 + $0x1538] sm:$0xff]
        %v3675 = vld [vmem:[#allocation14 + $0x1540] sm:$0xff]
        %v3676 = vld [vmem:[#allocation14 + $0x1548] sm:$0xff]
        %v3677 = vld [vmem:[#allocation14 + $0x1550] sm:$0xff]
        %v3678 = vld [vmem:[#allocation14 + $0x1558] sm:$0xff]
        %v3679 = vld [vmem:[#allocation14 + $0x1560] sm:$0xff]
        %v3680 = vld [vmem:[#allocation14 + $0x1568] sm:$0xff]
        %v3681 = vld [vmem:[#allocation14 + $0x1570] sm:$0xff]
        %v3682 = vld [vmem:[#allocation14 + $0x1578] sm:$0xff]
        %v3683 = vld [vmem:[#allocation14 + $0x1580] sm:$0xff]
        %v3684 = vld [vmem:[#allocation14 + $0x1588] sm:$0xff]
        %v3685 = vld [vmem:[#allocation14 + $0x1590] sm:$0xff]
        %v3686 = vld [vmem:[#allocation14 + $0x1598] sm:$0xff]
        %v3687 = vld [vmem:[#allocation14 + $0x15a0] sm:$0xff]
        %v3688 = vld [vmem:[#allocation14 + $0x15a8] sm:$0xff]
        %v3689 = vld [vmem:[#allocation14 + $0x15b0] sm:$0xff]
        %v3690 = vld [vmem:[#allocation14 + $0x15b8] sm:$0xff]
        %v3691 = vld [vmem:[#allocation14 + $0x15c0] sm:$0xff]
        %v3692 = vld [vmem:[#allocation14 + $0x15c8] sm:$0xff]
        %v3693 = vld [vmem:[#allocation14 + $0x15d0] sm:$0xff]
        %v3694 = vld [vmem:[#allocation14 + $0x15d8] sm:$0xff]
        %v3695 = vld [vmem:[#allocation14 + $0x15e0] sm:$0xff]
        %v3696 = vld [vmem:[#allocation14 + $0x15e8] sm:$0xff]
        %v3697 = vld [vmem:[#allocation14 + $0x15f0] sm:$0xff]
        %v3698 = vld [vmem:[#allocation14 + $0x15f8] sm:$0xff]
        %v3699 = vld [vmem:[#allocation14 + $0x1600] sm:$0xff]
        %v3700 = vld [vmem:[#allocation14 + $0x1608] sm:$0xff]
        %v3701 = vld [vmem:[#allocation14 + $0x1610] sm:$0xff]
        %v3702 = vld [vmem:[#allocation14 + $0x1618] sm:$0xff]
        %v3703 = vld [vmem:[#allocation14 + $0x1620] sm:$0xff]
        %v3704 = vld [vmem:[#allocation14 + $0x1628] sm:$0xff]
        %v3705 = vld [vmem:[#allocation14 + $0x1630] sm:$0xff]
        %v3706 = vld [vmem:[#allocation14 + $0x1638] sm:$0xff]
        %v3707 = vld [vmem:[#allocation14 + $0x1640] sm:$0xff]
        %v3708 = vld [vmem:[#allocation14 + $0x1648] sm:$0xff]
        %v3709 = vld [vmem:[#allocation14 + $0x1650] sm:$0xff]
        %v3710 = vld [vmem:[#allocation14 + $0x1658] sm:$0xff]
        %v3711 = vld [vmem:[#allocation14 + $0x1660] sm:$0xff]
        %v3712 = vld [vmem:[#allocation14 + $0x1668] sm:$0xff]
        %v3713 = vld [vmem:[#allocation14 + $0x1670] sm:$0xff]
        %v3714 = vld [vmem:[#allocation14 + $0x1678] sm:$0xff]
        %v3715 = vld [vmem:[#allocation14 + $0x1680] sm:$0xff]
        %v3716 = vld [vmem:[#allocation14 + $0x1688] sm:$0xff]
        %v3717 = vld [vmem:[#allocation14 + $0x1690] sm:$0xff]
        %v3718 = vld [vmem:[#allocation14 + $0x1698] sm:$0xff]
        %v3719 = vld [vmem:[#allocation14 + $0x16a0] sm:$0xff]
        %v3720 = vld [vmem:[#allocation14 + $0x16a8] sm:$0xff]
        %v3721 = vld [vmem:[#allocation14 + $0x16b0] sm:$0xff]
        %v3722 = vld [vmem:[#allocation14 + $0x16b8] sm:$0xff]
        %v3723 = vld [vmem:[#allocation14 + $0x16c0] sm:$0xff]
        %v3724 = vld [vmem:[#allocation14 + $0x16c8] sm:$0x3]
        %v3725 = vld [vmem:[#allocation14 + $0x16d0] sm:$0x3]
        %v3726 = vld [vmem:[#allocation14 + $0x16d8] sm:$0x3]
        %v3727 = vld [vmem:[#allocation14 + $0x16e0] sm:$0x3]
        %v3728 = vld [vmem:[#allocation14 + $0x16e8] sm:$0x3]
        %v3729 = vld [vmem:[#allocation14 + $0x16f0] sm:$0x3]
        %v3730 = vld [vmem:[#allocation14 + $0x16f8] sm:$0x3]
        %v3731 = vld [vmem:[#allocation14 + $0x1700] sm:$0x3]
        %v3732 = vld [vmem:[#allocation14 + $0x1708] sm:$0x3]
        %v3733 = vld [vmem:[#allocation16] sm:$0xff]
        %v3734 = vld [vmem:[#allocation16 + $0x8] sm:$0x1]
        %v3737 = vperm.slane %v3733, 0
        %v3738 = vperm.slane %v3733, 1
        %v3739 = vperm.slane %v3733, 2
        %v3740 = vperm.slane %v3733, 3
        %v3741 = vperm.slane %v3733, 4
        %v3742 = vperm.slane %v3733, 5
        %v3743 = vperm.slane %v3733, 6
        %v3744 = vperm.slane %v3733, 7
        %v3745 = vperm.slane %v3734, 0
        %vm3755 = vcmask 80896
        %v3757 = vsel %vm3755, %v2994, 0
        %vm3759 = vcmask 1041408
        %v3761 = vsel %vm3759, %v3724, 0
        %v3764 = vsel %vm3759, %v3725, 0
        %v3767 = vsel %vm3759, %v3726, 0
        %v3770 = vsel %vm3759, %v3727, 0
        %v3773 = vsel %vm3759, %v3728, 0
        %v3776 = vsel %vm3759, %v3729, 0
        %v3779 = vsel %vm3759, %v3730, 0
        %v3782 = vsel %vm3759, %v3731, 0
        %v3785 = vsel %vm3759, %v3732, 0
        %3787 = vmatpush.msra.mxu0 %v3130
        %3788 = vmatpush.msra.mxu0 %v3121
        %3789 = vmatpush.msra.mxu0 %v3112
        %3790 = vmatpush.msra.mxu0 %v3103
        %3791 = vmatpush.msra.mxu0 %v3094
        %3792 = vmatpush.msra.mxu0 %v3085
        %3793 = vmatpush.msra.mxu0 %v3076
        %3794 = vmatpush.msra.mxu0 %v3067
        %3795 = vmatpush.msra.mxu0 %v3058
        %3796 = vmatpush.msra.mxu0 %v3049
        %3797 = vmatpush.msra.mxu0 %v3040
        %3798 = vmatpush.msra.mxu0 %v3031
        %3799 = vmatpush.msra.mxu0 %v3022
        %3800 = vmatpush.msra.mxu0 %v3013
        %3801 = vmatpush.msra.mxu0 %v3004
        %3802 = vmatpush.msra.mxu0 %v2995
        %3803 = vmatmul.f32.gmra.mxu0 %v2989
        %v3804 = vpop.f32.mrf.mxu0
        %v3805 = vadd.f32 %v3737, %v3804
        %3806 = vdwg.mxu0
        %3807 = vmatpush.msra.mxu0 %v3274
        %3808 = vmatpush.msra.mxu0 %v3265
        %3809 = vmatpush.msra.mxu0 %v3256
        %3810 = vmatpush.msra.mxu0 %v3247
        %3811 = vmatpush.msra.mxu0 %v3238
        %3812 = vmatpush.msra.mxu0 %v3229
        %3813 = vmatpush.msra.mxu0 %v3220
        %3814 = vmatpush.msra.mxu0 %v3211
        %3815 = vmatpush.msra.mxu0 %v3202
        %3816 = vmatpush.msra.mxu0 %v3193
        %3817 = vmatpush.msra.mxu0 %v3184
        %3818 = vmatpush.msra.mxu0 %v3175
        %3819 = vmatpush.msra.mxu0 %v3166
        %3820 = vmatpush.msra.mxu0 %v3157
        %3821 = vmatpush.msra.mxu0 %v3148
        %3822 = vmatpush.msra.mxu0 %v3139
        %3823 = vmatmul.f32.gmra.mxu0 %v2990
        %v3824 = vpop.f32.mrf.mxu0
        %v3825 = vadd.f32 %v3805, %v3824
        %3826 = vdwg.mxu0
        %3827 = vmatpush.msra.mxu0 %v3418
        %3828 = vmatpush.msra.mxu0 %v3409
        %3829 = vmatpush.msra.mxu0 %v3400
        %3830 = vmatpush.msra.mxu0 %v3391
        %3831 = vmatpush.msra.mxu0 %v3382
        %3832 = vmatpush.msra.mxu0 %v3373
        %3833 = vmatpush.msra.mxu0 %v3364
        %3834 = vmatpush.msra.mxu0 %v3355
        %3835 = vmatpush.msra.mxu0 %v3346
        %3836 = vmatpush.msra.mxu0 %v3337
        %3837 = vmatpush.msra.mxu0 %v3328
        %3838 = vmatpush.msra.mxu0 %v3319
        %3839 = vmatpush.msra.mxu0 %v3310
        %3840 = vmatpush.msra.mxu0 %v3301
        %3841 = vmatpush.msra.mxu0 %v3292
        %3842 = vmatpush.msra.mxu0 %v3283
        %3843 = vmatmul.f32.gmra.mxu0 %v2991
        %v3844 = vpop.f32.mrf.mxu0
        %v3845 = vadd.f32 %v3825, %v3844
        %3846 = vdwg.mxu0
        %3847 = vmatpush.msra.mxu0 %v3562
        %3848 = vmatpush.msra.mxu0 %v3553
        %3849 = vmatpush.msra.mxu0 %v3544
        %3850 = vmatpush.msra.mxu0 %v3535
        %3851 = vmatpush.msra.mxu0 %v3526
        %3852 = vmatpush.msra.mxu0 %v3517
        %3853 = vmatpush.msra.mxu0 %v3508
        %3854 = vmatpush.msra.mxu0 %v3499
        %3855 = vmatpush.msra.mxu0 %v3490
        %3856 = vmatpush.msra.mxu0 %v3481
        %3857 = vmatpush.msra.mxu0 %v3472
        %3858 = vmatpush.msra.mxu0 %v3463
        %3859 = vmatpush.msra.mxu0 %v3454
        %3860 = vmatpush.msra.mxu0 %v3445
        %3861 = vmatpush.msra.mxu0 %v3436
        %3862 = vmatpush.msra.mxu0 %v3427
        %3863 = vmatmul.f32.gmra.mxu0 %v2992
        %v3864 = vpop.f32.mrf.mxu0
        %v3865 = vadd.f32 %v3845, %v3864
        %3866 = vdwg.mxu0
        %3867 = vmatpush.msra.mxu0 %v3706
        %3868 = vmatpush.msra.mxu0 %v3697
        %3869 = vmatpush.msra.mxu0 %v3688
        %3870 = vmatpush.msra.mxu0 %v3679
        %3871 = vmatpush.msra.mxu0 %v3670
        %3872 = vmatpush.msra.mxu0 %v3661
        %3873 = vmatpush.msra.mxu0 %v3652
        %3874 = vmatpush.msra.mxu0 %v3643
        %3875 = vmatpush.msra.mxu0 %v3634
        %3876 = vmatpush.msra.mxu0 %v3625
        %3877 = vmatpush.msra.mxu0 %v3616
        %3878 = vmatpush.msra.mxu0 %v3607
        %3879 = vmatpush.msra.mxu0 %v3598
        %3880 = vmatpush.msra.mxu0 %v3589
        %3881 = vmatpush.msra.mxu0 %v3580
        %3882 = vmatpush.msra.mxu0 %v3571
        %3883 = vmatmul.f32.gmra.mxu0 %v2993
        %v3884 = vpop.f32.mrf.mxu0
        %v3885 = vadd.f32 %v3865, %v3884
        %3886 = vdwg.mxu0
        %3887 = vmatpush.msra.mxu0 0.0
        %3888 = vmatpush.msra.mxu0 0.0
        %3889 = vmatpush.msra.mxu0 0.0
        %3890 = vmatpush.msra.mxu0 0.0
        %3891 = vmatpush.msra.mxu0 0.0
        %3892 = vmatpush.msra.mxu0 0.0
        %3893 = vmatpush.msra.mxu0 0.0
        %3894 = vmatpush.msra.mxu0 0.0
        %3895 = vmatpush.msra.mxu0 0.0
        %3896 = vmatpush.msra.mxu0 0.0
        %3897 = vmatpush.msra.mxu0 0.0
        %3898 = vmatpush.msra.mxu0 0.0
        %3899 = vmatpush.msra.mxu0 0.0
        %3900 = vmatpush.msra.mxu0 0.0
        %3901 = vmatpush.msra.mxu0 %v3761
        %3902 = vmatpush.msra.mxu0 %v3715
        %3903 = vmatmul.f32.gmra.mxu0 %v3757
        %v3904 = vpop.f32.mrf.mxu0
        %v3905 = vadd.f32 %v3885, %v3904
        %3906 = vdwg.mxu0
        %3907 = vmatpush.msra.mxu0 %v3131
        %3908 = vmatpush.msra.mxu0 %v3122
        %3909 = vmatpush.msra.mxu0 %v3113
        %3910 = vmatpush.msra.mxu0 %v3104
        %3911 = vmatpush.msra.mxu0 %v3095
        %3912 = vmatpush.msra.mxu0 %v3086
        %3913 = vmatpush.msra.mxu0 %v3077
        %3914 = vmatpush.msra.mxu0 %v3068
        %3915 = vmatpush.msra.mxu0 %v3059
        %3916 = vmatpush.msra.mxu0 %v3050
        %3917 = vmatpush.msra.mxu0 %v3041
        %3918 = vmatpush.msra.mxu0 %v3032
        %3919 = vmatpush.msra.mxu0 %v3023
        %3920 = vmatpush.msra.mxu0 %v3014
        %3921 = vmatpush.msra.mxu0 %v3005
        %3922 = vmatpush.msra.mxu0 %v2996
        %3923 = vmatmul.f32.gmra.mxu0 %v2989
        %v3924 = vpop.f32.mrf.mxu0
        %v3925 = vadd.f32 %v3738, %v3924
        %3926 = vdwg.mxu0
        %3927 = vmatpush.msra.mxu0 %v3275
        %3928 = vmatpush.msra.mxu0 %v3266
        %3929 = vmatpush.msra.mxu0 %v3257
        %3930 = vmatpush.msra.mxu0 %v3248
        %3931 = vmatpush.msra.mxu0 %v3239
        %3932 = vmatpush.msra.mxu0 %v3230
        %3933 = vmatpush.msra.mxu0 %v3221
        %3934 = vmatpush.msra.mxu0 %v3212
        %3935 = vmatpush.msra.mxu0 %v3203
        %3936 = vmatpush.msra.mxu0 %v3194
        %3937 = vmatpush.msra.mxu0 %v3185
        %3938 = vmatpush.msra.mxu0 %v3176
        %3939 = vmatpush.msra.mxu0 %v3167
        %3940 = vmatpush.msra.mxu0 %v3158
        %3941 = vmatpush.msra.mxu0 %v3149
        %3942 = vmatpush.msra.mxu0 %v3140
        %3943 = vmatmul.f32.gmra.mxu0 %v2990
        %v3944 = vpop.f32.mrf.mxu0
        %v3945 = vadd.f32 %v3925, %v3944
        %3946 = vdwg.mxu0
        %3947 = vmatpush.msra.mxu0 %v3419
        %3948 = vmatpush.msra.mxu0 %v3410
        %3949 = vmatpush.msra.mxu0 %v3401
        %3950 = vmatpush.msra.mxu0 %v3392
        %3951 = vmatpush.msra.mxu0 %v3383
        %3952 = vmatpush.msra.mxu0 %v3374
        %3953 = vmatpush.msra.mxu0 %v3365
        %3954 = vmatpush.msra.mxu0 %v3356
        %3955 = vmatpush.msra.mxu0 %v3347
        %3956 = vmatpush.msra.mxu0 %v3338
        %3957 = vmatpush.msra.mxu0 %v3329
        %3958 = vmatpush.msra.mxu0 %v3320
        %3959 = vmatpush.msra.mxu0 %v3311
        %3960 = vmatpush.msra.mxu0 %v3302
        %3961 = vmatpush.msra.mxu0 %v3293
        %3962 = vmatpush.msra.mxu0 %v3284
        %3963 = vmatmul.f32.gmra.mxu0 %v2991
        %v3964 = vpop.f32.mrf.mxu0
        %v3965 = vadd.f32 %v3945, %v3964
        %3966 = vdwg.mxu0
        %3967 = vmatpush.msra.mxu0 %v3563
        %3968 = vmatpush.msra.mxu0 %v3554
        %3969 = vmatpush.msra.mxu0 %v3545
        %3970 = vmatpush.msra.mxu0 %v3536
        %3971 = vmatpush.msra.mxu0 %v3527
        %3972 = vmatpush.msra.mxu0 %v3518
        %3973 = vmatpush.msra.mxu0 %v3509
        %3974 = vmatpush.msra.mxu0 %v3500
        %3975 = vmatpush.msra.mxu0 %v3491
        %3976 = vmatpush.msra.mxu0 %v3482
        %3977 = vmatpush.msra.mxu0 %v3473
        %3978 = vmatpush.msra.mxu0 %v3464
        %3979 = vmatpush.msra.mxu0 %v3455
        %3980 = vmatpush.msra.mxu0 %v3446
        %3981 = vmatpush.msra.mxu0 %v3437
        %3982 = vmatpush.msra.mxu0 %v3428
        %3983 = vmatmul.f32.gmra.mxu0 %v2992
        %v3984 = vpop.f32.mrf.mxu0
        %v3985 = vadd.f32 %v3965, %v3984
        %3986 = vdwg.mxu0
        %3987 = vmatpush.msra.mxu0 %v3707
        %3988 = vmatpush.msra.mxu0 %v3698
        %3989 = vmatpush.msra.mxu0 %v3689
        %3990 = vmatpush.msra.mxu0 %v3680
        %3991 = vmatpush.msra.mxu0 %v3671
        %3992 = vmatpush.msra.mxu0 %v3662
        %3993 = vmatpush.msra.mxu0 %v3653
        %3994 = vmatpush.msra.mxu0 %v3644
        %3995 = vmatpush.msra.mxu0 %v3635
        %3996 = vmatpush.msra.mxu0 %v3626
        %3997 = vmatpush.msra.mxu0 %v3617
        %3998 = vmatpush.msra.mxu0 %v3608
        %3999 = vmatpush.msra.mxu0 %v3599
        %4000 = vmatpush.msra.mxu0 %v3590
        %4001 = vmatpush.msra.mxu0 %v3581
        %4002 = vmatpush.msra.mxu0 %v3572
        %4003 = vmatmul.f32.gmra.mxu0 %v2993
        %v4004 = vpop.f32.mrf.mxu0
        %v4005 = vadd.f32 %v3985, %v4004
        %4006 = vdwg.mxu0
        %4007 = vmatpush.msra.mxu0 0.0
        %4008 = vmatpush.msra.mxu0 0.0
        %4009 = vmatpush.msra.mxu0 0.0
        %4010 = vmatpush.msra.mxu0 0.0
        %4011 = vmatpush.msra.mxu0 0.0
        %4012 = vmatpush.msra.mxu0 0.0
        %4013 = vmatpush.msra.mxu0 0.0
        %4014 = vmatpush.msra.mxu0 0.0
        %4015 = vmatpush.msra.mxu0 0.0
        %4016 = vmatpush.msra.mxu0 0.0
        %4017 = vmatpush.msra.mxu0 0.0
        %4018 = vmatpush.msra.mxu0 0.0
        %4019 = vmatpush.msra.mxu0 0.0
        %4020 = vmatpush.msra.mxu0 0.0
        %4021 = vmatpush.msra.mxu0 %v3764
        %4022 = vmatpush.msra.mxu0 %v3716
        %4023 = vmatmul.f32.gmra.mxu0 %v3757
        %v4024 = vpop.f32.mrf.mxu0
        %v4025 = vadd.f32 %v4005, %v4024
        %4026 = vdwg.mxu0
        %4027 = vmatpush.msra.mxu0 %v3132
        %4028 = vmatpush.msra.mxu0 %v3123
        %4029 = vmatpush.msra.mxu0 %v3114
        %4030 = vmatpush.msra.mxu0 %v3105
        %4031 = vmatpush.msra.mxu0 %v3096
        %4032 = vmatpush.msra.mxu0 %v3087
        %4033 = vmatpush.msra.mxu0 %v3078
        %4034 = vmatpush.msra.mxu0 %v3069
        %4035 = vmatpush.msra.mxu0 %v3060
        %4036 = vmatpush.msra.mxu0 %v3051
        %4037 = vmatpush.msra.mxu0 %v3042
        %4038 = vmatpush.msra.mxu0 %v3033
        %4039 = vmatpush.msra.mxu0 %v3024
        %4040 = vmatpush.msra.mxu0 %v3015
        %4041 = vmatpush.msra.mxu0 %v3006
        %4042 = vmatpush.msra.mxu0 %v2997
        %4043 = vmatmul.f32.gmra.mxu0 %v2989
        %v4044 = vpop.f32.mrf.mxu0
        %v4045 = vadd.f32 %v3739, %v4044
        %4046 = vdwg.mxu0
        %4047 = vmatpush.msra.mxu0 %v3276
        %4048 = vmatpush.msra.mxu0 %v3267
        %4049 = vmatpush.msra.mxu0 %v3258
        %4050 = vmatpush.msra.mxu0 %v3249
        %4051 = vmatpush.msra.mxu0 %v3240
        %4052 = vmatpush.msra.mxu0 %v3231
        %4053 = vmatpush.msra.mxu0 %v3222
        %4054 = vmatpush.msra.mxu0 %v3213
        %4055 = vmatpush.msra.mxu0 %v3204
        %4056 = vmatpush.msra.mxu0 %v3195
        %4057 = vmatpush.msra.mxu0 %v3186
        %4058 = vmatpush.msra.mxu0 %v3177
        %4059 = vmatpush.msra.mxu0 %v3168
        %4060 = vmatpush.msra.mxu0 %v3159
        %4061 = vmatpush.msra.mxu0 %v3150
        %4062 = vmatpush.msra.mxu0 %v3141
        %4063 = vmatmul.f32.gmra.mxu0 %v2990
        %v4064 = vpop.f32.mrf.mxu0
        %v4065 = vadd.f32 %v4045, %v4064
        %4066 = vdwg.mxu0
        %4067 = vmatpush.msra.mxu0 %v3420
        %4068 = vmatpush.msra.mxu0 %v3411
        %4069 = vmatpush.msra.mxu0 %v3402
        %4070 = vmatpush.msra.mxu0 %v3393
        %4071 = vmatpush.msra.mxu0 %v3384
        %4072 = vmatpush.msra.mxu0 %v3375
        %4073 = vmatpush.msra.mxu0 %v3366
        %4074 = vmatpush.msra.mxu0 %v3357
        %4075 = vmatpush.msra.mxu0 %v3348
        %4076 = vmatpush.msra.mxu0 %v3339
        %4077 = vmatpush.msra.mxu0 %v3330
        %4078 = vmatpush.msra.mxu0 %v3321
        %4079 = vmatpush.msra.mxu0 %v3312
        %4080 = vmatpush.msra.mxu0 %v3303
        %4081 = vmatpush.msra.mxu0 %v3294
        %4082 = vmatpush.msra.mxu0 %v3285
        %4083 = vmatmul.f32.gmra.mxu0 %v2991
        %v4084 = vpop.f32.mrf.mxu0
        %v4085 = vadd.f32 %v4065, %v4084
        %4086 = vdwg.mxu0
        %4087 = vmatpush.msra.mxu0 %v3564
        %4088 = vmatpush.msra.mxu0 %v3555
        %4089 = vmatpush.msra.mxu0 %v3546
        %4090 = vmatpush.msra.mxu0 %v3537
        %4091 = vmatpush.msra.mxu0 %v3528
        %4092 = vmatpush.msra.mxu0 %v3519
        %4093 = vmatpush.msra.mxu0 %v3510
        %4094 = vmatpush.msra.mxu0 %v3501
        %4095 = vmatpush.msra.mxu0 %v3492
        %4096 = vmatpush.msra.mxu0 %v3483
        %4097 = vmatpush.msra.mxu0 %v3474
        %4098 = vmatpush.msra.mxu0 %v3465
        %4099 = vmatpush.msra.mxu0 %v3456
        %4100 = vmatpush.msra.mxu0 %v3447
        %4101 = vmatpush.msra.mxu0 %v3438
        %4102 = vmatpush.msra.mxu0 %v3429
        %4103 = vmatmul.f32.gmra.mxu0 %v2992
        %v4104 = vpop.f32.mrf.mxu0
        %v4105 = vadd.f32 %v4085, %v4104
        %4106 = vdwg.mxu0
        %4107 = vmatpush.msra.mxu0 %v3708
        %4108 = vmatpush.msra.mxu0 %v3699
        %4109 = vmatpush.msra.mxu0 %v3690
        %4110 = vmatpush.msra.mxu0 %v3681
        %4111 = vmatpush.msra.mxu0 %v3672
        %4112 = vmatpush.msra.mxu0 %v3663
        %4113 = vmatpush.msra.mxu0 %v3654
        %4114 = vmatpush.msra.mxu0 %v3645
        %4115 = vmatpush.msra.mxu0 %v3636
        %4116 = vmatpush.msra.mxu0 %v3627
        %4117 = vmatpush.msra.mxu0 %v3618
        %4118 = vmatpush.msra.mxu0 %v3609
        %4119 = vmatpush.msra.mxu0 %v3600
        %4120 = vmatpush.msra.mxu0 %v3591
        %4121 = vmatpush.msra.mxu0 %v3582
        %4122 = vmatpush.msra.mxu0 %v3573
        %4123 = vmatmul.f32.gmra.mxu0 %v2993
        %v4124 = vpop.f32.mrf.mxu0
        %v4125 = vadd.f32 %v4105, %v4124
        %4126 = vdwg.mxu0
        %4127 = vmatpush.msra.mxu0 0.0
        %4128 = vmatpush.msra.mxu0 0.0
        %4129 = vmatpush.msra.mxu0 0.0
        %4130 = vmatpush.msra.mxu0 0.0
        %4131 = vmatpush.msra.mxu0 0.0
        %4132 = vmatpush.msra.mxu0 0.0
        %4133 = vmatpush.msra.mxu0 0.0
        %4134 = vmatpush.msra.mxu0 0.0
        %4135 = vmatpush.msra.mxu0 0.0
        %4136 = vmatpush.msra.mxu0 0.0
        %4137 = vmatpush.msra.mxu0 0.0
        %4138 = vmatpush.msra.mxu0 0.0
        %4139 = vmatpush.msra.mxu0 0.0
        %4140 = vmatpush.msra.mxu0 0.0
        %4141 = vmatpush.msra.mxu0 %v3767
        %4142 = vmatpush.msra.mxu0 %v3717
        %4143 = vmatmul.f32.gmra.mxu0 %v3757
        %v4144 = vpop.f32.mrf.mxu0
        %v4145 = vadd.f32 %v4125, %v4144
        %4146 = vdwg.mxu0
        %4147 = vmatpush.msra.mxu0 %v3133
        %4148 = vmatpush.msra.mxu0 %v3124
        %4149 = vmatpush.msra.mxu0 %v3115
        %4150 = vmatpush.msra.mxu0 %v3106
        %4151 = vmatpush.msra.mxu0 %v3097
        %4152 = vmatpush.msra.mxu0 %v3088
        %4153 = vmatpush.msra.mxu0 %v3079
        %4154 = vmatpush.msra.mxu0 %v3070
        %4155 = vmatpush.msra.mxu0 %v3061
        %4156 = vmatpush.msra.mxu0 %v3052
        %4157 = vmatpush.msra.mxu0 %v3043
        %4158 = vmatpush.msra.mxu0 %v3034
        %4159 = vmatpush.msra.mxu0 %v3025
        %4160 = vmatpush.msra.mxu0 %v3016
        %4161 = vmatpush.msra.mxu0 %v3007
        %4162 = vmatpush.msra.mxu0 %v2998
        %4163 = vmatmul.f32.gmra.mxu0 %v2989
        %v4164 = vpop.f32.mrf.mxu0
        %v4165 = vadd.f32 %v3740, %v4164
        %4166 = vdwg.mxu0
        %4167 = vmatpush.msra.mxu0 %v3277
        %4168 = vmatpush.msra.mxu0 %v3268
        %4169 = vmatpush.msra.mxu0 %v3259
        %4170 = vmatpush.msra.mxu0 %v3250
        %4171 = vmatpush.msra.mxu0 %v3241
        %4172 = vmatpush.msra.mxu0 %v3232
        %4173 = vmatpush.msra.mxu0 %v3223
        %4174 = vmatpush.msra.mxu0 %v3214
        %4175 = vmatpush.msra.mxu0 %v3205
        %4176 = vmatpush.msra.mxu0 %v3196
        %4177 = vmatpush.msra.mxu0 %v3187
        %4178 = vmatpush.msra.mxu0 %v3178
        %4179 = vmatpush.msra.mxu0 %v3169
        %4180 = vmatpush.msra.mxu0 %v3160
        %4181 = vmatpush.msra.mxu0 %v3151
        %4182 = vmatpush.msra.mxu0 %v3142
        %4183 = vmatmul.f32.gmra.mxu0 %v2990
        %v4184 = vpop.f32.mrf.mxu0
        %v4185 = vadd.f32 %v4165, %v4184
        %4186 = vdwg.mxu0
        %4187 = vmatpush.msra.mxu0 %v3421
        %4188 = vmatpush.msra.mxu0 %v3412
        %4189 = vmatpush.msra.mxu0 %v3403
        %4190 = vmatpush.msra.mxu0 %v3394
        %4191 = vmatpush.msra.mxu0 %v3385
        %4192 = vmatpush.msra.mxu0 %v3376
        %4193 = vmatpush.msra.mxu0 %v3367
        %4194 = vmatpush.msra.mxu0 %v3358
        %4195 = vmatpush.msra.mxu0 %v3349
        %4196 = vmatpush.msra.mxu0 %v3340
        %4197 = vmatpush.msra.mxu0 %v3331
        %4198 = vmatpush.msra.mxu0 %v3322
        %4199 = vmatpush.msra.mxu0 %v3313
        %4200 = vmatpush.msra.mxu0 %v3304
        %4201 = vmatpush.msra.mxu0 %v3295
        %4202 = vmatpush.msra.mxu0 %v3286
        %4203 = vmatmul.f32.gmra.mxu0 %v2991
        %v4204 = vpop.f32.mrf.mxu0
        %v4205 = vadd.f32 %v4185, %v4204
        %4206 = vdwg.mxu0
        %4207 = vmatpush.msra.mxu0 %v3565
        %4208 = vmatpush.msra.mxu0 %v3556
        %4209 = vmatpush.msra.mxu0 %v3547
        %4210 = vmatpush.msra.mxu0 %v3538
        %4211 = vmatpush.msra.mxu0 %v3529
        %4212 = vmatpush.msra.mxu0 %v3520
        %4213 = vmatpush.msra.mxu0 %v3511
        %4214 = vmatpush.msra.mxu0 %v3502
        %4215 = vmatpush.msra.mxu0 %v3493
        %4216 = vmatpush.msra.mxu0 %v3484
        %4217 = vmatpush.msra.mxu0 %v3475
        %4218 = vmatpush.msra.mxu0 %v3466
        %4219 = vmatpush.msra.mxu0 %v3457
        %4220 = vmatpush.msra.mxu0 %v3448
        %4221 = vmatpush.msra.mxu0 %v3439
        %4222 = vmatpush.msra.mxu0 %v3430
        %4223 = vmatmul.f32.gmra.mxu0 %v2992
        %v4224 = vpop.f32.mrf.mxu0
        %v4225 = vadd.f32 %v4205, %v4224
        %4226 = vdwg.mxu0
        %4227 = vmatpush.msra.mxu0 %v3709
        %4228 = vmatpush.msra.mxu0 %v3700
        %4229 = vmatpush.msra.mxu0 %v3691
        %4230 = vmatpush.msra.mxu0 %v3682
        %4231 = vmatpush.msra.mxu0 %v3673
        %4232 = vmatpush.msra.mxu0 %v3664
        %4233 = vmatpush.msra.mxu0 %v3655
        %4234 = vmatpush.msra.mxu0 %v3646
        %4235 = vmatpush.msra.mxu0 %v3637
        %4236 = vmatpush.msra.mxu0 %v3628
        %4237 = vmatpush.msra.mxu0 %v3619
        %4238 = vmatpush.msra.mxu0 %v3610
        %4239 = vmatpush.msra.mxu0 %v3601
        %4240 = vmatpush.msra.mxu0 %v3592
        %4241 = vmatpush.msra.mxu0 %v3583
        %4242 = vmatpush.msra.mxu0 %v3574
        %4243 = vmatmul.f32.gmra.mxu0 %v2993
        %v4244 = vpop.f32.mrf.mxu0
        %v4245 = vadd.f32 %v4225, %v4244
        %4246 = vdwg.mxu0
        %4247 = vmatpush.msra.mxu0 0.0
        %4248 = vmatpush.msra.mxu0 0.0
        %4249 = vmatpush.msra.mxu0 0.0
        %4250 = vmatpush.msra.mxu0 0.0
        %4251 = vmatpush.msra.mxu0 0.0
        %4252 = vmatpush.msra.mxu0 0.0
        %4253 = vmatpush.msra.mxu0 0.0
        %4254 = vmatpush.msra.mxu0 0.0
        %4255 = vmatpush.msra.mxu0 0.0
        %4256 = vmatpush.msra.mxu0 0.0
        %4257 = vmatpush.msra.mxu0 0.0
        %4258 = vmatpush.msra.mxu0 0.0
        %4259 = vmatpush.msra.mxu0 0.0
        %4260 = vmatpush.msra.mxu0 0.0
        %4261 = vmatpush.msra.mxu0 %v3770
        %4262 = vmatpush.msra.mxu0 %v3718
        %4263 = vmatmul.f32.gmra.mxu0 %v3757
        %v4264 = vpop.f32.mrf.mxu0
        %v4265 = vadd.f32 %v4245, %v4264
        %4266 = vdwg.mxu0
        %4267 = vmatpush.msra.mxu0 %v3134
        %4268 = vmatpush.msra.mxu0 %v3125
        %4269 = vmatpush.msra.mxu0 %v3116
        %4270 = vmatpush.msra.mxu0 %v3107
        %4271 = vmatpush.msra.mxu0 %v3098
        %4272 = vmatpush.msra.mxu0 %v3089
        %4273 = vmatpush.msra.mxu0 %v3080
        %4274 = vmatpush.msra.mxu0 %v3071
        %4275 = vmatpush.msra.mxu0 %v3062
        %4276 = vmatpush.msra.mxu0 %v3053
        %4277 = vmatpush.msra.mxu0 %v3044
        %4278 = vmatpush.msra.mxu0 %v3035
        %4279 = vmatpush.msra.mxu0 %v3026
        %4280 = vmatpush.msra.mxu0 %v3017
        %4281 = vmatpush.msra.mxu0 %v3008
        %4282 = vmatpush.msra.mxu0 %v2999
        %4283 = vmatmul.f32.gmra.mxu0 %v2989
        %v4284 = vpop.f32.mrf.mxu0
        %v4285 = vadd.f32 %v3741, %v4284
        %4286 = vdwg.mxu0
        %4287 = vmatpush.msra.mxu0 %v3278
        %4288 = vmatpush.msra.mxu0 %v3269
        %4289 = vmatpush.msra.mxu0 %v3260
        %4290 = vmatpush.msra.mxu0 %v3251
        %4291 = vmatpush.msra.mxu0 %v3242
        %4292 = vmatpush.msra.mxu0 %v3233
        %4293 = vmatpush.msra.mxu0 %v3224
        %4294 = vmatpush.msra.mxu0 %v3215
        %4295 = vmatpush.msra.mxu0 %v3206
        %4296 = vmatpush.msra.mxu0 %v3197
        %4297 = vmatpush.msra.mxu0 %v3188
        %4298 = vmatpush.msra.mxu0 %v3179
        %4299 = vmatpush.msra.mxu0 %v3170
        %4300 = vmatpush.msra.mxu0 %v3161
        %4301 = vmatpush.msra.mxu0 %v3152
        %4302 = vmatpush.msra.mxu0 %v3143
        %4303 = vmatmul.f32.gmra.mxu0 %v2990
        %v4304 = vpop.f32.mrf.mxu0
        %v4305 = vadd.f32 %v4285, %v4304
        %4306 = vdwg.mxu0
        %4307 = vmatpush.msra.mxu0 %v3422
        %4308 = vmatpush.msra.mxu0 %v3413
        %4309 = vmatpush.msra.mxu0 %v3404
        %4310 = vmatpush.msra.mxu0 %v3395
        %4311 = vmatpush.msra.mxu0 %v3386
        %4312 = vmatpush.msra.mxu0 %v3377
        %4313 = vmatpush.msra.mxu0 %v3368
        %4314 = vmatpush.msra.mxu0 %v3359
        %4315 = vmatpush.msra.mxu0 %v3350
        %4316 = vmatpush.msra.mxu0 %v3341
        %4317 = vmatpush.msra.mxu0 %v3332
        %4318 = vmatpush.msra.mxu0 %v3323
        %4319 = vmatpush.msra.mxu0 %v3314
        %4320 = vmatpush.msra.mxu0 %v3305
        %4321 = vmatpush.msra.mxu0 %v3296
        %4322 = vmatpush.msra.mxu0 %v3287
        %4323 = vmatmul.f32.gmra.mxu0 %v2991
        %v4324 = vpop.f32.mrf.mxu0
        %v4325 = vadd.f32 %v4305, %v4324
        %4326 = vdwg.mxu0
        %4327 = vmatpush.msra.mxu0 %v3566
        %4328 = vmatpush.msra.mxu0 %v3557
        %4329 = vmatpush.msra.mxu0 %v3548
        %4330 = vmatpush.msra.mxu0 %v3539
        %4331 = vmatpush.msra.mxu0 %v3530
        %4332 = vmatpush.msra.mxu0 %v3521
        %4333 = vmatpush.msra.mxu0 %v3512
        %4334 = vmatpush.msra.mxu0 %v3503
        %4335 = vmatpush.msra.mxu0 %v3494
        %4336 = vmatpush.msra.mxu0 %v3485
        %4337 = vmatpush.msra.mxu0 %v3476
        %4338 = vmatpush.msra.mxu0 %v3467
        %4339 = vmatpush.msra.mxu0 %v3458
        %4340 = vmatpush.msra.mxu0 %v3449
        %4341 = vmatpush.msra.mxu0 %v3440
        %4342 = vmatpush.msra.mxu0 %v3431
        %4343 = vmatmul.f32.gmra.mxu0 %v2992
        %v4344 = vpop.f32.mrf.mxu0
        %v4345 = vadd.f32 %v4325, %v4344
        %4346 = vdwg.mxu0
        %4347 = vmatpush.msra.mxu0 %v3710
        %4348 = vmatpush.msra.mxu0 %v3701
        %4349 = vmatpush.msra.mxu0 %v3692
        %4350 = vmatpush.msra.mxu0 %v3683
        %4351 = vmatpush.msra.mxu0 %v3674
        %4352 = vmatpush.msra.mxu0 %v3665
        %4353 = vmatpush.msra.mxu0 %v3656
        %4354 = vmatpush.msra.mxu0 %v3647
        %4355 = vmatpush.msra.mxu0 %v3638
        %4356 = vmatpush.msra.mxu0 %v3629
        %4357 = vmatpush.msra.mxu0 %v3620
        %4358 = vmatpush.msra.mxu0 %v3611
        %4359 = vmatpush.msra.mxu0 %v3602
        %4360 = vmatpush.msra.mxu0 %v3593
        %4361 = vmatpush.msra.mxu0 %v3584
        %4362 = vmatpush.msra.mxu0 %v3575
        %4363 = vmatmul.f32.gmra.mxu0 %v2993
        %v4364 = vpop.f32.mrf.mxu0
        %v4365 = vadd.f32 %v4345, %v4364
        %4366 = vdwg.mxu0
        %4367 = vmatpush.msra.mxu0 0.0
        %4368 = vmatpush.msra.mxu0 0.0
        %4369 = vmatpush.msra.mxu0 0.0
        %4370 = vmatpush.msra.mxu0 0.0
        %4371 = vmatpush.msra.mxu0 0.0
        %4372 = vmatpush.msra.mxu0 0.0
        %4373 = vmatpush.msra.mxu0 0.0
        %4374 = vmatpush.msra.mxu0 0.0
        %4375 = vmatpush.msra.mxu0 0.0
        %4376 = vmatpush.msra.mxu0 0.0
        %4377 = vmatpush.msra.mxu0 0.0
        %4378 = vmatpush.msra.mxu0 0.0
        %4379 = vmatpush.msra.mxu0 0.0
        %4380 = vmatpush.msra.mxu0 0.0
        %4381 = vmatpush.msra.mxu0 %v3773
        %4382 = vmatpush.msra.mxu0 %v3719
        %4383 = vmatmul.f32.gmra.mxu0 %v3757
        %v4384 = vpop.f32.mrf.mxu0
        %v4385 = vadd.f32 %v4365, %v4384
        %4386 = vdwg.mxu0
        %4387 = vmatpush.msra.mxu0 %v3135
        %4388 = vmatpush.msra.mxu0 %v3126
        %4389 = vmatpush.msra.mxu0 %v3117
        %4390 = vmatpush.msra.mxu0 %v3108
        %4391 = vmatpush.msra.mxu0 %v3099
        %4392 = vmatpush.msra.mxu0 %v3090
        %4393 = vmatpush.msra.mxu0 %v3081
        %4394 = vmatpush.msra.mxu0 %v3072
        %4395 = vmatpush.msra.mxu0 %v3063
        %4396 = vmatpush.msra.mxu0 %v3054
        %4397 = vmatpush.msra.mxu0 %v3045
        %4398 = vmatpush.msra.mxu0 %v3036
        %4399 = vmatpush.msra.mxu0 %v3027
        %4400 = vmatpush.msra.mxu0 %v3018
        %4401 = vmatpush.msra.mxu0 %v3009
        %4402 = vmatpush.msra.mxu0 %v3000
        %4403 = vmatmul.f32.gmra.mxu0 %v2989
        %v4404 = vpop.f32.mrf.mxu0
        %v4405 = vadd.f32 %v3742, %v4404
        %4406 = vdwg.mxu0
        %4407 = vmatpush.msra.mxu0 %v3279
        %4408 = vmatpush.msra.mxu0 %v3270
        %4409 = vmatpush.msra.mxu0 %v3261
        %4410 = vmatpush.msra.mxu0 %v3252
        %4411 = vmatpush.msra.mxu0 %v3243
        %4412 = vmatpush.msra.mxu0 %v3234
        %4413 = vmatpush.msra.mxu0 %v3225
        %4414 = vmatpush.msra.mxu0 %v3216
        %4415 = vmatpush.msra.mxu0 %v3207
        %4416 = vmatpush.msra.mxu0 %v3198
        %4417 = vmatpush.msra.mxu0 %v3189
        %4418 = vmatpush.msra.mxu0 %v3180
        %4419 = vmatpush.msra.mxu0 %v3171
        %4420 = vmatpush.msra.mxu0 %v3162
        %4421 = vmatpush.msra.mxu0 %v3153
        %4422 = vmatpush.msra.mxu0 %v3144
        %4423 = vmatmul.f32.gmra.mxu0 %v2990
        %v4424 = vpop.f32.mrf.mxu0
        %v4425 = vadd.f32 %v4405, %v4424
        %4426 = vdwg.mxu0
        %4427 = vmatpush.msra.mxu0 %v3423
        %4428 = vmatpush.msra.mxu0 %v3414
        %4429 = vmatpush.msra.mxu0 %v3405
        %4430 = vmatpush.msra.mxu0 %v3396
        %4431 = vmatpush.msra.mxu0 %v3387
        %4432 = vmatpush.msra.mxu0 %v3378
        %4433 = vmatpush.msra.mxu0 %v3369
        %4434 = vmatpush.msra.mxu0 %v3360
        %4435 = vmatpush.msra.mxu0 %v3351
        %4436 = vmatpush.msra.mxu0 %v3342
        %4437 = vmatpush.msra.mxu0 %v3333
        %4438 = vmatpush.msra.mxu0 %v3324
        %4439 = vmatpush.msra.mxu0 %v3315
        %4440 = vmatpush.msra.mxu0 %v3306
        %4441 = vmatpush.msra.mxu0 %v3297
        %4442 = vmatpush.msra.mxu0 %v3288
        %4443 = vmatmul.f32.gmra.mxu0 %v2991
        %v4444 = vpop.f32.mrf.mxu0
        %v4445 = vadd.f32 %v4425, %v4444
        %4446 = vdwg.mxu0
        %4447 = vmatpush.msra.mxu0 %v3567
        %4448 = vmatpush.msra.mxu0 %v3558
        %4449 = vmatpush.msra.mxu0 %v3549
        %4450 = vmatpush.msra.mxu0 %v3540
        %4451 = vmatpush.msra.mxu0 %v3531
        %4452 = vmatpush.msra.mxu0 %v3522
        %4453 = vmatpush.msra.mxu0 %v3513
        %4454 = vmatpush.msra.mxu0 %v3504
        %4455 = vmatpush.msra.mxu0 %v3495
        %4456 = vmatpush.msra.mxu0 %v3486
        %4457 = vmatpush.msra.mxu0 %v3477
        %4458 = vmatpush.msra.mxu0 %v3468
        %4459 = vmatpush.msra.mxu0 %v3459
        %4460 = vmatpush.msra.mxu0 %v3450
        %4461 = vmatpush.msra.mxu0 %v3441
        %4462 = vmatpush.msra.mxu0 %v3432
        %4463 = vmatmul.f32.gmra.mxu0 %v2992
        %v4464 = vpop.f32.mrf.mxu0
        %v4465 = vadd.f32 %v4445, %v4464
        %4466 = vdwg.mxu0
        %4467 = vmatpush.msra.mxu0 %v3711
        %4468 = vmatpush.msra.mxu0 %v3702
        %4469 = vmatpush.msra.mxu0 %v3693
        %4470 = vmatpush.msra.mxu0 %v3684
        %4471 = vmatpush.msra.mxu0 %v3675
        %4472 = vmatpush.msra.mxu0 %v3666
        %4473 = vmatpush.msra.mxu0 %v3657
        %4474 = vmatpush.msra.mxu0 %v3648
        %4475 = vmatpush.msra.mxu0 %v3639
        %4476 = vmatpush.msra.mxu0 %v3630
        %4477 = vmatpush.msra.mxu0 %v3621
        %4478 = vmatpush.msra.mxu0 %v3612
        %4479 = vmatpush.msra.mxu0 %v3603
        %4480 = vmatpush.msra.mxu0 %v3594
        %4481 = vmatpush.msra.mxu0 %v3585
        %4482 = vmatpush.msra.mxu0 %v3576
        %4483 = vmatmul.f32.gmra.mxu0 %v2993
        %v4484 = vpop.f32.mrf.mxu0
        %v4485 = vadd.f32 %v4465, %v4484
        %4486 = vdwg.mxu0
        %4487 = vmatpush.msra.mxu0 0.0
        %4488 = vmatpush.msra.mxu0 0.0
        %4489 = vmatpush.msra.mxu0 0.0
        %4490 = vmatpush.msra.mxu0 0.0
        %4491 = vmatpush.msra.mxu0 0.0
        %4492 = vmatpush.msra.mxu0 0.0
        %4493 = vmatpush.msra.mxu0 0.0
        %4494 = vmatpush.msra.mxu0 0.0
        %4495 = vmatpush.msra.mxu0 0.0
        %4496 = vmatpush.msra.mxu0 0.0
        %4497 = vmatpush.msra.mxu0 0.0
        %4498 = vmatpush.msra.mxu0 0.0
        %4499 = vmatpush.msra.mxu0 0.0
        %4500 = vmatpush.msra.mxu0 0.0
        %4501 = vmatpush.msra.mxu0 %v3776
        %4502 = vmatpush.msra.mxu0 %v3720
        %4503 = vmatmul.f32.gmra.mxu0 %v3757
        %v4504 = vpop.f32.mrf.mxu0
        %v4505 = vadd.f32 %v4485, %v4504
        %4506 = vdwg.mxu0
        %4507 = vmatpush.msra.mxu0 %v3136
        %4508 = vmatpush.msra.mxu0 %v3127
        %4509 = vmatpush.msra.mxu0 %v3118
        %4510 = vmatpush.msra.mxu0 %v3109
        %4511 = vmatpush.msra.mxu0 %v3100
        %4512 = vmatpush.msra.mxu0 %v3091
        %4513 = vmatpush.msra.mxu0 %v3082
        %4514 = vmatpush.msra.mxu0 %v3073
        %4515 = vmatpush.msra.mxu0 %v3064
        %4516 = vmatpush.msra.mxu0 %v3055
        %4517 = vmatpush.msra.mxu0 %v3046
        %4518 = vmatpush.msra.mxu0 %v3037
        %4519 = vmatpush.msra.mxu0 %v3028
        %4520 = vmatpush.msra.mxu0 %v3019
        %4521 = vmatpush.msra.mxu0 %v3010
        %4522 = vmatpush.msra.mxu0 %v3001
        %4523 = vmatmul.f32.gmra.mxu0 %v2989
        %v4524 = vpop.f32.mrf.mxu0
        %v4525 = vadd.f32 %v3743, %v4524
        %4526 = vdwg.mxu0
        %4527 = vmatpush.msra.mxu0 %v3280
        %4528 = vmatpush.msra.mxu0 %v3271
        %4529 = vmatpush.msra.mxu0 %v3262
        %4530 = vmatpush.msra.mxu0 %v3253
        %4531 = vmatpush.msra.mxu0 %v3244
        %4532 = vmatpush.msra.mxu0 %v3235
        %4533 = vmatpush.msra.mxu0 %v3226
        %4534 = vmatpush.msra.mxu0 %v3217
        %4535 = vmatpush.msra.mxu0 %v3208
        %4536 = vmatpush.msra.mxu0 %v3199
        %4537 = vmatpush.msra.mxu0 %v3190
        %4538 = vmatpush.msra.mxu0 %v3181
        %4539 = vmatpush.msra.mxu0 %v3172
        %4540 = vmatpush.msra.mxu0 %v3163
        %4541 = vmatpush.msra.mxu0 %v3154
        %4542 = vmatpush.msra.mxu0 %v3145
        %4543 = vmatmul.f32.gmra.mxu0 %v2990
        %v4544 = vpop.f32.mrf.mxu0
        %v4545 = vadd.f32 %v4525, %v4544
        %4546 = vdwg.mxu0
        %4547 = vmatpush.msra.mxu0 %v3424
        %4548 = vmatpush.msra.mxu0 %v3415
        %4549 = vmatpush.msra.mxu0 %v3406
        %4550 = vmatpush.msra.mxu0 %v3397
        %4551 = vmatpush.msra.mxu0 %v3388
        %4552 = vmatpush.msra.mxu0 %v3379
        %4553 = vmatpush.msra.mxu0 %v3370
        %4554 = vmatpush.msra.mxu0 %v3361
        %4555 = vmatpush.msra.mxu0 %v3352
        %4556 = vmatpush.msra.mxu0 %v3343
        %4557 = vmatpush.msra.mxu0 %v3334
        %4558 = vmatpush.msra.mxu0 %v3325
        %4559 = vmatpush.msra.mxu0 %v3316
        %4560 = vmatpush.msra.mxu0 %v3307
        %4561 = vmatpush.msra.mxu0 %v3298
        %4562 = vmatpush.msra.mxu0 %v3289
        %4563 = vmatmul.f32.gmra.mxu0 %v2991
        %v4564 = vpop.f32.mrf.mxu0
        %v4565 = vadd.f32 %v4545, %v4564
        %4566 = vdwg.mxu0
        %4567 = vmatpush.msra.mxu0 %v3568
        %4568 = vmatpush.msra.mxu0 %v3559
        %4569 = vmatpush.msra.mxu0 %v3550
        %4570 = vmatpush.msra.mxu0 %v3541
        %4571 = vmatpush.msra.mxu0 %v3532
        %4572 = vmatpush.msra.mxu0 %v3523
        %4573 = vmatpush.msra.mxu0 %v3514
        %4574 = vmatpush.msra.mxu0 %v3505
        %4575 = vmatpush.msra.mxu0 %v3496
        %4576 = vmatpush.msra.mxu0 %v3487
        %4577 = vmatpush.msra.mxu0 %v3478
        %4578 = vmatpush.msra.mxu0 %v3469
        %4579 = vmatpush.msra.mxu0 %v3460
        %4580 = vmatpush.msra.mxu0 %v3451
        %4581 = vmatpush.msra.mxu0 %v3442
        %4582 = vmatpush.msra.mxu0 %v3433
        %4583 = vmatmul.f32.gmra.mxu0 %v2992
        %v4584 = vpop.f32.mrf.mxu0
        %v4585 = vadd.f32 %v4565, %v4584
        %4586 = vdwg.mxu0
        %4587 = vmatpush.msra.mxu0 %v3712
        %4588 = vmatpush.msra.mxu0 %v3703
        %4589 = vmatpush.msra.mxu0 %v3694
        %4590 = vmatpush.msra.mxu0 %v3685
        %4591 = vmatpush.msra.mxu0 %v3676
        %4592 = vmatpush.msra.mxu0 %v3667
        %4593 = vmatpush.msra.mxu0 %v3658
        %4594 = vmatpush.msra.mxu0 %v3649
        %4595 = vmatpush.msra.mxu0 %v3640
        %4596 = vmatpush.msra.mxu0 %v3631
        %4597 = vmatpush.msra.mxu0 %v3622
        %4598 = vmatpush.msra.mxu0 %v3613
        %4599 = vmatpush.msra.mxu0 %v3604
        %4600 = vmatpush.msra.mxu0 %v3595
        %4601 = vmatpush.msra.mxu0 %v3586
        %4602 = vmatpush.msra.mxu0 %v3577
        %4603 = vmatmul.f32.gmra.mxu0 %v2993
        %v4604 = vpop.f32.mrf.mxu0
        %v4605 = vadd.f32 %v4585, %v4604
        %4606 = vdwg.mxu0
        %4607 = vmatpush.msra.mxu0 0.0
        %4608 = vmatpush.msra.mxu0 0.0
        %4609 = vmatpush.msra.mxu0 0.0
        %4610 = vmatpush.msra.mxu0 0.0
        %4611 = vmatpush.msra.mxu0 0.0
        %4612 = vmatpush.msra.mxu0 0.0
        %4613 = vmatpush.msra.mxu0 0.0
        %4614 = vmatpush.msra.mxu0 0.0
        %4615 = vmatpush.msra.mxu0 0.0
        %4616 = vmatpush.msra.mxu0 0.0
        %4617 = vmatpush.msra.mxu0 0.0
        %4618 = vmatpush.msra.mxu0 0.0
        %4619 = vmatpush.msra.mxu0 0.0
        %4620 = vmatpush.msra.mxu0 0.0
        %4621 = vmatpush.msra.mxu0 %v3779
        %4622 = vmatpush.msra.mxu0 %v3721
        %4623 = vmatmul.f32.gmra.mxu0 %v3757
        %v4624 = vpop.f32.mrf.mxu0
        %v4625 = vadd.f32 %v4605, %v4624
        %4626 = vdwg.mxu0
        %4627 = vmatpush.msra.mxu0 %v3137
        %4628 = vmatpush.msra.mxu0 %v3128
        %4629 = vmatpush.msra.mxu0 %v3119
        %4630 = vmatpush.msra.mxu0 %v3110
        %4631 = vmatpush.msra.mxu0 %v3101
        %4632 = vmatpush.msra.mxu0 %v3092
        %4633 = vmatpush.msra.mxu0 %v3083
        %4634 = vmatpush.msra.mxu0 %v3074
        %4635 = vmatpush.msra.mxu0 %v3065
        %4636 = vmatpush.msra.mxu0 %v3056
        %4637 = vmatpush.msra.mxu0 %v3047
        %4638 = vmatpush.msra.mxu0 %v3038
        %4639 = vmatpush.msra.mxu0 %v3029
        %4640 = vmatpush.msra.mxu0 %v3020
        %4641 = vmatpush.msra.mxu0 %v3011
        %4642 = vmatpush.msra.mxu0 %v3002
        %4643 = vmatmul.f32.gmra.mxu0 %v2989
        %v4644 = vpop.f32.mrf.mxu0
        %v4645 = vadd.f32 %v3744, %v4644
        %4646 = vdwg.mxu0
        %4647 = vmatpush.msra.mxu0 %v3281
        %4648 = vmatpush.msra.mxu0 %v3272
        %4649 = vmatpush.msra.mxu0 %v3263
        %4650 = vmatpush.msra.mxu0 %v3254
        %4651 = vmatpush.msra.mxu0 %v3245
        %4652 = vmatpush.msra.mxu0 %v3236
        %4653 = vmatpush.msra.mxu0 %v3227
        %4654 = vmatpush.msra.mxu0 %v3218
        %4655 = vmatpush.msra.mxu0 %v3209
        %4656 = vmatpush.msra.mxu0 %v3200
        %4657 = vmatpush.msra.mxu0 %v3191
        %4658 = vmatpush.msra.mxu0 %v3182
        %4659 = vmatpush.msra.mxu0 %v3173
        %4660 = vmatpush.msra.mxu0 %v3164
        %4661 = vmatpush.msra.mxu0 %v3155
        %4662 = vmatpush.msra.mxu0 %v3146
        %4663 = vmatmul.f32.gmra.mxu0 %v2990
        %v4664 = vpop.f32.mrf.mxu0
        %v4665 = vadd.f32 %v4645, %v4664
        %4666 = vdwg.mxu0
        %4667 = vmatpush.msra.mxu0 %v3425
        %4668 = vmatpush.msra.mxu0 %v3416
        %4669 = vmatpush.msra.mxu0 %v3407
        %4670 = vmatpush.msra.mxu0 %v3398
        %4671 = vmatpush.msra.mxu0 %v3389
        %4672 = vmatpush.msra.mxu0 %v3380
        %4673 = vmatpush.msra.mxu0 %v3371
        %4674 = vmatpush.msra.mxu0 %v3362
        %4675 = vmatpush.msra.mxu0 %v3353
        %4676 = vmatpush.msra.mxu0 %v3344
        %4677 = vmatpush.msra.mxu0 %v3335
        %4678 = vmatpush.msra.mxu0 %v3326
        %4679 = vmatpush.msra.mxu0 %v3317
        %4680 = vmatpush.msra.mxu0 %v3308
        %4681 = vmatpush.msra.mxu0 %v3299
        %4682 = vmatpush.msra.mxu0 %v3290
        %4683 = vmatmul.f32.gmra.mxu0 %v2991
        %v4684 = vpop.f32.mrf.mxu0
        %v4685 = vadd.f32 %v4665, %v4684
        %4686 = vdwg.mxu0
        %4687 = vmatpush.msra.mxu0 %v3569
        %4688 = vmatpush.msra.mxu0 %v3560
        %4689 = vmatpush.msra.mxu0 %v3551
        %4690 = vmatpush.msra.mxu0 %v3542
        %4691 = vmatpush.msra.mxu0 %v3533
        %4692 = vmatpush.msra.mxu0 %v3524
        %4693 = vmatpush.msra.mxu0 %v3515
        %4694 = vmatpush.msra.mxu0 %v3506
        %4695 = vmatpush.msra.mxu0 %v3497
        %4696 = vmatpush.msra.mxu0 %v3488
        %4697 = vmatpush.msra.mxu0 %v3479
        %4698 = vmatpush.msra.mxu0 %v3470
        %4699 = vmatpush.msra.mxu0 %v3461
        %4700 = vmatpush.msra.mxu0 %v3452
        %4701 = vmatpush.msra.mxu0 %v3443
        %4702 = vmatpush.msra.mxu0 %v3434
        %4703 = vmatmul.f32.gmra.mxu0 %v2992
        %v4704 = vpop.f32.mrf.mxu0
        %v4705 = vadd.f32 %v4685, %v4704
        %4706 = vdwg.mxu0
        %4707 = vmatpush.msra.mxu0 %v3713
        %4708 = vmatpush.msra.mxu0 %v3704
        %4709 = vmatpush.msra.mxu0 %v3695
        %4710 = vmatpush.msra.mxu0 %v3686
        %4711 = vmatpush.msra.mxu0 %v3677
        %4712 = vmatpush.msra.mxu0 %v3668
        %4713 = vmatpush.msra.mxu0 %v3659
        %4714 = vmatpush.msra.mxu0 %v3650
        %4715 = vmatpush.msra.mxu0 %v3641
        %4716 = vmatpush.msra.mxu0 %v3632
        %4717 = vmatpush.msra.mxu0 %v3623
        %4718 = vmatpush.msra.mxu0 %v3614
        %4719 = vmatpush.msra.mxu0 %v3605
        %4720 = vmatpush.msra.mxu0 %v3596
        %4721 = vmatpush.msra.mxu0 %v3587
        %4722 = vmatpush.msra.mxu0 %v3578
        %4723 = vmatmul.f32.gmra.mxu0 %v2993
        %v4724 = vpop.f32.mrf.mxu0
        %v4725 = vadd.f32 %v4705, %v4724
        %4726 = vdwg.mxu0
        %4727 = vmatpush.msra.mxu0 0.0
        %4728 = vmatpush.msra.mxu0 0.0
        %4729 = vmatpush.msra.mxu0 0.0
        %4730 = vmatpush.msra.mxu0 0.0
        %4731 = vmatpush.msra.mxu0 0.0
        %4732 = vmatpush.msra.mxu0 0.0
        %4733 = vmatpush.msra.mxu0 0.0
        %4734 = vmatpush.msra.mxu0 0.0
        %4735 = vmatpush.msra.mxu0 0.0
        %4736 = vmatpush.msra.mxu0 0.0
        %4737 = vmatpush.msra.mxu0 0.0
        %4738 = vmatpush.msra.mxu0 0.0
        %4739 = vmatpush.msra.mxu0 0.0
        %4740 = vmatpush.msra.mxu0 0.0
        %4741 = vmatpush.msra.mxu0 %v3782
        %4742 = vmatpush.msra.mxu0 %v3722
        %4743 = vmatmul.f32.gmra.mxu0 %v3757
        %v4744 = vpop.f32.mrf.mxu0
        %v4745 = vadd.f32 %v4725, %v4744
        %4746 = vdwg.mxu0
        %4747 = vmatpush.msra.mxu0 %v3138
        %4748 = vmatpush.msra.mxu0 %v3129
        %4749 = vmatpush.msra.mxu0 %v3120
        %4750 = vmatpush.msra.mxu0 %v3111
        %4751 = vmatpush.msra.mxu0 %v3102
        %4752 = vmatpush.msra.mxu0 %v3093
        %4753 = vmatpush.msra.mxu0 %v3084
        %4754 = vmatpush.msra.mxu0 %v3075
        %4755 = vmatpush.msra.mxu0 %v3066
        %4756 = vmatpush.msra.mxu0 %v3057
        %4757 = vmatpush.msra.mxu0 %v3048
        %4758 = vmatpush.msra.mxu0 %v3039
        %4759 = vmatpush.msra.mxu0 %v3030
        %4760 = vmatpush.msra.mxu0 %v3021
        %4761 = vmatpush.msra.mxu0 %v3012
        %4762 = vmatpush.msra.mxu0 %v3003
        %4763 = vmatmul.f32.gmra.mxu0 %v2989
        %v4764 = vpop.f32.mrf.mxu0
        %v4765 = vadd.f32 %v3745, %v4764
        %4766 = vdwg.mxu0
        %4767 = vmatpush.msra.mxu0 %v3282
        %4768 = vmatpush.msra.mxu0 %v3273
        %4769 = vmatpush.msra.mxu0 %v3264
        %4770 = vmatpush.msra.mxu0 %v3255
        %4771 = vmatpush.msra.mxu0 %v3246
        %4772 = vmatpush.msra.mxu0 %v3237
        %4773 = vmatpush.msra.mxu0 %v3228
        %4774 = vmatpush.msra.mxu0 %v3219
        %4775 = vmatpush.msra.mxu0 %v3210
        %4776 = vmatpush.msra.mxu0 %v3201
        %4777 = vmatpush.msra.mxu0 %v3192
        %4778 = vmatpush.msra.mxu0 %v3183
        %4779 = vmatpush.msra.mxu0 %v3174
        %4780 = vmatpush.msra.mxu0 %v3165
        %4781 = vmatpush.msra.mxu0 %v3156
        %4782 = vmatpush.msra.mxu0 %v3147
        %4783 = vmatmul.f32.gmra.mxu0 %v2990
        %v4784 = vpop.f32.mrf.mxu0
        %v4785 = vadd.f32 %v4765, %v4784
        %4786 = vdwg.mxu0
        %4787 = vmatpush.msra.mxu0 %v3426
        %4788 = vmatpush.msra.mxu0 %v3417
        %4789 = vmatpush.msra.mxu0 %v3408
        %4790 = vmatpush.msra.mxu0 %v3399
        %4791 = vmatpush.msra.mxu0 %v3390
        %4792 = vmatpush.msra.mxu0 %v3381
        %4793 = vmatpush.msra.mxu0 %v3372
        %4794 = vmatpush.msra.mxu0 %v3363
        %4795 = vmatpush.msra.mxu0 %v3354
        %4796 = vmatpush.msra.mxu0 %v3345
        %4797 = vmatpush.msra.mxu0 %v3336
        %4798 = vmatpush.msra.mxu0 %v3327
        %4799 = vmatpush.msra.mxu0 %v3318
        %4800 = vmatpush.msra.mxu0 %v3309
        %4801 = vmatpush.msra.mxu0 %v3300
        %4802 = vmatpush.msra.mxu0 %v3291
        %4803 = vmatmul.f32.gmra.mxu0 %v2991
        %v4804 = vpop.f32.mrf.mxu0
        %v4805 = vadd.f32 %v4785, %v4804
        %4806 = vdwg.mxu0
        %4807 = vmatpush.msra.mxu0 %v3570
        %4808 = vmatpush.msra.mxu0 %v3561
        %4809 = vmatpush.msra.mxu0 %v3552
        %4810 = vmatpush.msra.mxu0 %v3543
        %4811 = vmatpush.msra.mxu0 %v3534
        %4812 = vmatpush.msra.mxu0 %v3525
        %4813 = vmatpush.msra.mxu0 %v3516
        %4814 = vmatpush.msra.mxu0 %v3507
        %4815 = vmatpush.msra.mxu0 %v3498
        %4816 = vmatpush.msra.mxu0 %v3489
        %4817 = vmatpush.msra.mxu0 %v3480
        %4818 = vmatpush.msra.mxu0 %v3471
        %4819 = vmatpush.msra.mxu0 %v3462
        %4820 = vmatpush.msra.mxu0 %v3453
        %4821 = vmatpush.msra.mxu0 %v3444
        %4822 = vmatpush.msra.mxu0 %v3435
        %4823 = vmatmul.f32.gmra.mxu0 %v2992
        %v4824 = vpop.f32.mrf.mxu0
        %v4825 = vadd.f32 %v4805, %v4824
        %4826 = vdwg.mxu0
        %4827 = vmatpush.msra.mxu0 %v3714
        %4828 = vmatpush.msra.mxu0 %v3705
        %4829 = vmatpush.msra.mxu0 %v3696
        %4830 = vmatpush.msra.mxu0 %v3687
        %4831 = vmatpush.msra.mxu0 %v3678
        %4832 = vmatpush.msra.mxu0 %v3669
        %4833 = vmatpush.msra.mxu0 %v3660
        %4834 = vmatpush.msra.mxu0 %v3651
        %4835 = vmatpush.msra.mxu0 %v3642
        %4836 = vmatpush.msra.mxu0 %v3633
        %4837 = vmatpush.msra.mxu0 %v3624
        %4838 = vmatpush.msra.mxu0 %v3615
        %4839 = vmatpush.msra.mxu0 %v3606
        %4840 = vmatpush.msra.mxu0 %v3597
        %4841 = vmatpush.msra.mxu0 %v3588
        %4842 = vmatpush.msra.mxu0 %v3579
        %4843 = vmatmul.f32.gmra.mxu0 %v2993
        %v4844 = vpop.f32.mrf.mxu0
        %v4845 = vadd.f32 %v4825, %v4844
        %4846 = vdwg.mxu0
        %4847 = vmatpush.msra.mxu0 0.0
        %4848 = vmatpush.msra.mxu0 0.0
        %4849 = vmatpush.msra.mxu0 0.0
        %4850 = vmatpush.msra.mxu0 0.0
        %4851 = vmatpush.msra.mxu0 0.0
        %4852 = vmatpush.msra.mxu0 0.0
        %4853 = vmatpush.msra.mxu0 0.0
        %4854 = vmatpush.msra.mxu0 0.0
        %4855 = vmatpush.msra.mxu0 0.0
        %4856 = vmatpush.msra.mxu0 0.0
        %4857 = vmatpush.msra.mxu0 0.0
        %4858 = vmatpush.msra.mxu0 0.0
        %4859 = vmatpush.msra.mxu0 0.0
        %4860 = vmatpush.msra.mxu0 0.0
        %4861 = vmatpush.msra.mxu0 %v3785
        %4862 = vmatpush.msra.mxu0 %v3723
        %4863 = vmatmul.f32.gmra.mxu0 %v3757
        %v4864 = vpop.f32.mrf.mxu0
        %v4865 = vadd.f32 %v4845, %v4864
        %4866 = vdwg.mxu0
        %v4867 = vmax.f32 %v3905, 0.0
        %v4868 = vmax.f32 %v4025, 0.0
        %v4869 = vmax.f32 %v4145, 0.0
        %v4870 = vmax.f32 %v4265, 0.0
        %v4871 = vmax.f32 %v4385, 0.0
        %v4872 = vmax.f32 %v4505, 0.0
        %v4873 = vmax.f32 %v4625, 0.0
        %v4874 = vmax.f32 %v4745, 0.0
        %v4875 = vmax.f32 %v4865, 0.0
        %v4876 = vld [vmem:[#allocation17] sm:$0xff]
        %v4877 = vld [vmem:[#allocation17 + $0x8] sm:$0xff]
        %v4878 = vld [vmem:[#allocation17 + $0x10] sm:$0xff]
        %v4879 = vld [vmem:[#allocation17 + $0x18] sm:$0xff]
        %v4880 = vld [vmem:[#allocation17 + $0x20] sm:$0xff]
        %v4881 = vld [vmem:[#allocation17 + $0x28] sm:$0xff]
        %v4882 = vld [vmem:[#allocation17 + $0x30] sm:$0xff]
        %v4883 = vld [vmem:[#allocation17 + $0x38] sm:$0xff]
        %v4884 = vld [vmem:[#allocation17 + $0x40] sm:$0xff]
        %v4885 = vld [vmem:[#allocation17 + $0x48] sm:$0xff]
        %v4886 = vld [vmem:[#allocation17 + $0x50] sm:$0xff]
        %v4887 = vld [vmem:[#allocation17 + $0x58] sm:$0xff]
        %v4888 = vld [vmem:[#allocation17 + $0x60] sm:$0xff]
        %v4889 = vld [vmem:[#allocation17 + $0x68] sm:$0xff]
        %v4890 = vld [vmem:[#allocation17 + $0x70] sm:$0xff]
        %v4891 = vld [vmem:[#allocation17 + $0x78] sm:$0xff]
        %v4892 = vld [vmem:[#allocation17 + $0x80] sm:$0xff]
        %v4893 = vld [vmem:[#allocation17 + $0x88] sm:$0xff]
        %v4894 = vld [vmem:[#allocation17 + $0x90] sm:$0xff]
        %v4895 = vld [vmem:[#allocation17 + $0x98] sm:$0xff]
        %v4896 = vld [vmem:[#allocation17 + $0xa0] sm:$0xff]
        %v4897 = vld [vmem:[#allocation17 + $0xa8] sm:$0xff]
        %v4898 = vld [vmem:[#allocation17 + $0xb0] sm:$0xff]
        %v4899 = vld [vmem:[#allocation17 + $0xb8] sm:$0xff]
        %v4900 = vld [vmem:[#allocation17 + $0xc0] sm:$0xff]
        %v4901 = vld [vmem:[#allocation17 + $0xc8] sm:$0xff]
        %v4902 = vld [vmem:[#allocation17 + $0xd0] sm:$0xff]
        %v4903 = vld [vmem:[#allocation17 + $0xd8] sm:$0xff]
        %v4904 = vld [vmem:[#allocation17 + $0xe0] sm:$0xff]
        %v4905 = vld [vmem:[#allocation17 + $0xe8] sm:$0xff]
        %v4906 = vld [vmem:[#allocation17 + $0xf0] sm:$0xff]
        %v4907 = vld [vmem:[#allocation17 + $0xf8] sm:$0xff]
        %v4908 = vld [vmem:[#allocation17 + $0x100] sm:$0xff]
        %v4909 = vld [vmem:[#allocation17 + $0x108] sm:$0xff]
        %v4910 = vld [vmem:[#allocation17 + $0x110] sm:$0xff]
        %v4911 = vld [vmem:[#allocation17 + $0x118] sm:$0xff]
        %v4912 = vld [vmem:[#allocation17 + $0x120] sm:$0xff]
        %v4913 = vld [vmem:[#allocation17 + $0x128] sm:$0xff]
        %v4914 = vld [vmem:[#allocation17 + $0x130] sm:$0xff]
        %v4915 = vld [vmem:[#allocation17 + $0x138] sm:$0xff]
        %v4916 = vld [vmem:[#allocation17 + $0x140] sm:$0xff]
        %v4917 = vld [vmem:[#allocation17 + $0x148] sm:$0xff]
        %v4918 = vld [vmem:[#allocation17 + $0x150] sm:$0xff]
        %v4919 = vld [vmem:[#allocation17 + $0x158] sm:$0xff]
        %v4920 = vld [vmem:[#allocation17 + $0x160] sm:$0xff]
        %v4921 = vld [vmem:[#allocation17 + $0x168] sm:$0xff]
        %v4922 = vld [vmem:[#allocation17 + $0x170] sm:$0xff]
        %v4923 = vld [vmem:[#allocation17 + $0x178] sm:$0xff]
        %v4924 = vld [vmem:[#allocation17 + $0x180] sm:$0xff]
        %v4925 = vld [vmem:[#allocation17 + $0x188] sm:$0xff]
        %v4926 = vld [vmem:[#allocation17 + $0x190] sm:$0xff]
        %v4927 = vld [vmem:[#allocation17 + $0x198] sm:$0xff]
        %v4928 = vld [vmem:[#allocation17 + $0x1a0] sm:$0xff]
        %v4929 = vld [vmem:[#allocation17 + $0x1a8] sm:$0xff]
        %v4930 = vld [vmem:[#allocation17 + $0x1b0] sm:$0xff]
        %v4931 = vld [vmem:[#allocation17 + $0x1b8] sm:$0xff]
        %v4932 = vld [vmem:[#allocation17 + $0x1c0] sm:$0xff]
        %v4933 = vld [vmem:[#allocation17 + $0x1c8] sm:$0xff]
        %v4934 = vld [vmem:[#allocation17 + $0x1d0] sm:$0xff]
        %v4935 = vld [vmem:[#allocation17 + $0x1d8] sm:$0xff]
        %v4936 = vld [vmem:[#allocation17 + $0x1e0] sm:$0xff]
        %v4937 = vld [vmem:[#allocation17 + $0x1e8] sm:$0xff]
        %v4938 = vld [vmem:[#allocation17 + $0x1f0] sm:$0xff]
        %v4939 = vld [vmem:[#allocation17 + $0x1f8] sm:$0xff]
        %v4940 = vld [vmem:[#allocation17 + $0x200] sm:$0xff]
        %v4941 = vld [vmem:[#allocation17 + $0x208] sm:$0xff]
        %v4942 = vld [vmem:[#allocation17 + $0x210] sm:$0xff]
        %v4943 = vld [vmem:[#allocation17 + $0x218] sm:$0xff]
        %v4944 = vld [vmem:[#allocation17 + $0x220] sm:$0xff]
        %v4945 = vld [vmem:[#allocation17 + $0x228] sm:$0xff]
        %v4946 = vld [vmem:[#allocation17 + $0x230] sm:$0xff]
        %v4947 = vld [vmem:[#allocation17 + $0x238] sm:$0xff]
        %v4948 = vld [vmem:[#allocation17 + $0x240] sm:$0xff]
        %v4949 = vld [vmem:[#allocation17 + $0x248] sm:$0xff]
        %v4950 = vld [vmem:[#allocation17 + $0x250] sm:$0xff]
        %v4951 = vld [vmem:[#allocation17 + $0x258] sm:$0xff]
        %v4952 = vld [vmem:[#allocation17 + $0x260] sm:$0xff]
        %v4953 = vld [vmem:[#allocation17 + $0x268] sm:$0xff]
        %v4954 = vld [vmem:[#allocation17 + $0x270] sm:$0xff]
        %v4955 = vld [vmem:[#allocation17 + $0x278] sm:$0xff]
        %v4956 = vld [vmem:[#allocation17 + $0x280] sm:$0xff]
        %v4957 = vld [vmem:[#allocation17 + $0x288] sm:$0xff]
        %v4958 = vld [vmem:[#allocation17 + $0x290] sm:$0xff]
        %v4959 = vld [vmem:[#allocation17 + $0x298] sm:$0xff]
        %v4960 = vld [vmem:[#allocation17 + $0x2a0] sm:$0xff]
        %v4961 = vld [vmem:[#allocation17 + $0x2a8] sm:$0xff]
        %v4962 = vld [vmem:[#allocation17 + $0x2b0] sm:$0xff]
        %v4963 = vld [vmem:[#allocation17 + $0x2b8] sm:$0xff]
        %v4964 = vld [vmem:[#allocation17 + $0x2c0] sm:$0xff]
        %v4965 = vld [vmem:[#allocation17 + $0x2c8] sm:$0xff]
        %v4966 = vld [vmem:[#allocation17 + $0x2d0] sm:$0xff]
        %v4967 = vld [vmem:[#allocation17 + $0x2d8] sm:$0xff]
        %v4968 = vld [vmem:[#allocation17 + $0x2e0] sm:$0xff]
        %v4969 = vld [vmem:[#allocation17 + $0x2e8] sm:$0xff]
        %v4970 = vld [vmem:[#allocation17 + $0x2f0] sm:$0xff]
        %v4971 = vld [vmem:[#allocation17 + $0x2f8] sm:$0xff]
        %v4972 = vld [vmem:[#allocation17 + $0x300] sm:$0xff]
        %v4973 = vld [vmem:[#allocation17 + $0x308] sm:$0xff]
        %v4974 = vld [vmem:[#allocation17 + $0x310] sm:$0xff]
        %v4975 = vld [vmem:[#allocation17 + $0x318] sm:$0xff]
        %v4976 = vld [vmem:[#allocation17 + $0x320] sm:$0xff]
        %v4977 = vld [vmem:[#allocation17 + $0x328] sm:$0xff]
        %v4978 = vld [vmem:[#allocation17 + $0x330] sm:$0xff]
        %v4979 = vld [vmem:[#allocation17 + $0x338] sm:$0xff]
        %v4980 = vld [vmem:[#allocation17 + $0x340] sm:$0xff]
        %v4981 = vld [vmem:[#allocation17 + $0x348] sm:$0xff]
        %v4982 = vld [vmem:[#allocation17 + $0x350] sm:$0xff]
        %v4983 = vld [vmem:[#allocation17 + $0x358] sm:$0xff]
        %v4984 = vld [vmem:[#allocation17 + $0x360] sm:$0xff]
        %v4985 = vld [vmem:[#allocation17 + $0x368] sm:$0xff]
        %v4986 = vld [vmem:[#allocation17 + $0x370] sm:$0xff]
        %v4987 = vld [vmem:[#allocation17 + $0x378] sm:$0xff]
        %v4988 = vld [vmem:[#allocation17 + $0x380] sm:$0xff]
        %v4989 = vld [vmem:[#allocation17 + $0x388] sm:$0xff]
        %v4990 = vld [vmem:[#allocation17 + $0x390] sm:$0xff]
        %v4991 = vld [vmem:[#allocation17 + $0x398] sm:$0xff]
        %v4992 = vld [vmem:[#allocation17 + $0x3a0] sm:$0xff]
        %v4993 = vld [vmem:[#allocation17 + $0x3a8] sm:$0xff]
        %v4994 = vld [vmem:[#allocation17 + $0x3b0] sm:$0xff]
        %v4995 = vld [vmem:[#allocation17 + $0x3b8] sm:$0xff]
        %v4996 = vld [vmem:[#allocation17 + $0x3c0] sm:$0xff]
        %v4997 = vld [vmem:[#allocation17 + $0x3c8] sm:$0xff]
        %v4998 = vld [vmem:[#allocation17 + $0x3d0] sm:$0xff]
        %v4999 = vld [vmem:[#allocation17 + $0x3d8] sm:$0xff]
        %v5000 = vld [vmem:[#allocation17 + $0x3e0] sm:$0xff]
        %v5001 = vld [vmem:[#allocation17 + $0x3e8] sm:$0xff]
        %v5002 = vld [vmem:[#allocation17 + $0x3f0] sm:$0xff]
        %v5003 = vld [vmem:[#allocation17 + $0x3f8] sm:$0xff]
        %v5004 = vld [vmem:[#allocation17 + $0x400] sm:$0xff]
        %v5005 = vld [vmem:[#allocation17 + $0x408] sm:$0xff]
        %v5006 = vld [vmem:[#allocation17 + $0x410] sm:$0xff]
        %v5007 = vld [vmem:[#allocation17 + $0x418] sm:$0xff]
        %v5008 = vld [vmem:[#allocation17 + $0x420] sm:$0xff]
        %v5009 = vld [vmem:[#allocation17 + $0x428] sm:$0xff]
        %v5010 = vld [vmem:[#allocation17 + $0x430] sm:$0xff]
        %v5011 = vld [vmem:[#allocation17 + $0x438] sm:$0xff]
        %v5012 = vld [vmem:[#allocation17 + $0x440] sm:$0xff]
        %v5013 = vld [vmem:[#allocation17 + $0x448] sm:$0xff]
        %v5014 = vld [vmem:[#allocation17 + $0x450] sm:$0xff]
        %v5015 = vld [vmem:[#allocation17 + $0x458] sm:$0xff]
        %v5016 = vld [vmem:[%s10] sm:$0x1]
        %v5018 = vperm.slane %v5016, 0
        %vm5020 = vcmask 785408
        %v5022 = vsel %vm5020, %v4875, 0
        %5024 = vmatpush.msra.mxu0 %v4891
        %5025 = vmatpush.msra.mxu0 %v4890
        %5026 = vmatpush.msra.mxu0 %v4889
        %5027 = vmatpush.msra.mxu0 %v4888
        %5028 = vmatpush.msra.mxu0 %v4887
        %5029 = vmatpush.msra.mxu0 %v4886
        %5030 = vmatpush.msra.mxu0 %v4885
        %5031 = vmatpush.msra.mxu0 %v4884
        %5032 = vmatpush.msra.mxu0 %v4883
        %5033 = vmatpush.msra.mxu0 %v4882
        %5034 = vmatpush.msra.mxu0 %v4881
        %5035 = vmatpush.msra.mxu0 %v4880
        %5036 = vmatpush.msra.mxu0 %v4879
        %5037 = vmatpush.msra.mxu0 %v4878
        %5038 = vmatpush.msra.mxu0 %v4877
        %5039 = vmatpush.msra.mxu0 %v4876
        %5040 = vmatmul.f32.gmra.mxu0 %v4867
        %v5041 = vpop.f32.mrf.mxu0
        %v5042 = vadd.f32 %v5018, %v5041
        %5043 = vdwg.mxu0
        %5044 = vmatpush.msra.mxu0 %v4907
        %5045 = vmatpush.msra.mxu0 %v4906
        %5046 = vmatpush.msra.mxu0 %v4905
        %5047 = vmatpush.msra.mxu0 %v4904
        %5048 = vmatpush.msra.mxu0 %v4903
        %5049 = vmatpush.msra.mxu0 %v4902
        %5050 = vmatpush.msra.mxu0 %v4901
        %5051 = vmatpush.msra.mxu0 %v4900
        %5052 = vmatpush.msra.mxu0 %v4899
        %5053 = vmatpush.msra.mxu0 %v4898
        %5054 = vmatpush.msra.mxu0 %v4897
        %5055 = vmatpush.msra.mxu0 %v4896
        %5056 = vmatpush.msra.mxu0 %v4895
        %5057 = vmatpush.msra.mxu0 %v4894
        %5058 = vmatpush.msra.mxu0 %v4893
        %5059 = vmatpush.msra.mxu0 %v4892
        %5060 = vmatmul.f32.gmra.mxu0 %v4868
        %v5061 = vpop.f32.mrf.mxu0
        %v5062 = vadd.f32 %v5042, %v5061
        %5063 = vdwg.mxu0
        %5064 = vmatpush.msra.mxu0 %v4923
        %5065 = vmatpush.msra.mxu0 %v4922
        %5066 = vmatpush.msra.mxu0 %v4921
        %5067 = vmatpush.msra.mxu0 %v4920
        %5068 = vmatpush.msra.mxu0 %v4919
        %5069 = vmatpush.msra.mxu0 %v4918
        %5070 = vmatpush.msra.mxu0 %v4917
        %5071 = vmatpush.msra.mxu0 %v4916
        %5072 = vmatpush.msra.mxu0 %v4915
        %5073 = vmatpush.msra.mxu0 %v4914
        %5074 = vmatpush.msra.mxu0 %v4913
        %5075 = vmatpush.msra.mxu0 %v4912
        %5076 = vmatpush.msra.mxu0 %v4911
        %5077 = vmatpush.msra.mxu0 %v4910
        %5078 = vmatpush.msra.mxu0 %v4909
        %5079 = vmatpush.msra.mxu0 %v4908
        %5080 = vmatmul.f32.gmra.mxu0 %v4869
        %v5081 = vpop.f32.mrf.mxu0
        %v5082 = vadd.f32 %v5062, %v5081
        %5083 = vdwg.mxu0
        %5084 = vmatpush.msra.mxu0 %v4939
        %5085 = vmatpush.msra.mxu0 %v4938
        %5086 = vmatpush.msra.mxu0 %v4937
        %5087 = vmatpush.msra.mxu0 %v4936
        %5088 = vmatpush.msra.mxu0 %v4935
        %5089 = vmatpush.msra.mxu0 %v4934
        %5090 = vmatpush.msra.mxu0 %v4933
        %5091 = vmatpush.msra.mxu0 %v4932
        %5092 = vmatpush.msra.mxu0 %v4931
        %5093 = vmatpush.msra.mxu0 %v4930
        %5094 = vmatpush.msra.mxu0 %v4929
        %5095 = vmatpush.msra.mxu0 %v4928
        %5096 = vmatpush.msra.mxu0 %v4927
        %5097 = vmatpush.msra.mxu0 %v4926
        %5098 = vmatpush.msra.mxu0 %v4925
        %5099 = vmatpush.msra.mxu0 %v4924
        %5100 = vmatmul.f32.gmra.mxu0 %v4870
        %v5101 = vpop.f32.mrf.mxu0
        %v5102 = vadd.f32 %v5082, %v5101
        %5103 = vdwg.mxu0
        %5104 = vmatpush.msra.mxu0 %v4955
        %5105 = vmatpush.msra.mxu0 %v4954
        %5106 = vmatpush.msra.mxu0 %v4953
        %5107 = vmatpush.msra.mxu0 %v4952
        %5108 = vmatpush.msra.mxu0 %v4951
        %5109 = vmatpush.msra.mxu0 %v4950
        %5110 = vmatpush.msra.mxu0 %v4949
        %5111 = vmatpush.msra.mxu0 %v4948
        %5112 = vmatpush.msra.mxu0 %v4947
        %5113 = vmatpush.msra.mxu0 %v4946
        %5114 = vmatpush.msra.mxu0 %v4945
        %5115 = vmatpush.msra.mxu0 %v4944
        %5116 = vmatpush.msra.mxu0 %v4943
        %5117 = vmatpush.msra.mxu0 %v4942
        %5118 = vmatpush.msra.mxu0 %v4941
        %5119 = vmatpush.msra.mxu0 %v4940
        %5120 = vmatmul.f32.gmra.mxu0 %v4871
        %v5121 = vpop.f32.mrf.mxu0
        %v5122 = vadd.f32 %v5102, %v5121
        %5123 = vdwg.mxu0
        %5124 = vmatpush.msra.mxu0 %v4971
        %5125 = vmatpush.msra.mxu0 %v4970
        %5126 = vmatpush.msra.mxu0 %v4969
        %5127 = vmatpush.msra.mxu0 %v4968
        %5128 = vmatpush.msra.mxu0 %v4967
        %5129 = vmatpush.msra.mxu0 %v4966
        %5130 = vmatpush.msra.mxu0 %v4965
        %5131 = vmatpush.msra.mxu0 %v4964
        %5132 = vmatpush.msra.mxu0 %v4963
        %5133 = vmatpush.msra.mxu0 %v4962
        %5134 = vmatpush.msra.mxu0 %v4961
        %5135 = vmatpush.msra.mxu0 %v4960
        %5136 = vmatpush.msra.mxu0 %v4959
        %5137 = vmatpush.msra.mxu0 %v4958
        %5138 = vmatpush.msra.mxu0 %v4957
        %5139 = vmatpush.msra.mxu0 %v4956
        %5140 = vmatmul.f32.gmra.mxu0 %v4872
        %v5141 = vpop.f32.mrf.mxu0
        %v5142 = vadd.f32 %v5122, %v5141
        %5143 = vdwg.mxu0
        %5144 = vmatpush.msra.mxu0 %v4987
        %5145 = vmatpush.msra.mxu0 %v4986
        %5146 = vmatpush.msra.mxu0 %v4985
        %5147 = vmatpush.msra.mxu0 %v4984
        %5148 = vmatpush.msra.mxu0 %v4983
        %5149 = vmatpush.msra.mxu0 %v4982
        %5150 = vmatpush.msra.mxu0 %v4981
        %5151 = vmatpush.msra.mxu0 %v4980
        %5152 = vmatpush.msra.mxu0 %v4979
        %5153 = vmatpush.msra.mxu0 %v4978
        %5154 = vmatpush.msra.mxu0 %v4977
        %5155 = vmatpush.msra.mxu0 %v4976
        %5156 = vmatpush.msra.mxu0 %v4975
        %5157 = vmatpush.msra.mxu0 %v4974
        %5158 = vmatpush.msra.mxu0 %v4973
        %5159 = vmatpush.msra.mxu0 %v4972
        %5160 = vmatmul.f32.gmra.mxu0 %v4873
        %v5161 = vpop.f32.mrf.mxu0
        %v5162 = vadd.f32 %v5142, %v5161
        %5163 = vdwg.mxu0
        %5164 = vmatpush.msra.mxu0 %v5003
        %5165 = vmatpush.msra.mxu0 %v5002
        %5166 = vmatpush.msra.mxu0 %v5001
        %5167 = vmatpush.msra.mxu0 %v5000
        %5168 = vmatpush.msra.mxu0 %v4999
        %5169 = vmatpush.msra.mxu0 %v4998
        %5170 = vmatpush.msra.mxu0 %v4997
        %5171 = vmatpush.msra.mxu0 %v4996
        %5172 = vmatpush.msra.mxu0 %v4995
        %5173 = vmatpush.msra.mxu0 %v4994
        %5174 = vmatpush.msra.mxu0 %v4993
        %5175 = vmatpush.msra.mxu0 %v4992
        %5176 = vmatpush.msra.mxu0 %v4991
        %5177 = vmatpush.msra.mxu0 %v4990
        %5178 = vmatpush.msra.mxu0 %v4989
        %5179 = vmatpush.msra.mxu0 %v4988
        %5180 = vmatmul.f32.gmra.mxu0 %v4874
        %v5181 = vpop.f32.mrf.mxu0
        %v5182 = vadd.f32 %v5162, %v5181
        %5183 = vdwg.mxu0
        %5184 = vmatpush.msra.mxu0 0.0
        %5185 = vmatpush.msra.mxu0 0.0
        %5186 = vmatpush.msra.mxu0 0.0
        %5187 = vmatpush.msra.mxu0 0.0
        %5188 = vmatpush.msra.mxu0 %v5015
        %5189 = vmatpush.msra.mxu0 %v5014
        %5190 = vmatpush.msra.mxu0 %v5013
        %5191 = vmatpush.msra.mxu0 %v5012
        %5192 = vmatpush.msra.mxu0 %v5011
        %5193 = vmatpush.msra.mxu0 %v5010
        %5194 = vmatpush.msra.mxu0 %v5009
        %5195 = vmatpush.msra.mxu0 %v5008
        %5196 = vmatpush.msra.mxu0 %v5007
        %5197 = vmatpush.msra.mxu0 %v5006
        %5198 = vmatpush.msra.mxu0 %v5005
        %5199 = vmatpush.msra.mxu0 %v5004
        %5200 = vmatmul.f32.gmra.mxu0 %v5022
        %v5201 = vpop.f32.mrf.mxu0
        %v5202 = vadd.f32 %v5182, %v5201
        %5203 = vdwg.mxu0
        %5204 = vst.msk [vmem:[%s546] sm:$0xff] %vm588, %v5202
        %s5205 = sand.u32 %s277, 1
        %s5206 = scalar_lea.sflag [#allocation4], %s5205
        %s5207 = sand.u32 %s277, 1
        %s5208 = smul.addr %s5207, 8
        %s5209 = scalar_lea.vmem [#allocation19], %s5208
        // Predicated region
        $region105: #{forward.1} parent=63 // pred_check
          %p5210 = pneg %p287
        $region106: #{forward.1} parent=63 // pred_check_branch
          %5212 = sbr.rel (%p5210) target = $region108
        $region107: #{forward.1} parent=63 // pred_region
          %5214 = vsyncadd %s5206, 0
          %s5215 = smul.addr %s33, 8
          %s5216 = scalar_lea.hbm %s11, %s5215
          %s5218 = sshll.u32 %s5209, 4
          %s5219 = int_to_ptr.vmem [resolvable:$true] %s5218
          %s5220 = sshll.u32 %s5216, 4
          %s5221 = int_to_ptr.hbm [resolvable:$true] %s5220
          %5223 = dma.vmem_to_hbm [thread:$0]  %s5219, 128, %s5221, %s5206
        $region108: #{forward.1} parent=63 // pred_fallthru
          _
      $region64: #{forward.1} parent=5 // pred_fallthru
        _
      %p5224 = scmp.le.s32.totalorder 2, %s28
      // Predicated region
      $region109: #{forward.1} parent=5 // pred_check
        %p5225 = pneg %p5224
      $region110: #{forward.1} parent=5 // pred_check_branch
        %5227 = sbr.rel (%p5225) target = $region112
      $region111: #{forward.1} parent=5 // pred_region
        %s5228 = ssub.s32 %s28, 2
        // Predicated region
        $region113: #{forward.1} parent=111 // pred_check
          %p5229 = pneg %p293
        $region114: #{forward.1} parent=111 // pred_check_branch
          %5231 = sbr.rel (%p5229) target = $region116
        $region115: #{forward.1} parent=111 // pred_region
          %s5232 = sand.u32 %s278, 1
          %s5233 = scalar_lea.sflag [#allocation4], %s5232
          %s5234 = sand.u32 %s278, 1
          %s5235 = smul.addr %s5234, 8
          %s5236 = scalar_lea.vmem [#allocation19], %s5235
          %5238 = dma.done %s5233, 128
        $region116: #{forward.1} parent=111 // pred_fallthru
          _
      $region112: #{forward.1} parent=5 // pred_fallthru
        _
    $region6: #{forward.1} parent=1 // loop_footer
      %s32 = sadd.s32 1, %s28
    $region7: #{forward.1} parent=1 // loop_footer_branch
      %27 = sbr.rel target = $region3
    $region8: #{forward.1} parent=1 // loop_exit
      _
    %5239 = vsyncpa [#allocation3], 1
    %s5240 = scalar_lea.sflag [#allocation3], 1
    %5241 = vsyncpa %s5240, 1
    %5242 = vsyncpa [#allocation6], 1
    %5243 = vsyncpa [#allocation9], 1
    %5244 = vsyncpa [#allocation12], 1
    %5245 = vsyncpa [#allocation15], 1
    %5246 = vsyncpa [#allocation18], 1
    %5247 = vsyncpa [#allocation4], 1
    %s5248 = scalar_lea.sflag [#allocation4], 1
    %5249 = vsyncpa %s5248, 1

</llo_original>
